<compile_context>
chip_gen: v5e
topology: v5e:2x2
jax: 0.10.0
libtpu: 0.0.40
codegen_flags: <defaults>
</compile_context>

<pallas_src>
import functools

import jax
import jax.numpy as jnp
from jax.experimental import pallas as pl
from jax.experimental.pallas import tpu as pltpu

K = 28 * 28        # 784
K_PAD = 896        # 7 * 128  (lane-aligned contraction dim)
H1 = 512
H2 = 200
H2_PAD = 256       # 2 * 128
NOUT = 10
OUT_PAD = 128      # lane-dense output store
NEG_BIG = -1e30    # bias for padded logit columns -> exp() == 0


def mnistnet_kernel(x_ref, w1_ref, b1_ref, w2_ref, b2_ref, w3_ref, b3_ref, out_ref):
    # fc1 + relu   (bf16 MXU operands, f32 accumulate / elementwise)
    h1 = jnp.dot(x_ref[...], w1_ref[...], preferred_element_type=jnp.float32) + b1_ref[...]
    h1 = jnp.maximum(h1, 0.0).astype(jnp.bfloat16)
    # fc2 + relu
    h2 = jnp.dot(h1, w2_ref[...], preferred_element_type=jnp.float32) + b2_ref[...]
    h2 = jnp.maximum(h2, 0.0).astype(jnp.bfloat16)
    # fc3 (padded logit columns have a -1e30 bias, so they vanish in the softmax)
    logits = jnp.dot(h2, w3_ref[...], preferred_element_type=jnp.float32) + b3_ref[...]
    # numerically-stable softmax over the (padded) feature axis
    m = jnp.max(logits, axis=-1, keepdims=True)
    e = jnp.exp(logits - m)
    denom = jnp.sum(e, axis=-1, keepdims=True)
    out_ref[...] = e * pl.reciprocal(denom, approx=True)


@functools.partial(jax.jit, static_argnames=("tb",))
def mnistnet_forward(x_nchw, padded_params, tb=256):
    w1, b1, w2, b2, w3, b3 = padded_params
    B = x_nchw.shape[0]
    x = x_nchw.reshape(B, K).astype(jnp.float32)      # torch: x.view(-1, 784)

    # Pad batch to a tile multiple and features 784 -> 896; cast MXU operand to bf16.
    n_tiles = pl.cdiv(B, tb)
    Bp = n_tiles * tb
    x = jnp.pad(x, ((0, Bp - B), (0, K_PAD - K))).astype(jnp.bfloat16)

    resident = lambda shape: pl.BlockSpec(shape, lambda i: (0, 0))  # stays in VMEM across steps

    out = pl.pallas_call(
        mnistnet_kernel,
        out_shape=jax.ShapeDtypeStruct((Bp, OUT_PAD), jnp.float32),
        grid=(n_tiles,),
        in_specs=[
            pl.BlockSpec((tb, K_PAD), lambda i: (i, 0)),   # x tile (pipelined)
            resident((K_PAD, H1)), resident((1, H1)),      # fc1
            resident((H1, H2_PAD)), resident((1, H2_PAD)), # fc2
            resident((H2_PAD, OUT_PAD)), resident((1, OUT_PAD)),  # fc3
        ],
        out_specs=pl.BlockSpec((tb, OUT_PAD), lambda i: (i, 0)),
        compiler_params=pltpu.CompilerParams(
            dimension_semantics=("parallel",),
            vmem_limit_bytes=32 << 20,
        ),
    )(x, w1, b1, w2, b2, w3, b3)

    return out[:B, :NOUT]


def init_params(key):
    """Torch nn.Linear-style init (uniform +/- 1/sqrt(fan_in)); weights as (in, out)."""
    def linear(key, fan_in, fan_out):
        kw, kb = jax.random.split(key)
        bound = 1.0 / jnp.sqrt(jnp.float32(fan_in))
        w = jax.random.uniform(kw, (fan_in, fan_out), jnp.float32, -bound, bound)
        b = jax.random.uniform(kb, (fan_out,), jnp.float32, -bound, bound)
        return w, b

    k1, k2, k3 = jax.random.split(key, 3)
    w1, b1 = linear(k1, K, H1)
    w2, b2 = linear(k2, H1, H2)
    w3, b3 = linear(k3, H2, NOUT)
    return (w1, b1, w2, b2, w3, b3)


def prepare_params(params):
    """One-time padding + bf16 cast of weights for the kernel (biases stay f32)."""
    w1, b1, w2, b2, w3, b3 = params
    w1p = jnp.pad(w1, ((0, K_PAD - K), (0, 0))).astype(jnp.bfloat16)
    b1p = b1.reshape(1, H1).astype(jnp.float32)
    w2p = jnp.pad(w2, ((0, 0), (0, H2_PAD - H2))).astype(jnp.bfloat16)
    b2p = jnp.pad(b2, (0, H2_PAD - H2)).reshape(1, H2_PAD).astype(jnp.float32)
    w3p = jnp.pad(w3, ((0, H2_PAD - H2), (0, OUT_PAD - NOUT))).astype(jnp.bfloat16)
    b3p = jnp.pad(b3, (0, OUT_PAD - NOUT),
                  constant_values=NEG_BIG).reshape(1, OUT_PAD).astype(jnp.float32)
    return (w1p, b1p, w2p, b2p, w3p, b3p)


def mnistnet_reference(x_nchw, params):
    """Pure-JAX f32 reference matching the torch forward."""
    w1, b1, w2, b2, w3, b3 = params
    x = x_nchw.reshape(x_nchw.shape[0], K).astype(jnp.float32)
    h1 = jax.nn.relu(x @ w1 + b1)
    h2 = jax.nn.relu(h1 @ w2 + b2)
    return jax.nn.softmax(h2 @ w3 + b3, axis=-1)


if __name__ == "__main__":
    key = jax.random.PRNGKey(0)
    kp, kx = jax.random.split(key)
    params = init_params(kp)
    padded_params = prepare_params(params)

    # Not a multiple of the 256-row batch tile: exercises the pad + slice path,
    # and gives 2 grid steps so the x-tile pipeline actually runs.
    B = 300
    x = jax.random.normal(kx, (B, 1, 28, 28), dtype=jnp.float32)  # NCHW like MNIST

    out = mnistnet_forward(x, padded_params, tb=256)
    out = jax.block_until_ready(out)

    assert out.shape == (B, NOUT)
    assert bool(jnp.all(jnp.isfinite(out)))
    # softmax rows sum to 1 (loose-ish tol: EUP approx reciprocal)
    assert bool(jnp.allclose(jnp.sum(out, axis=1), 1.0, atol=1e-2))
    # matches f32 reference within bf16 mixed-precision tolerance
    ref = mnistnet_reference(x, params)
    assert bool(jnp.max(jnp.abs(out - ref)) < 0.1)

    print("KERNEL_OK")
</pallas_src>

<mosaic_0001>
module attributes {stable_mosaic.version = 11 : i64} {
  func.func @mnistnet_kernel(%arg0: i32, %arg1: memref<256x896xbf16, #tpu.memory_space<vmem>>, %arg2: memref<896x512xbf16, #tpu.memory_space<vmem>>, %arg3: memref<1x512xf32, #tpu.memory_space<vmem>>, %arg4: memref<512x256xbf16, #tpu.memory_space<vmem>>, %arg5: memref<1x256xf32, #tpu.memory_space<vmem>>, %arg6: memref<256x128xbf16, #tpu.memory_space<vmem>>, %arg7: memref<1x128xf32, #tpu.memory_space<vmem>>, %arg8: memref<256x128xf32, #tpu.memory_space<vmem>>) attributes {dimension_semantics = [#tpu.dimension_semantics<parallel>], iteration_bounds = array<i64: 2>, scalar_prefetch = 0 : i64, scratch_operands = 0 : i64, tpu.core_type = #tpu.core_type<tc>, window_params = [{transform_indices = @transform_0, window_bounds = array<i64: 256, 896>}, {pipeline_mode = #tpu.pipeline_mode<synchronous>, transform_indices = @transform_1, window_bounds = array<i64: 896, 512>}, {pipeline_mode = #tpu.pipeline_mode<synchronous>, transform_indices = @transform_2, window_bounds = array<i64: 1, 512>}, {pipeline_mode = #tpu.pipeline_mode<synchronous>, transform_indices = @transform_3, window_bounds = array<i64: 512, 256>}, {pipeline_mode = #tpu.pipeline_mode<synchronous>, transform_indices = @transform_4, window_bounds = array<i64: 1, 256>}, {pipeline_mode = #tpu.pipeline_mode<synchronous>, transform_indices = @transform_5, window_bounds = array<i64: 256, 128>}, {pipeline_mode = #tpu.pipeline_mode<synchronous>, transform_indices = @transform_6, window_bounds = array<i64: 1, 128>}, {transform_indices = @transform_7, window_bounds = array<i64: 256, 128>}]} {
    %c0 = arith.constant 0 : index
    %c0_0 = arith.constant 0 : index
    %0 = vector.load %arg1[%c0, %c0_0] : memref<256x896xbf16, #tpu.memory_space<vmem>>, vector<256x896xbf16>
    %c0_1 = arith.constant 0 : index
    %c0_2 = arith.constant 0 : index
    %1 = vector.load %arg2[%c0_1, %c0_2] : memref<896x512xbf16, #tpu.memory_space<vmem>>, vector<896x512xbf16>
    %cst = arith.constant dense<0.000000e+00> : vector<256x512xf32>
    %2 = tpu.matmul %0, %1, %cst {dimension_numbers = #tpu.dot_dimension_numbers<[1], [0], [0], [1], [0, 0, 1, 1], [], []>} : vector<256x896xbf16>, vector<896x512xbf16>, vector<256x512xf32> -> vector<256x512xf32>
    %c0_3 = arith.constant 0 : index
    %c0_4 = arith.constant 0 : index
    %3 = vector.load %arg3[%c0_3, %c0_4] : memref<1x512xf32, #tpu.memory_space<vmem>>, vector<1x512xf32>
    %4 = vector.broadcast %3 : vector<1x512xf32> to vector<256x512xf32>
    %5 = arith.addf %2, %4 : vector<256x512xf32>
    %cst_5 = arith.constant 0.000000e+00 : f32
    %6 = vector.broadcast %cst_5 : f32 to vector<256x512xf32>
    %7 = arith.maximumf %5, %6 : vector<256x512xf32>
    %8 = arith.truncf %7 : vector<256x512xf32> to vector<256x512xbf16>
    %c0_6 = arith.constant 0 : index
    %c0_7 = arith.constant 0 : index
    %9 = vector.load %arg4[%c0_6, %c0_7] : memref<512x256xbf16, #tpu.memory_space<vmem>>, vector<512x256xbf16>
    %cst_8 = arith.constant dense<0.000000e+00> : vector<256x256xf32>
    %10 = tpu.matmul %8, %9, %cst_8 {dimension_numbers = #tpu.dot_dimension_numbers<[1], [0], [0], [1], [0, 0, 1, 1], [], []>} : vector<256x512xbf16>, vector<512x256xbf16>, vector<256x256xf32> -> vector<256x256xf32>
    %c0_9 = arith.constant 0 : index
    %c0_10 = arith.constant 0 : index
    %11 = vector.load %arg5[%c0_9, %c0_10] : memref<1x256xf32, #tpu.memory_space<vmem>>, vector<1x256xf32>
    %12 = vector.broadcast %11 : vector<1x256xf32> to vector<256x256xf32>
    %13 = arith.addf %10, %12 : vector<256x256xf32>
    %cst_11 = arith.constant 0.000000e+00 : f32
    %14 = vector.broadcast %cst_11 : f32 to vector<256x256xf32>
    %15 = arith.maximumf %13, %14 : vector<256x256xf32>
    %16 = arith.truncf %15 : vector<256x256xf32> to vector<256x256xbf16>
    %c0_12 = arith.constant 0 : index
    %c0_13 = arith.constant 0 : index
    %17 = vector.load %arg6[%c0_12, %c0_13] : memref<256x128xbf16, #tpu.memory_space<vmem>>, vector<256x128xbf16>
    %cst_14 = arith.constant dense<0.000000e+00> : vector<256x128xf32>
    %18 = tpu.matmul %16, %17, %cst_14 {dimension_numbers = #tpu.dot_dimension_numbers<[1], [0], [0], [1], [0, 0, 1, 1], [], []>} : vector<256x256xbf16>, vector<256x128xbf16>, vector<256x128xf32> -> vector<256x128xf32>
    %c0_15 = arith.constant 0 : index
    %c0_16 = arith.constant 0 : index
    %19 = vector.load %arg7[%c0_15, %c0_16] : memref<1x128xf32, #tpu.memory_space<vmem>>, vector<1x128xf32>
    %20 = vector.broadcast %19 : vector<1x128xf32> to vector<256x128xf32>
    %21 = arith.addf %18, %20 : vector<256x128xf32>
    %cst_17 = arith.constant dense<0xFF800000> : vector<256xf32>
    %22 = vector.multi_reduction <maximumf>, %21, %cst_17 [1] : vector<256x128xf32> to vector<256xf32>
    %23 = vector.shape_cast %22 : vector<256xf32> to vector<256x1xf32>
    %24 = vector.broadcast %23 : vector<256x1xf32> to vector<256x128xf32>
    %25 = arith.subf %21, %24 : vector<256x128xf32>
    %26 = math.exp %25 : vector<256x128xf32>
    %cst_18 = arith.constant dense<0.000000e+00> : vector<256xf32>
    %27 = vector.multi_reduction <add>, %26, %cst_18 [1] : vector<256x128xf32> to vector<256xf32>
    %28 = vector.shape_cast %27 : vector<256xf32> to vector<256x1xf32>
    %29 = tpu.reciprocal %28 {approx = true} : vector<256x1xf32> -> vector<256x1xf32>
    %30 = vector.broadcast %29 : vector<256x1xf32> to vector<256x128xf32>
    %31 = arith.mulf %26, %30 : vector<256x128xf32>
    %c0_19 = arith.constant 0 : index
    %c0_20 = arith.constant 0 : index
    %32 = vector.load %arg8[%c0_19, %c0_20] : memref<256x128xf32, #tpu.memory_space<vmem>>, vector<256x128xf32>
    tpu.vector_store %arg8[%c0_19, %c0_20], %31 {strides = array<i32>} : memref<256x128xf32, #tpu.memory_space<vmem>>, vector<256x128xf32>,
    return
  }
  func.func @transform_0(%arg0: i32) -> (i32, i32) {
    %c0_i32 = arith.constant 0 : i32
    %c0_i32_0 = arith.constant 0 : i32
    return %arg0, %c0_i32 : i32, i32
  }
  func.func @transform_1(%arg0: i32) -> (i32, i32) {
    %c0_i32 = arith.constant 0 : i32
    %c0_i32_0 = arith.constant 0 : i32
    %c0_i32_1 = arith.constant 0 : i32
    return %c0_i32, %c0_i32_0 : i32, i32
  }
  func.func @transform_2(%arg0: i32) -> (i32, i32) {
    %c0_i32 = arith.constant 0 : i32
    %c0_i32_0 = arith.constant 0 : i32
    %c0_i32_1 = arith.constant 0 : i32
    return %c0_i32, %c0_i32_0 : i32, i32
  }
  func.func @transform_3(%arg0: i32) -> (i32, i32) {
    %c0_i32 = arith.constant 0 : i32
    %c0_i32_0 = arith.constant 0 : i32
    %c0_i32_1 = arith.constant 0 : i32
    return %c0_i32, %c0_i32_0 : i32, i32
  }
  func.func @transform_4(%arg0: i32) -> (i32, i32) {
    %c0_i32 = arith.constant 0 : i32
    %c0_i32_0 = arith.constant 0 : i32
    %c0_i32_1 = arith.constant 0 : i32
    return %c0_i32, %c0_i32_0 : i32, i32
  }
  func.func @transform_5(%arg0: i32) -> (i32, i32) {
    %c0_i32 = arith.constant 0 : i32
    %c0_i32_0 = arith.constant 0 : i32
    %c0_i32_1 = arith.constant 0 : i32
    return %c0_i32, %c0_i32_0 : i32, i32
  }
  func.func @transform_6(%arg0: i32) -> (i32, i32) {
    %c0_i32 = arith.constant 0 : i32
    %c0_i32_0 = arith.constant 0 : i32
    %c0_i32_1 = arith.constant 0 : i32
    return %c0_i32, %c0_i32_0 : i32, i32
  }
  func.func @transform_7(%arg0: i32) -> (i32, i32) {
    %c0_i32 = arith.constant 0 : i32
    %c0_i32_0 = arith.constant 0 : i32
    return %arg0, %c0_i32 : i32, i32
  }
}

</mosaic_0001>

<llo_original>
// kernel: mnistnet_forward.1
$region0: #{mnistnet_forward.1}
  #allocation0 [shape = 'u32[]', space=smem, size = 0x4, offset = 0x4, fixed_abs, tag = 'smem constant byte address 0x4 - core index']
  #allocation1 [shape = 'u32[72,128]{1,0:T(1,128)}', space=vmem, size = 0x9000, scoped, tag = 'internal scratch']
  %s0 = inlined_call_operand.vmem [shape: bf16[512,896], index: 0, kind: input, shape index: {}]
  %s1 = inlined_call_operand.vmem [shape: bf16[896,512], index: 1, kind: input, shape index: {}]
  %s2 = inlined_call_operand.vmem [shape: f32[1,512], index: 2, kind: input, shape index: {}]
  %s3 = inlined_call_operand.vmem [shape: bf16[512,256], index: 3, kind: input, shape index: {}]
  %s4 = inlined_call_operand.vmem [shape: f32[1,256], index: 4, kind: input, shape index: {}]
  %s5 = inlined_call_operand.vmem [shape: bf16[256,128], index: 5, kind: input, shape index: {}]
  %s6 = inlined_call_operand.vmem [shape: f32[1,128], index: 6, kind: input, shape index: {}]
  %s7 = inlined_call_operand.vmem [shape: f32[512,128], index: 7, kind: output, shape index: {}]
  %s8 = sld [smem:[#allocation0]]
  $region61: #{mnistnet_forward.1} parent=0
    _
  %s10 = ssub.s32 1, %s8
  %s11 = scalar_select 0, %s10, %s8
  loop: start=0, step=1, limit=4
  $region2: #{mnistnet_forward.1} parent=0 // loop_pre_header
    _
  $region3: #{mnistnet_forward.1} parent=0 // loop_header
    %s13 = sphi 0, %s17
    %p14 = scmp.ge.s32.totalorder %s13, 4
    %s23 = sphi 0, %s25
    %s26 = sphi 0, %s23
    %s27 = sphi 0, %s26
    %s43 = sphi 0, %s27
    %s47 = sphi 0, %s47
    %s49 = sphi 0, %s47
    %s50 = sphi 0, %s49
    %s64 = sphi 0, %s50
    %s68 = sphi 0, %s68
    %s70 = sphi 0, %s68
    %s71 = sphi 0, %s70
    %s85 = sphi 0, %s71
    %s89 = sphi 0, %s89
    %s91 = sphi 0, %s89
    %s92 = sphi 0, %s91
    %s106 = sphi 0, %s92
    %s110 = sphi 0, %s110
    %s112 = sphi 0, %s110
    %s113 = sphi 0, %s112
    %s127 = sphi 0, %s113
    %s131 = sphi 0, %s131
    %s133 = sphi 0, %s131
    %s134 = sphi 0, %s133
    %s148 = sphi 0, %s134
    %s152 = sphi 0, %s152
    %s154 = sphi 0, %s152
    %s155 = sphi 0, %s154
    %s169 = sphi 0, %s155
    %s175 = sphi 0, %s177
    %s178 = sphi 0, %s175
    %s179 = sphi 0, %s178
    %s195 = sphi 0, %s179
  $region4: #{mnistnet_forward.1} parent=0 // loop_header_branch
    %16 = sbr.rel (%p14) target = $region8
  $region5: #{mnistnet_forward.1} parent=0 // loop_body
    %s18 = ssub.s32 %s13, 1
    %s19 = ssub.s32 %s13, 2
    %s20 = sadd.s32 %s13, 1
    %s21 = ssub.s32 %s13, %s20
    %p22 = scmp.eq.s32.totalorder %s21, 0
    %s24 = sadd.s32 %s23, 1
    %s25 = scalar_select %p22, %s23, %s24
    %p28 = pneg %p22
    %p29 = scmp.eq.s32.totalorder %s13, 1
    %p30 = por %p28, %p29
    %p31 = scmp.ne.s32.totalorder %s23, %s26
    %p32 = scmp.eq.s32.totalorder %s13, 0
    %p33 = por %p31, %p32
    %p34 = scmp.ne.s32.totalorder %s23, %s26
    %p35 = scmp.eq.s32.totalorder %s18, 1
    %p36 = por %p34, %p35
    %p37 = scmp.ne.s32.totalorder %s26, %s27
    %p38 = scmp.eq.s32.totalorder %s18, 0
    %p39 = por %p37, %p38
    %p40 = scmp.ne.s32.totalorder %s26, %s27
    %p41 = scmp.eq.s32.totalorder %s19, 1
    %p42 = por %p40, %p41
    %p44 = scmp.ne.s32.totalorder %s27, %s43
    %p45 = scmp.eq.s32.totalorder %s19, 0
    %p46 = por %p44, %p45
    %s48 = sadd.s32 %s47, 1
    %p51 = scmp.eq.s32.totalorder %s13, 1
    %p52 = scmp.ne.s32.totalorder %s47, %s49
    %p53 = scmp.eq.s32.totalorder %s13, 0
    %p54 = por %p52, %p53
    %p55 = scmp.ne.s32.totalorder %s47, %s49
    %p56 = scmp.eq.s32.totalorder %s18, 1
    %p57 = por %p55, %p56
    %p58 = scmp.ne.s32.totalorder %s49, %s50
    %p59 = scmp.eq.s32.totalorder %s18, 0
    %p60 = por %p58, %p59
    %p61 = scmp.ne.s32.totalorder %s49, %s50
    %p62 = scmp.eq.s32.totalorder %s19, 1
    %p63 = por %p61, %p62
    %p65 = scmp.ne.s32.totalorder %s50, %s64
    %p66 = scmp.eq.s32.totalorder %s19, 0
    %p67 = por %p65, %p66
    %s69 = sadd.s32 %s68, 1
    %p72 = scmp.eq.s32.totalorder %s13, 1
    %p73 = scmp.ne.s32.totalorder %s68, %s70
    %p74 = scmp.eq.s32.totalorder %s13, 0
    %p75 = por %p73, %p74
    %p76 = scmp.ne.s32.totalorder %s68, %s70
    %p77 = scmp.eq.s32.totalorder %s18, 1
    %p78 = por %p76, %p77
    %p79 = scmp.ne.s32.totalorder %s70, %s71
    %p80 = scmp.eq.s32.totalorder %s18, 0
    %p81 = por %p79, %p80
    %p82 = scmp.ne.s32.totalorder %s70, %s71
    %p83 = scmp.eq.s32.totalorder %s19, 1
    %p84 = por %p82, %p83
    %p86 = scmp.ne.s32.totalorder %s71, %s85
    %p87 = scmp.eq.s32.totalorder %s19, 0
    %p88 = por %p86, %p87
    %s90 = sadd.s32 %s89, 1
    %p93 = scmp.eq.s32.totalorder %s13, 1
    %p94 = scmp.ne.s32.totalorder %s89, %s91
    %p95 = scmp.eq.s32.totalorder %s13, 0
    %p96 = por %p94, %p95
    %p97 = scmp.ne.s32.totalorder %s89, %s91
    %p98 = scmp.eq.s32.totalorder %s18, 1
    %p99 = por %p97, %p98
    %p100 = scmp.ne.s32.totalorder %s91, %s92
    %p101 = scmp.eq.s32.totalorder %s18, 0
    %p102 = por %p100, %p101
    %p103 = scmp.ne.s32.totalorder %s91, %s92
    %p104 = scmp.eq.s32.totalorder %s19, 1
    %p105 = por %p103, %p104
    %p107 = scmp.ne.s32.totalorder %s92, %s106
    %p108 = scmp.eq.s32.totalorder %s19, 0
    %p109 = por %p107, %p108
    %s111 = sadd.s32 %s110, 1
    %p114 = scmp.eq.s32.totalorder %s13, 1
    %p115 = scmp.ne.s32.totalorder %s110, %s112
    %p116 = scmp.eq.s32.totalorder %s13, 0
    %p117 = por %p115, %p116
    %p118 = scmp.ne.s32.totalorder %s110, %s112
    %p119 = scmp.eq.s32.totalorder %s18, 1
    %p120 = por %p118, %p119
    %p121 = scmp.ne.s32.totalorder %s112, %s113
    %p122 = scmp.eq.s32.totalorder %s18, 0
    %p123 = por %p121, %p122
    %p124 = scmp.ne.s32.totalorder %s112, %s113
    %p125 = scmp.eq.s32.totalorder %s19, 1
    %p126 = por %p124, %p125
    %p128 = scmp.ne.s32.totalorder %s113, %s127
    %p129 = scmp.eq.s32.totalorder %s19, 0
    %p130 = por %p128, %p129
    %s132 = sadd.s32 %s131, 1
    %p135 = scmp.eq.s32.totalorder %s13, 1
    %p136 = scmp.ne.s32.totalorder %s131, %s133
    %p137 = scmp.eq.s32.totalorder %s13, 0
    %p138 = por %p136, %p137
    %p139 = scmp.ne.s32.totalorder %s131, %s133
    %p140 = scmp.eq.s32.totalorder %s18, 1
    %p141 = por %p139, %p140
    %p142 = scmp.ne.s32.totalorder %s133, %s134
    %p143 = scmp.eq.s32.totalorder %s18, 0
    %p144 = por %p142, %p143
    %p145 = scmp.ne.s32.totalorder %s133, %s134
    %p146 = scmp.eq.s32.totalorder %s19, 1
    %p147 = por %p145, %p146
    %p149 = scmp.ne.s32.totalorder %s134, %s148
    %p150 = scmp.eq.s32.totalorder %s19, 0
    %p151 = por %p149, %p150
    %s153 = sadd.s32 %s152, 1
    %p156 = scmp.eq.s32.totalorder %s13, 1
    %p157 = scmp.ne.s32.totalorder %s152, %s154
    %p158 = scmp.eq.s32.totalorder %s13, 0
    %p159 = por %p157, %p158
    %p160 = scmp.ne.s32.totalorder %s152, %s154
    %p161 = scmp.eq.s32.totalorder %s18, 1
    %p162 = por %p160, %p161
    %p163 = scmp.ne.s32.totalorder %s154, %s155
    %p164 = scmp.eq.s32.totalorder %s18, 0
    %p165 = por %p163, %p164
    %p166 = scmp.ne.s32.totalorder %s154, %s155
    %p167 = scmp.eq.s32.totalorder %s19, 1
    %p168 = por %p166, %p167
    %p170 = scmp.ne.s32.totalorder %s155, %s169
    %p171 = scmp.eq.s32.totalorder %s19, 0
    %p172 = por %p170, %p171
    %s173 = ssub.s32 %s13, %s20
    %p174 = scmp.eq.s32.totalorder %s173, 0
    %s176 = sadd.s32 %s175, 1
    %s177 = scalar_select %p174, %s175, %s176
    %p180 = pneg %p174
    %p181 = scmp.eq.s32.totalorder %s13, 1
    %p182 = por %p180, %p181
    %p183 = scmp.ne.s32.totalorder %s175, %s178
    %p184 = scmp.eq.s32.totalorder %s13, 0
    %p185 = por %p183, %p184
    %p186 = scmp.ne.s32.totalorder %s175, %s178
    %p187 = scmp.eq.s32.totalorder %s18, 1
    %p188 = por %p186, %p187
    %p189 = scmp.ne.s32.totalorder %s178, %s179
    %p190 = scmp.eq.s32.totalorder %s18, 0
    %p191 = por %p189, %p190
    %p192 = scmp.ne.s32.totalorder %s178, %s179
    %p193 = scmp.eq.s32.totalorder %s19, 1
    %p194 = por %p192, %p193
    %p196 = scmp.ne.s32.totalorder %s179, %s195
    %p197 = scmp.eq.s32.totalorder %s19, 0
    %p198 = por %p196, %p197
    %p199 = scmp.le.s32.totalorder 1, %s13
    %p200 = scmp.lt.s32.totalorder %s13, 3
    %p201 = pnand %p199, %p200
    %p202 = pneg %p201
    // Predicated region
    $region9: #{mnistnet_forward.1} parent=5 // pred_check
      _
    $region10: #{mnistnet_forward.1} parent=5 // pred_check_branch
      %204 = sbr.rel (%p201) target = $region12
    $region11: #{mnistnet_forward.1} parent=5 // pred_region
      %s205 = ssub.s32 %s13, 1
      // Predicated region
      $region13: #{mnistnet_forward.1} parent=11 // pred_check
        %p206 = pneg %p60
      $region14: #{mnistnet_forward.1} parent=11 // pred_check_branch
        %208 = sbr.rel (%p206) target = $region16
      $region15: #{mnistnet_forward.1} parent=11 // pred_region
        _
      $region16: #{mnistnet_forward.1} parent=11 // pred_fallthru
        _
      // Predicated region
      $region17: #{mnistnet_forward.1} parent=11 // pred_check
        %p209 = pneg %p81
      $region18: #{mnistnet_forward.1} parent=11 // pred_check_branch
        %211 = sbr.rel (%p209) target = $region20
      $region19: #{mnistnet_forward.1} parent=11 // pred_region
        _
      $region20: #{mnistnet_forward.1} parent=11 // pred_fallthru
        _
      // Predicated region
      $region21: #{mnistnet_forward.1} parent=11 // pred_check
        %p212 = pneg %p102
      $region22: #{mnistnet_forward.1} parent=11 // pred_check_branch
        %214 = sbr.rel (%p212) target = $region24
      $region23: #{mnistnet_forward.1} parent=11 // pred_region
        _
      $region24: #{mnistnet_forward.1} parent=11 // pred_fallthru
        _
      // Predicated region
      $region25: #{mnistnet_forward.1} parent=11 // pred_check
        %p215 = pneg %p123
      $region26: #{mnistnet_forward.1} parent=11 // pred_check_branch
        %217 = sbr.rel (%p215) target = $region28
      $region27: #{mnistnet_forward.1} parent=11 // pred_region
        _
      $region28: #{mnistnet_forward.1} parent=11 // pred_fallthru
        _
      // Predicated region
      $region29: #{mnistnet_forward.1} parent=11 // pred_check
        %p218 = pneg %p144
      $region30: #{mnistnet_forward.1} parent=11 // pred_check_branch
        %220 = sbr.rel (%p218) target = $region32
      $region31: #{mnistnet_forward.1} parent=11 // pred_region
        _
      $region32: #{mnistnet_forward.1} parent=11 // pred_fallthru
        _
      // Predicated region
      $region33: #{mnistnet_forward.1} parent=11 // pred_check
        %p221 = pneg %p165
      $region34: #{mnistnet_forward.1} parent=11 // pred_check_branch
        %223 = sbr.rel (%p221) target = $region36
      $region35: #{mnistnet_forward.1} parent=11 // pred_region
        _
      $region36: #{mnistnet_forward.1} parent=11 // pred_fallthru
        _
    $region12: #{mnistnet_forward.1} parent=5 // pred_fallthru
      _
    %p224 = scmp.lt.s32.totalorder %s13, 2
    // Predicated region
    $region37: #{mnistnet_forward.1} parent=5 // pred_check
      %p225 = pneg %p224
    $region38: #{mnistnet_forward.1} parent=5 // pred_check_branch
      %227 = sbr.rel (%p225) target = $region40
    $region39: #{mnistnet_forward.1} parent=5 // pred_region
      // Predicated region
      $region41: #{mnistnet_forward.1} parent=39 // pred_check
        %p228 = pneg %p33
      $region42: #{mnistnet_forward.1} parent=39 // pred_check_branch
        %230 = sbr.rel (%p228) target = $region44
      $region43: #{mnistnet_forward.1} parent=39 // pred_region
        %s231 = smul.u32 32, %s13
        %p232 = scmp.lt.s32.totalorder %s231, 63
        %s233 = scalar_select %p232, %s231, 63
        %s234 = smul.addr %s233, 7
        %s235 = smul.addr %s234, 4
        %s236 = scalar_lea.vmem %s0, %s235
        %s237 = smul.u32 32, %s13
      $region44: #{mnistnet_forward.1} parent=39 // pred_fallthru
        _
    $region40: #{mnistnet_forward.1} parent=5 // pred_fallthru
      _
    %p238 = scmp.le.s32.totalorder 1, %s13
    %p239 = scmp.lt.s32.totalorder %s13, 3
    %p240 = pnand %p238, %p239
    %p241 = pneg %p240
    // Predicated region
    $region45: #{mnistnet_forward.1} parent=5 // pred_check
      _
    $region46: #{mnistnet_forward.1} parent=5 // pred_check_branch
      %243 = sbr.rel (%p240) target = $region48
    $region47: #{mnistnet_forward.1} parent=5 // pred_region
      %s244 = ssub.s32 %s13, 1
      %s245 = smul.u32 32, %s18
      %p246 = scmp.lt.s32.totalorder %s245, 63
      %s247 = scalar_select %p246, %s245, 63
      %s248 = smul.addr %s247, 7
      %s249 = smul.addr %s248, 4
      %s250 = scalar_lea.vmem %s0, %s249
      %p251 = pneg %p39
      %p252 = pneg %p36
      %p253 = pneg %p60
      %p254 = pneg %p57
      %p255 = pneg %p81
      %p256 = pneg %p78
      %p257 = pneg %p102
      %p258 = pneg %p99
      %p259 = pneg %p123
      %p260 = pneg %p120
      %p261 = pneg %p144
      %p262 = pneg %p141
      %p263 = pneg %p165
      %p264 = pneg %p162
      %p265 = pneg %p191
      %p266 = pneg %p188
      %s267 = smul.u32 32, %s18
      %p268 = scmp.lt.s32.totalorder %s267, 63
      %s269 = scalar_select %p268, %s267, 63
      %s270 = smul.addr %s269, 8
      %s271 = scalar_lea.vmem %s7, %s270
      %s272 = smul.u32 32, %s18
      %p273 = scmp.lt.s32.totalorder %s272, 63
      %s274 = scalar_select %p273, %s272, 63
      %s275 = smul.addr %s274, 7
      %s276 = smul.addr %s275, 4
      %s277 = scalar_lea.vmem %s0, %s276
      %s278 = smul.u32 32, %s18
      %s279 = smul.u32 32, %s18
      %p280 = scmp.lt.s32.totalorder %s279, 63
      %s281 = scalar_select %p280, %s279, 63
      %s282 = smul.addr %s281, 8
      %s283 = scalar_lea.vmem %s7, %s282
      %s284 = smul.u32 32, %s18
      %v285 = vld [vmem:[%s277] sm:$0xff]
      %v286 = vld [vmem:[%s277 + $0x8] sm:$0xff]
      %v287 = vld [vmem:[%s277 + $0x10] sm:$0xff]
      %v288 = vld [vmem:[%s277 + $0x18] sm:$0xf]
      %v289 = vld [vmem:[%s277 + $0x1c] sm:$0xff]
      %v290 = vld [vmem:[%s277 + $0x24] sm:$0xff]
      %v291 = vld [vmem:[%s277 + $0x2c] sm:$0xff]
      %v292 = vld [vmem:[%s277 + $0x34] sm:$0xf]
      %v293 = vld [vmem:[%s277 + $0x38] sm:$0xff]
      %v294 = vld [vmem:[%s277 + $0x40] sm:$0xff]
      %v295 = vld [vmem:[%s277 + $0x48] sm:$0xff]
      %v296 = vld [vmem:[%s277 + $0x50] sm:$0xf]
      %v297 = vld [vmem:[%s277 + $0x54] sm:$0xff]
      %v298 = vld [vmem:[%s277 + $0x5c] sm:$0xff]
      %v299 = vld [vmem:[%s277 + $0x64] sm:$0xff]
      %v300 = vld [vmem:[%s277 + $0x6c] sm:$0xf]
      %v301 = vld [vmem:[%s277 + $0x70] sm:$0xff]
      %v302 = vld [vmem:[%s277 + $0x78] sm:$0xff]
      %v303 = vld [vmem:[%s277 + $0x80] sm:$0xff]
      %v304 = vld [vmem:[%s277 + $0x88] sm:$0xf]
      %v305 = vld [vmem:[%s277 + $0x8c] sm:$0xff]
      %v306 = vld [vmem:[%s277 + $0x94] sm:$0xff]
      %v307 = vld [vmem:[%s277 + $0x9c] sm:$0xff]
      %v308 = vld [vmem:[%s277 + $0xa4] sm:$0xf]
      %v309 = vld [vmem:[%s277 + $0xa8] sm:$0xff]
      %v310 = vld [vmem:[%s277 + $0xb0] sm:$0xff]
      %v311 = vld [vmem:[%s277 + $0xb8] sm:$0xff]
      %v312 = vld [vmem:[%s277 + $0xc0] sm:$0xf]
      %v313 = vld [vmem:[%s277 + $0xc4] sm:$0xff]
      %v314 = vld [vmem:[%s277 + $0xcc] sm:$0xff]
      %v315 = vld [vmem:[%s277 + $0xd4] sm:$0xff]
      %v316 = vld [vmem:[%s277 + $0xdc] sm:$0xf]
      %v317 = vld [vmem:[%s277 + $0xe0] sm:$0xff]
      %v318 = vld [vmem:[%s277 + $0xe8] sm:$0xff]
      %v319 = vld [vmem:[%s277 + $0xf0] sm:$0xff]
      %v320 = vld [vmem:[%s277 + $0xf8] sm:$0xf]
      %v321 = vld [vmem:[%s277 + $0xfc] sm:$0xff]
      %v322 = vld [vmem:[%s277 + $0x104] sm:$0xff]
      %v323 = vld [vmem:[%s277 + $0x10c] sm:$0xff]
      %v324 = vld [vmem:[%s277 + $0x114] sm:$0xf]
      %v325 = vld [vmem:[%s277 + $0x118] sm:$0xff]
      %v326 = vld [vmem:[%s277 + $0x120] sm:$0xff]
      %v327 = vld [vmem:[%s277 + $0x128] sm:$0xff]
      %v328 = vld [vmem:[%s277 + $0x130] sm:$0xf]
      %v329 = vld [vmem:[%s277 + $0x134] sm:$0xff]
      %v330 = vld [vmem:[%s277 + $0x13c] sm:$0xff]
      %v331 = vld [vmem:[%s277 + $0x144] sm:$0xff]
      %v332 = vld [vmem:[%s277 + $0x14c] sm:$0xf]
      %v333 = vld [vmem:[%s277 + $0x150] sm:$0xff]
      %v334 = vld [vmem:[%s277 + $0x158] sm:$0xff]
      %v335 = vld [vmem:[%s277 + $0x160] sm:$0xff]
      %v336 = vld [vmem:[%s277 + $0x168] sm:$0xf]
      %v337 = vld [vmem:[%s277 + $0x16c] sm:$0xff]
      %v338 = vld [vmem:[%s277 + $0x174] sm:$0xff]
      %v339 = vld [vmem:[%s277 + $0x17c] sm:$0xff]
      %v340 = vld [vmem:[%s277 + $0x184] sm:$0xf]
      %v341 = vld [vmem:[%s277 + $0x188] sm:$0xff]
      %v342 = vld [vmem:[%s277 + $0x190] sm:$0xff]
      %v343 = vld [vmem:[%s277 + $0x198] sm:$0xff]
      %v344 = vld [vmem:[%s277 + $0x1a0] sm:$0xf]
      %v345 = vld [vmem:[%s277 + $0x1a4] sm:$0xff]
      %v346 = vld [vmem:[%s277 + $0x1ac] sm:$0xff]
      %v347 = vld [vmem:[%s277 + $0x1b4] sm:$0xff]
      %v348 = vld [vmem:[%s277 + $0x1bc] sm:$0xf]
      %v349 = vld [vmem:[%s277 + $0x1c0] sm:$0xff]
      %v350 = vld [vmem:[%s277 + $0x1c8] sm:$0xff]
      %v351 = vld [vmem:[%s277 + $0x1d0] sm:$0xff]
      %v352 = vld [vmem:[%s277 + $0x1d8] sm:$0xf]
      %v353 = vld [vmem:[%s277 + $0x1dc] sm:$0xff]
      %v354 = vld [vmem:[%s277 + $0x1e4] sm:$0xff]
      %v355 = vld [vmem:[%s277 + $0x1ec] sm:$0xff]
      %v356 = vld [vmem:[%s277 + $0x1f4] sm:$0xf]
      %v357 = vld [vmem:[%s277 + $0x1f8] sm:$0xff]
      %v358 = vld [vmem:[%s277 + $0x200] sm:$0xff]
      %v359 = vld [vmem:[%s277 + $0x208] sm:$0xff]
      %v360 = vld [vmem:[%s277 + $0x210] sm:$0xf]
      %v361 = vld [vmem:[%s277 + $0x214] sm:$0xff]
      %v362 = vld [vmem:[%s277 + $0x21c] sm:$0xff]
      %v363 = vld [vmem:[%s277 + $0x224] sm:$0xff]
      %v364 = vld [vmem:[%s277 + $0x22c] sm:$0xf]
      %v365 = vld [vmem:[%s277 + $0x230] sm:$0xff]
      %v366 = vld [vmem:[%s277 + $0x238] sm:$0xff]
      %v367 = vld [vmem:[%s277 + $0x240] sm:$0xff]
      %v368 = vld [vmem:[%s277 + $0x248] sm:$0xf]
      %v369 = vld [vmem:[%s277 + $0x24c] sm:$0xff]
      %v370 = vld [vmem:[%s277 + $0x254] sm:$0xff]
      %v371 = vld [vmem:[%s277 + $0x25c] sm:$0xff]
      %v372 = vld [vmem:[%s277 + $0x264] sm:$0xf]
      %v373 = vld [vmem:[%s277 + $0x268] sm:$0xff]
      %v374 = vld [vmem:[%s277 + $0x270] sm:$0xff]
      %v375 = vld [vmem:[%s277 + $0x278] sm:$0xff]
      %v376 = vld [vmem:[%s277 + $0x280] sm:$0xf]
      %v377 = vld [vmem:[%s277 + $0x284] sm:$0xff]
      %v378 = vld [vmem:[%s277 + $0x28c] sm:$0xff]
      %v379 = vld [vmem:[%s277 + $0x294] sm:$0xff]
      %v380 = vld [vmem:[%s277 + $0x29c] sm:$0xf]
      %v381 = vld [vmem:[%s277 + $0x2a0] sm:$0xff]
      %v382 = vld [vmem:[%s277 + $0x2a8] sm:$0xff]
      %v383 = vld [vmem:[%s277 + $0x2b0] sm:$0xff]
      %v384 = vld [vmem:[%s277 + $0x2b8] sm:$0xf]
      %v385 = vld [vmem:[%s277 + $0x2bc] sm:$0xff]
      %v386 = vld [vmem:[%s277 + $0x2c4] sm:$0xff]
      %v387 = vld [vmem:[%s277 + $0x2cc] sm:$0xff]
      %v388 = vld [vmem:[%s277 + $0x2d4] sm:$0xf]
      %v389 = vld [vmem:[%s277 + $0x2d8] sm:$0xff]
      %v390 = vld [vmem:[%s277 + $0x2e0] sm:$0xff]
      %v391 = vld [vmem:[%s277 + $0x2e8] sm:$0xff]
      %v392 = vld [vmem:[%s277 + $0x2f0] sm:$0xf]
      %v393 = vld [vmem:[%s277 + $0x2f4] sm:$0xff]
      %v394 = vld [vmem:[%s277 + $0x2fc] sm:$0xff]
      %v395 = vld [vmem:[%s277 + $0x304] sm:$0xff]
      %v396 = vld [vmem:[%s277 + $0x30c] sm:$0xf]
      %v397 = vld [vmem:[%s277 + $0x310] sm:$0xff]
      %v398 = vld [vmem:[%s277 + $0x318] sm:$0xff]
      %v399 = vld [vmem:[%s277 + $0x320] sm:$0xff]
      %v400 = vld [vmem:[%s277 + $0x328] sm:$0xf]
      %v401 = vld [vmem:[%s277 + $0x32c] sm:$0xff]
      %v402 = vld [vmem:[%s277 + $0x334] sm:$0xff]
      %v403 = vld [vmem:[%s277 + $0x33c] sm:$0xff]
      %v404 = vld [vmem:[%s277 + $0x344] sm:$0xf]
      %v405 = vld [vmem:[%s277 + $0x348] sm:$0xff]
      %v406 = vld [vmem:[%s277 + $0x350] sm:$0xff]
      %v407 = vld [vmem:[%s277 + $0x358] sm:$0xff]
      %v408 = vld [vmem:[%s277 + $0x360] sm:$0xf]
      %v409 = vld [vmem:[%s277 + $0x364] sm:$0xff]
      %v410 = vld [vmem:[%s277 + $0x36c] sm:$0xff]
      %v411 = vld [vmem:[%s277 + $0x374] sm:$0xff]
      %v412 = vld [vmem:[%s277 + $0x37c] sm:$0xf]
      %v413 = vld [vmem:[%s1] sm:$0xff]
      %v414 = vld [vmem:[%s1 + $0x8] sm:$0xff]
      %v415 = vld [vmem:[%s1 + $0x10] sm:$0xff]
      %v416 = vld [vmem:[%s1 + $0x18] sm:$0xff]
      %v417 = vld [vmem:[%s1 + $0x20] sm:$0xff]
      %v418 = vld [vmem:[%s1 + $0x28] sm:$0xff]
      %v419 = vld [vmem:[%s1 + $0x30] sm:$0xff]
      %v420 = vld [vmem:[%s1 + $0x38] sm:$0xff]
      %v421 = vld [vmem:[%s1 + $0x40] sm:$0xff]
      %v422 = vld [vmem:[%s1 + $0x48] sm:$0xff]
      %v423 = vld [vmem:[%s1 + $0x50] sm:$0xff]
      %v424 = vld [vmem:[%s1 + $0x58] sm:$0xff]
      %v425 = vld [vmem:[%s1 + $0x60] sm:$0xff]
      %v426 = vld [vmem:[%s1 + $0x68] sm:$0xff]
      %v427 = vld [vmem:[%s1 + $0x70] sm:$0xff]
      %v428 = vld [vmem:[%s1 + $0x78] sm:$0xff]
      %v429 = vld [vmem:[%s1 + $0x80] sm:$0xff]
      %v430 = vld [vmem:[%s1 + $0x88] sm:$0xff]
      %v431 = vld [vmem:[%s1 + $0x90] sm:$0xff]
      %v432 = vld [vmem:[%s1 + $0x98] sm:$0xff]
      %v433 = vld [vmem:[%s1 + $0xa0] sm:$0xff]
      %v434 = vld [vmem:[%s1 + $0xa8] sm:$0xff]
      %v435 = vld [vmem:[%s1 + $0xb0] sm:$0xff]
      %v436 = vld [vmem:[%s1 + $0xb8] sm:$0xff]
      %v437 = vld [vmem:[%s1 + $0xc0] sm:$0xff]
      %v438 = vld [vmem:[%s1 + $0xc8] sm:$0xff]
      %v439 = vld [vmem:[%s1 + $0xd0] sm:$0xff]
      %v440 = vld [vmem:[%s1 + $0xd8] sm:$0xff]
      %v441 = vld [vmem:[%s1 + $0xe0] sm:$0xff]
      %v442 = vld [vmem:[%s1 + $0xe8] sm:$0xff]
      %v443 = vld [vmem:[%s1 + $0xf0] sm:$0xff]
      %v444 = vld [vmem:[%s1 + $0xf8] sm:$0xff]
      %v445 = vld [vmem:[%s1 + $0x100] sm:$0xff]
      %v446 = vld [vmem:[%s1 + $0x108] sm:$0xff]
      %v447 = vld [vmem:[%s1 + $0x110] sm:$0xff]
      %v448 = vld [vmem:[%s1 + $0x118] sm:$0xff]
      %v449 = vld [vmem:[%s1 + $0x120] sm:$0xff]
      %v450 = vld [vmem:[%s1 + $0x128] sm:$0xff]
      %v451 = vld [vmem:[%s1 + $0x130] sm:$0xff]
      %v452 = vld [vmem:[%s1 + $0x138] sm:$0xff]
      %v453 = vld [vmem:[%s1 + $0x140] sm:$0xff]
      %v454 = vld [vmem:[%s1 + $0x148] sm:$0xff]
      %v455 = vld [vmem:[%s1 + $0x150] sm:$0xff]
      %v456 = vld [vmem:[%s1 + $0x158] sm:$0xff]
      %v457 = vld [vmem:[%s1 + $0x160] sm:$0xff]
      %v458 = vld [vmem:[%s1 + $0x168] sm:$0xff]
      %v459 = vld [vmem:[%s1 + $0x170] sm:$0xff]
      %v460 = vld [vmem:[%s1 + $0x178] sm:$0xff]
      %v461 = vld [vmem:[%s1 + $0x180] sm:$0xff]
      %v462 = vld [vmem:[%s1 + $0x188] sm:$0xff]
      %v463 = vld [vmem:[%s1 + $0x190] sm:$0xff]
      %v464 = vld [vmem:[%s1 + $0x198] sm:$0xff]
      %v465 = vld [vmem:[%s1 + $0x1a0] sm:$0xff]
      %v466 = vld [vmem:[%s1 + $0x1a8] sm:$0xff]
      %v467 = vld [vmem:[%s1 + $0x1b0] sm:$0xff]
      %v468 = vld [vmem:[%s1 + $0x1b8] sm:$0xff]
      %v469 = vld [vmem:[%s1 + $0x1c0] sm:$0xff]
      %v470 = vld [vmem:[%s1 + $0x1c8] sm:$0xff]
      %v471 = vld [vmem:[%s1 + $0x1d0] sm:$0xff]
      %v472 = vld [vmem:[%s1 + $0x1d8] sm:$0xff]
      %v473 = vld [vmem:[%s1 + $0x1e0] sm:$0xff]
      %v474 = vld [vmem:[%s1 + $0x1e8] sm:$0xff]
      %v475 = vld [vmem:[%s1 + $0x1f0] sm:$0xff]
      %v476 = vld [vmem:[%s1 + $0x1f8] sm:$0xff]
      %v477 = vld [vmem:[%s1 + $0x200] sm:$0xff]
      %v478 = vld [vmem:[%s1 + $0x208] sm:$0xff]
      %v479 = vld [vmem:[%s1 + $0x210] sm:$0xff]
      %v480 = vld [vmem:[%s1 + $0x218] sm:$0xff]
      %v481 = vld [vmem:[%s1 + $0x220] sm:$0xff]
      %v482 = vld [vmem:[%s1 + $0x228] sm:$0xff]
      %v483 = vld [vmem:[%s1 + $0x230] sm:$0xff]
      %v484 = vld [vmem:[%s1 + $0x238] sm:$0xff]
      %v485 = vld [vmem:[%s1 + $0x240] sm:$0xff]
      %v486 = vld [vmem:[%s1 + $0x248] sm:$0xff]
      %v487 = vld [vmem:[%s1 + $0x250] sm:$0xff]
      %v488 = vld [vmem:[%s1 + $0x258] sm:$0xff]
      %v489 = vld [vmem:[%s1 + $0x260] sm:$0xff]
      %v490 = vld [vmem:[%s1 + $0x268] sm:$0xff]
      %v491 = vld [vmem:[%s1 + $0x270] sm:$0xff]
      %v492 = vld [vmem:[%s1 + $0x278] sm:$0xff]
      %v493 = vld [vmem:[%s1 + $0x280] sm:$0xff]
      %v494 = vld [vmem:[%s1 + $0x288] sm:$0xff]
      %v495 = vld [vmem:[%s1 + $0x290] sm:$0xff]
      %v496 = vld [vmem:[%s1 + $0x298] sm:$0xff]
      %v497 = vld [vmem:[%s1 + $0x2a0] sm:$0xff]
      %v498 = vld [vmem:[%s1 + $0x2a8] sm:$0xff]
      %v499 = vld [vmem:[%s1 + $0x2b0] sm:$0xff]
      %v500 = vld [vmem:[%s1 + $0x2b8] sm:$0xff]
      %v501 = vld [vmem:[%s1 + $0x2c0] sm:$0xff]
      %v502 = vld [vmem:[%s1 + $0x2c8] sm:$0xff]
      %v503 = vld [vmem:[%s1 + $0x2d0] sm:$0xff]
      %v504 = vld [vmem:[%s1 + $0x2d8] sm:$0xff]
      %v505 = vld [vmem:[%s1 + $0x2e0] sm:$0xff]
      %v506 = vld [vmem:[%s1 + $0x2e8] sm:$0xff]
      %v507 = vld [vmem:[%s1 + $0x2f0] sm:$0xff]
      %v508 = vld [vmem:[%s1 + $0x2f8] sm:$0xff]
      %v509 = vld [vmem:[%s1 + $0x300] sm:$0xff]
      %v510 = vld [vmem:[%s1 + $0x308] sm:$0xff]
      %v511 = vld [vmem:[%s1 + $0x310] sm:$0xff]
      %v512 = vld [vmem:[%s1 + $0x318] sm:$0xff]
      %v513 = vld [vmem:[%s1 + $0x320] sm:$0xff]
      %v514 = vld [vmem:[%s1 + $0x328] sm:$0xff]
      %v515 = vld [vmem:[%s1 + $0x330] sm:$0xff]
      %v516 = vld [vmem:[%s1 + $0x338] sm:$0xff]
      %v517 = vld [vmem:[%s1 + $0x340] sm:$0xff]
      %v518 = vld [vmem:[%s1 + $0x348] sm:$0xff]
      %v519 = vld [vmem:[%s1 + $0x350] sm:$0xff]
      %v520 = vld [vmem:[%s1 + $0x358] sm:$0xff]
      %v521 = vld [vmem:[%s1 + $0x360] sm:$0xff]
      %v522 = vld [vmem:[%s1 + $0x368] sm:$0xff]
      %v523 = vld [vmem:[%s1 + $0x370] sm:$0xff]
      %v524 = vld [vmem:[%s1 + $0x378] sm:$0xff]
      %v525 = vld [vmem:[%s1 + $0x380] sm:$0xff]
      %v526 = vld [vmem:[%s1 + $0x388] sm:$0xff]
      %v527 = vld [vmem:[%s1 + $0x390] sm:$0xff]
      %v528 = vld [vmem:[%s1 + $0x398] sm:$0xff]
      %v529 = vld [vmem:[%s1 + $0x3a0] sm:$0xff]
      %v530 = vld [vmem:[%s1 + $0x3a8] sm:$0xff]
      %v531 = vld [vmem:[%s1 + $0x3b0] sm:$0xff]
      %v532 = vld [vmem:[%s1 + $0x3b8] sm:$0xff]
      %v533 = vld [vmem:[%s1 + $0x3c0] sm:$0xff]
      %v534 = vld [vmem:[%s1 + $0x3c8] sm:$0xff]
      %v535 = vld [vmem:[%s1 + $0x3d0] sm:$0xff]
      %v536 = vld [vmem:[%s1 + $0x3d8] sm:$0xff]
      %v537 = vld [vmem:[%s1 + $0x3e0] sm:$0xff]
      %v538 = vld [vmem:[%s1 + $0x3e8] sm:$0xff]
      %v539 = vld [vmem:[%s1 + $0x3f0] sm:$0xff]
      %v540 = vld [vmem:[%s1 + $0x3f8] sm:$0xff]
      %v541 = vld [vmem:[%s1 + $0x400] sm:$0xff]
      %v542 = vld [vmem:[%s1 + $0x408] sm:$0xff]
      %v543 = vld [vmem:[%s1 + $0x410] sm:$0xff]
      %v544 = vld [vmem:[%s1 + $0x418] sm:$0xff]
      %v545 = vld [vmem:[%s1 + $0x420] sm:$0xff]
      %v546 = vld [vmem:[%s1 + $0x428] sm:$0xff]
      %v547 = vld [vmem:[%s1 + $0x430] sm:$0xff]
      %v548 = vld [vmem:[%s1 + $0x438] sm:$0xff]
      %v549 = vld [vmem:[%s1 + $0x440] sm:$0xff]
      %v550 = vld [vmem:[%s1 + $0x448] sm:$0xff]
      %v551 = vld [vmem:[%s1 + $0x450] sm:$0xff]
      %v552 = vld [vmem:[%s1 + $0x458] sm:$0xff]
      %v553 = vld [vmem:[%s1 + $0x460] sm:$0xff]
      %v554 = vld [vmem:[%s1 + $0x468] sm:$0xff]
      %v555 = vld [vmem:[%s1 + $0x470] sm:$0xff]
      %v556 = vld [vmem:[%s1 + $0x478] sm:$0xff]
      %v557 = vld [vmem:[%s1 + $0x480] sm:$0xff]
      %v558 = vld [vmem:[%s1 + $0x488] sm:$0xff]
      %v559 = vld [vmem:[%s1 + $0x490] sm:$0xff]
      %v560 = vld [vmem:[%s1 + $0x498] sm:$0xff]
      %v561 = vld [vmem:[%s1 + $0x4a0] sm:$0xff]
      %v562 = vld [vmem:[%s1 + $0x4a8] sm:$0xff]
      %v563 = vld [vmem:[%s1 + $0x4b0] sm:$0xff]
      %v564 = vld [vmem:[%s1 + $0x4b8] sm:$0xff]
      %v565 = vld [vmem:[%s1 + $0x4c0] sm:$0xff]
      %v566 = vld [vmem:[%s1 + $0x4c8] sm:$0xff]
      %v567 = vld [vmem:[%s1 + $0x4d0] sm:$0xff]
      %v568 = vld [vmem:[%s1 + $0x4d8] sm:$0xff]
      %v569 = vld [vmem:[%s1 + $0x4e0] sm:$0xff]
      %v570 = vld [vmem:[%s1 + $0x4e8] sm:$0xff]
      %v571 = vld [vmem:[%s1 + $0x4f0] sm:$0xff]
      %v572 = vld [vmem:[%s1 + $0x4f8] sm:$0xff]
      %v573 = vld [vmem:[%s1 + $0x500] sm:$0xff]
      %v574 = vld [vmem:[%s1 + $0x508] sm:$0xff]
      %v575 = vld [vmem:[%s1 + $0x510] sm:$0xff]
      %v576 = vld [vmem:[%s1 + $0x518] sm:$0xff]
      %v577 = vld [vmem:[%s1 + $0x520] sm:$0xff]
      %v578 = vld [vmem:[%s1 + $0x528] sm:$0xff]
      %v579 = vld [vmem:[%s1 + $0x530] sm:$0xff]
      %v580 = vld [vmem:[%s1 + $0x538] sm:$0xff]
      %v581 = vld [vmem:[%s1 + $0x540] sm:$0xff]
      %v582 = vld [vmem:[%s1 + $0x548] sm:$0xff]
      %v583 = vld [vmem:[%s1 + $0x550] sm:$0xff]
      %v584 = vld [vmem:[%s1 + $0x558] sm:$0xff]
      %v585 = vld [vmem:[%s1 + $0x560] sm:$0xff]
      %v586 = vld [vmem:[%s1 + $0x568] sm:$0xff]
      %v587 = vld [vmem:[%s1 + $0x570] sm:$0xff]
      %v588 = vld [vmem:[%s1 + $0x578] sm:$0xff]
      %v589 = vld [vmem:[%s1 + $0x580] sm:$0xff]
      %v590 = vld [vmem:[%s1 + $0x588] sm:$0xff]
      %v591 = vld [vmem:[%s1 + $0x590] sm:$0xff]
      %v592 = vld [vmem:[%s1 + $0x598] sm:$0xff]
      %v593 = vld [vmem:[%s1 + $0x5a0] sm:$0xff]
      %v594 = vld [vmem:[%s1 + $0x5a8] sm:$0xff]
      %v595 = vld [vmem:[%s1 + $0x5b0] sm:$0xff]
      %v596 = vld [vmem:[%s1 + $0x5b8] sm:$0xff]
      %v597 = vld [vmem:[%s1 + $0x5c0] sm:$0xff]
      %v598 = vld [vmem:[%s1 + $0x5c8] sm:$0xff]
      %v599 = vld [vmem:[%s1 + $0x5d0] sm:$0xff]
      %v600 = vld [vmem:[%s1 + $0x5d8] sm:$0xff]
      %v601 = vld [vmem:[%s1 + $0x5e0] sm:$0xff]
      %v602 = vld [vmem:[%s1 + $0x5e8] sm:$0xff]
      %v603 = vld [vmem:[%s1 + $0x5f0] sm:$0xff]
      %v604 = vld [vmem:[%s1 + $0x5f8] sm:$0xff]
      %v605 = vld [vmem:[%s1 + $0x600] sm:$0xff]
      %v606 = vld [vmem:[%s1 + $0x608] sm:$0xff]
      %v607 = vld [vmem:[%s1 + $0x610] sm:$0xff]
      %v608 = vld [vmem:[%s1 + $0x618] sm:$0xff]
      %v609 = vld [vmem:[%s1 + $0x620] sm:$0xff]
      %v610 = vld [vmem:[%s1 + $0x628] sm:$0xff]
      %v611 = vld [vmem:[%s1 + $0x630] sm:$0xff]
      %v612 = vld [vmem:[%s1 + $0x638] sm:$0xff]
      %v613 = vld [vmem:[%s1 + $0x640] sm:$0xff]
      %v614 = vld [vmem:[%s1 + $0x648] sm:$0xff]
      %v615 = vld [vmem:[%s1 + $0x650] sm:$0xff]
      %v616 = vld [vmem:[%s1 + $0x658] sm:$0xff]
      %v617 = vld [vmem:[%s1 + $0x660] sm:$0xff]
      %v618 = vld [vmem:[%s1 + $0x668] sm:$0xff]
      %v619 = vld [vmem:[%s1 + $0x670] sm:$0xff]
      %v620 = vld [vmem:[%s1 + $0x678] sm:$0xff]
      %v621 = vld [vmem:[%s1 + $0x680] sm:$0xff]
      %v622 = vld [vmem:[%s1 + $0x688] sm:$0xff]
      %v623 = vld [vmem:[%s1 + $0x690] sm:$0xff]
      %v624 = vld [vmem:[%s1 + $0x698] sm:$0xff]
      %v625 = vld [vmem:[%s1 + $0x6a0] sm:$0xff]
      %v626 = vld [vmem:[%s1 + $0x6a8] sm:$0xff]
      %v627 = vld [vmem:[%s1 + $0x6b0] sm:$0xff]
      %v628 = vld [vmem:[%s1 + $0x6b8] sm:$0xff]
      %v629 = vld [vmem:[%s1 + $0x6c0] sm:$0xff]
      %v630 = vld [vmem:[%s1 + $0x6c8] sm:$0xff]
      %v631 = vld [vmem:[%s1 + $0x6d0] sm:$0xff]
      %v632 = vld [vmem:[%s1 + $0x6d8] sm:$0xff]
      %v633 = vld [vmem:[%s1 + $0x6e0] sm:$0xff]
      %v634 = vld [vmem:[%s1 + $0x6e8] sm:$0xff]
      %v635 = vld [vmem:[%s1 + $0x6f0] sm:$0xff]
      %v636 = vld [vmem:[%s1 + $0x6f8] sm:$0xff]
      %v637 = vld [vmem:[%s2] sm:$0xf]
      %v639 = vperm.slane %v637, 0
      %v640 = vperm.slane %v637, 1
      %v641 = vperm.slane %v637, 2
      %v642 = vperm.slane %v637, 3
      %v775 = vunpack.c.l.b16 %v285
      %v776 = vunpack.c.h.b16 %v285
      %v777 = vunpack.c.l.b16 %v286
      %v778 = vunpack.c.h.b16 %v286
      %v779 = vunpack.c.l.b16 %v287
      %v780 = vunpack.c.h.b16 %v287
      %v781 = vunpack.c.l.b16 %v288
      %v782 = vunpack.c.l.b16 %v289
      %v783 = vunpack.c.h.b16 %v289
      %v784 = vunpack.c.l.b16 %v290
      %v785 = vunpack.c.h.b16 %v290
      %v786 = vunpack.c.l.b16 %v291
      %v787 = vunpack.c.h.b16 %v291
      %v788 = vunpack.c.l.b16 %v292
      %v789 = vunpack.c.l.b16 %v293
      %v790 = vunpack.c.h.b16 %v293
      %v791 = vunpack.c.l.b16 %v294
      %v792 = vunpack.c.h.b16 %v294
      %v793 = vunpack.c.l.b16 %v295
      %v794 = vunpack.c.h.b16 %v295
      %v795 = vunpack.c.l.b16 %v296
      %v796 = vunpack.c.l.b16 %v297
      %v797 = vunpack.c.h.b16 %v297
      %v798 = vunpack.c.l.b16 %v298
      %v799 = vunpack.c.h.b16 %v298
      %v800 = vunpack.c.l.b16 %v299
      %v801 = vunpack.c.h.b16 %v299
      %v802 = vunpack.c.l.b16 %v300
      %v803 = vunpack.c.l.b16 %v301
      %v804 = vunpack.c.h.b16 %v301
      %v805 = vunpack.c.l.b16 %v302
      %v806 = vunpack.c.h.b16 %v302
      %v807 = vunpack.c.l.b16 %v303
      %v808 = vunpack.c.h.b16 %v303
      %v809 = vunpack.c.l.b16 %v304
      %v810 = vunpack.c.l.b16 %v305
      %v811 = vunpack.c.h.b16 %v305
      %v812 = vunpack.c.l.b16 %v306
      %v813 = vunpack.c.h.b16 %v306
      %v814 = vunpack.c.l.b16 %v307
      %v815 = vunpack.c.h.b16 %v307
      %v816 = vunpack.c.l.b16 %v308
      %v817 = vunpack.c.l.b16 %v309
      %v818 = vunpack.c.h.b16 %v309
      %v819 = vunpack.c.l.b16 %v310
      %v820 = vunpack.c.h.b16 %v310
      %v821 = vunpack.c.l.b16 %v311
      %v822 = vunpack.c.h.b16 %v311
      %v823 = vunpack.c.l.b16 %v312
      %v824 = vunpack.c.l.b16 %v313
      %v825 = vunpack.c.h.b16 %v313
      %v826 = vunpack.c.l.b16 %v314
      %v827 = vunpack.c.h.b16 %v314
      %v828 = vunpack.c.l.b16 %v315
      %v829 = vunpack.c.h.b16 %v315
      %v830 = vunpack.c.l.b16 %v316
      %v831 = vunpack.c.l.b16 %v317
      %v832 = vunpack.c.h.b16 %v317
      %v833 = vunpack.c.l.b16 %v318
      %v834 = vunpack.c.h.b16 %v318
      %v835 = vunpack.c.l.b16 %v319
      %v836 = vunpack.c.h.b16 %v319
      %v837 = vunpack.c.l.b16 %v320
      %v838 = vunpack.c.l.b16 %v321
      %v839 = vunpack.c.h.b16 %v321
      %v840 = vunpack.c.l.b16 %v322
      %v841 = vunpack.c.h.b16 %v322
      %v842 = vunpack.c.l.b16 %v323
      %v843 = vunpack.c.h.b16 %v323
      %v844 = vunpack.c.l.b16 %v324
      %v845 = vunpack.c.l.b16 %v325
      %v846 = vunpack.c.h.b16 %v325
      %v847 = vunpack.c.l.b16 %v326
      %v848 = vunpack.c.h.b16 %v326
      %v849 = vunpack.c.l.b16 %v327
      %v850 = vunpack.c.h.b16 %v327
      %v851 = vunpack.c.l.b16 %v328
      %v852 = vunpack.c.l.b16 %v329
      %v853 = vunpack.c.h.b16 %v329
      %v854 = vunpack.c.l.b16 %v330
      %v855 = vunpack.c.h.b16 %v330
      %v856 = vunpack.c.l.b16 %v331
      %v857 = vunpack.c.h.b16 %v331
      %v858 = vunpack.c.l.b16 %v332
      %v859 = vunpack.c.l.b16 %v333
      %v860 = vunpack.c.h.b16 %v333
      %v861 = vunpack.c.l.b16 %v334
      %v862 = vunpack.c.h.b16 %v334
      %v863 = vunpack.c.l.b16 %v335
      %v864 = vunpack.c.h.b16 %v335
      %v865 = vunpack.c.l.b16 %v336
      %v866 = vunpack.c.l.b16 %v337
      %v867 = vunpack.c.h.b16 %v337
      %v868 = vunpack.c.l.b16 %v338
      %v869 = vunpack.c.h.b16 %v338
      %v870 = vunpack.c.l.b16 %v339
      %v871 = vunpack.c.h.b16 %v339
      %v872 = vunpack.c.l.b16 %v340
      %v873 = vunpack.c.l.b16 %v341
      %v874 = vunpack.c.h.b16 %v341
      %v875 = vunpack.c.l.b16 %v342
      %v876 = vunpack.c.h.b16 %v342
      %v877 = vunpack.c.l.b16 %v343
      %v878 = vunpack.c.h.b16 %v343
      %v879 = vunpack.c.l.b16 %v344
      %v880 = vunpack.c.l.b16 %v345
      %v881 = vunpack.c.h.b16 %v345
      %v882 = vunpack.c.l.b16 %v346
      %v883 = vunpack.c.h.b16 %v346
      %v884 = vunpack.c.l.b16 %v347
      %v885 = vunpack.c.h.b16 %v347
      %v886 = vunpack.c.l.b16 %v348
      %v887 = vunpack.c.l.b16 %v349
      %v888 = vunpack.c.h.b16 %v349
      %v889 = vunpack.c.l.b16 %v350
      %v890 = vunpack.c.h.b16 %v350
      %v891 = vunpack.c.l.b16 %v351
      %v892 = vunpack.c.h.b16 %v351
      %v893 = vunpack.c.l.b16 %v352
      %v894 = vunpack.c.l.b16 %v353
      %v895 = vunpack.c.h.b16 %v353
      %v896 = vunpack.c.l.b16 %v354
      %v897 = vunpack.c.h.b16 %v354
      %v898 = vunpack.c.l.b16 %v355
      %v899 = vunpack.c.h.b16 %v355
      %v900 = vunpack.c.l.b16 %v356
      %v901 = vunpack.c.l.b16 %v357
      %v902 = vunpack.c.h.b16 %v357
      %v903 = vunpack.c.l.b16 %v358
      %v904 = vunpack.c.h.b16 %v358
      %v905 = vunpack.c.l.b16 %v359
      %v906 = vunpack.c.h.b16 %v359
      %v907 = vunpack.c.l.b16 %v360
      %v908 = vunpack.c.l.b16 %v361
      %v909 = vunpack.c.h.b16 %v361
      %v910 = vunpack.c.l.b16 %v362
      %v911 = vunpack.c.h.b16 %v362
      %v912 = vunpack.c.l.b16 %v363
      %v913 = vunpack.c.h.b16 %v363
      %v914 = vunpack.c.l.b16 %v364
      %v915 = vunpack.c.l.b16 %v365
      %v916 = vunpack.c.h.b16 %v365
      %v917 = vunpack.c.l.b16 %v366
      %v918 = vunpack.c.h.b16 %v366
      %v919 = vunpack.c.l.b16 %v367
      %v920 = vunpack.c.h.b16 %v367
      %v921 = vunpack.c.l.b16 %v368
      %v922 = vunpack.c.l.b16 %v369
      %v923 = vunpack.c.h.b16 %v369
      %v924 = vunpack.c.l.b16 %v370
      %v925 = vunpack.c.h.b16 %v370
      %v926 = vunpack.c.l.b16 %v371
      %v927 = vunpack.c.h.b16 %v371
      %v928 = vunpack.c.l.b16 %v372
      %v929 = vunpack.c.l.b16 %v373
      %v930 = vunpack.c.h.b16 %v373
      %v931 = vunpack.c.l.b16 %v374
      %v932 = vunpack.c.h.b16 %v374
      %v933 = vunpack.c.l.b16 %v375
      %v934 = vunpack.c.h.b16 %v375
      %v935 = vunpack.c.l.b16 %v376
      %v936 = vunpack.c.l.b16 %v377
      %v937 = vunpack.c.h.b16 %v377
      %v938 = vunpack.c.l.b16 %v378
      %v939 = vunpack.c.h.b16 %v378
      %v940 = vunpack.c.l.b16 %v379
      %v941 = vunpack.c.h.b16 %v379
      %v942 = vunpack.c.l.b16 %v380
      %v943 = vunpack.c.l.b16 %v381
      %v944 = vunpack.c.h.b16 %v381
      %v945 = vunpack.c.l.b16 %v382
      %v946 = vunpack.c.h.b16 %v382
      %v947 = vunpack.c.l.b16 %v383
      %v948 = vunpack.c.h.b16 %v383
      %v949 = vunpack.c.l.b16 %v384
      %v950 = vunpack.c.l.b16 %v385
      %v951 = vunpack.c.h.b16 %v385
      %v952 = vunpack.c.l.b16 %v386
      %v953 = vunpack.c.h.b16 %v386
      %v954 = vunpack.c.l.b16 %v387
      %v955 = vunpack.c.h.b16 %v387
      %v956 = vunpack.c.l.b16 %v388
      %v957 = vunpack.c.l.b16 %v389
      %v958 = vunpack.c.h.b16 %v389
      %v959 = vunpack.c.l.b16 %v390
      %v960 = vunpack.c.h.b16 %v390
      %v961 = vunpack.c.l.b16 %v391
      %v962 = vunpack.c.h.b16 %v391
      %v963 = vunpack.c.l.b16 %v392
      %v964 = vunpack.c.l.b16 %v393
      %v965 = vunpack.c.h.b16 %v393
      %v966 = vunpack.c.l.b16 %v394
      %v967 = vunpack.c.h.b16 %v394
      %v968 = vunpack.c.l.b16 %v395
      %v969 = vunpack.c.h.b16 %v395
      %v970 = vunpack.c.l.b16 %v396
      %v971 = vunpack.c.l.b16 %v397
      %v972 = vunpack.c.h.b16 %v397
      %v973 = vunpack.c.l.b16 %v398
      %v974 = vunpack.c.h.b16 %v398
      %v975 = vunpack.c.l.b16 %v399
      %v976 = vunpack.c.h.b16 %v399
      %v977 = vunpack.c.l.b16 %v400
      %v978 = vunpack.c.l.b16 %v401
      %v979 = vunpack.c.h.b16 %v401
      %v980 = vunpack.c.l.b16 %v402
      %v981 = vunpack.c.h.b16 %v402
      %v982 = vunpack.c.l.b16 %v403
      %v983 = vunpack.c.h.b16 %v403
      %v984 = vunpack.c.l.b16 %v404
      %v985 = vunpack.c.l.b16 %v405
      %v986 = vunpack.c.h.b16 %v405
      %v987 = vunpack.c.l.b16 %v406
      %v988 = vunpack.c.h.b16 %v406
      %v989 = vunpack.c.l.b16 %v407
      %v990 = vunpack.c.h.b16 %v407
      %v991 = vunpack.c.l.b16 %v408
      %v992 = vunpack.c.l.b16 %v409
      %v993 = vunpack.c.h.b16 %v409
      %v994 = vunpack.c.l.b16 %v410
      %v995 = vunpack.c.h.b16 %v410
      %v996 = vunpack.c.l.b16 %v411
      %v997 = vunpack.c.h.b16 %v411
      %v998 = vunpack.c.l.b16 %v412
      %v999 = vpack.c.b16 %v782, %v775
      %v1000 = vpack.c.b16 %v783, %v776
      %v1001 = vpack.c.b16 %v784, %v777
      %v1002 = vpack.c.b16 %v785, %v778
      %v1003 = vpack.c.b16 %v786, %v779
      %v1004 = vpack.c.b16 %v787, %v780
      %v1005 = vpack.c.b16 %v788, %v781
      %v1006 = vpack.c.b16 %v796, %v789
      %v1007 = vpack.c.b16 %v797, %v790
      %v1008 = vpack.c.b16 %v798, %v791
      %v1009 = vpack.c.b16 %v799, %v792
      %v1010 = vpack.c.b16 %v800, %v793
      %v1011 = vpack.c.b16 %v801, %v794
      %v1012 = vpack.c.b16 %v802, %v795
      %v1013 = vpack.c.b16 %v810, %v803
      %v1014 = vpack.c.b16 %v811, %v804
      %v1015 = vpack.c.b16 %v812, %v805
      %v1016 = vpack.c.b16 %v813, %v806
      %v1017 = vpack.c.b16 %v814, %v807
      %v1018 = vpack.c.b16 %v815, %v808
      %v1019 = vpack.c.b16 %v816, %v809
      %v1020 = vpack.c.b16 %v824, %v817
      %v1021 = vpack.c.b16 %v825, %v818
      %v1022 = vpack.c.b16 %v826, %v819
      %v1023 = vpack.c.b16 %v827, %v820
      %v1024 = vpack.c.b16 %v828, %v821
      %v1025 = vpack.c.b16 %v829, %v822
      %v1026 = vpack.c.b16 %v830, %v823
      %v1027 = vpack.c.b16 %v838, %v831
      %v1028 = vpack.c.b16 %v839, %v832
      %v1029 = vpack.c.b16 %v840, %v833
      %v1030 = vpack.c.b16 %v841, %v834
      %v1031 = vpack.c.b16 %v842, %v835
      %v1032 = vpack.c.b16 %v843, %v836
      %v1033 = vpack.c.b16 %v844, %v837
      %v1034 = vpack.c.b16 %v852, %v845
      %v1035 = vpack.c.b16 %v853, %v846
      %v1036 = vpack.c.b16 %v854, %v847
      %v1037 = vpack.c.b16 %v855, %v848
      %v1038 = vpack.c.b16 %v856, %v849
      %v1039 = vpack.c.b16 %v857, %v850
      %v1040 = vpack.c.b16 %v858, %v851
      %v1041 = vpack.c.b16 %v866, %v859
      %v1042 = vpack.c.b16 %v867, %v860
      %v1043 = vpack.c.b16 %v868, %v861
      %v1044 = vpack.c.b16 %v869, %v862
      %v1045 = vpack.c.b16 %v870, %v863
      %v1046 = vpack.c.b16 %v871, %v864
      %v1047 = vpack.c.b16 %v872, %v865
      %v1048 = vpack.c.b16 %v880, %v873
      %v1049 = vpack.c.b16 %v881, %v874
      %v1050 = vpack.c.b16 %v882, %v875
      %v1051 = vpack.c.b16 %v883, %v876
      %v1052 = vpack.c.b16 %v884, %v877
      %v1053 = vpack.c.b16 %v885, %v878
      %v1054 = vpack.c.b16 %v886, %v879
      %v1055 = vpack.c.b16 %v894, %v887
      %v1056 = vpack.c.b16 %v895, %v888
      %v1057 = vpack.c.b16 %v896, %v889
      %v1058 = vpack.c.b16 %v897, %v890
      %v1059 = vpack.c.b16 %v898, %v891
      %v1060 = vpack.c.b16 %v899, %v892
      %v1061 = vpack.c.b16 %v900, %v893
      %v1062 = vpack.c.b16 %v908, %v901
      %v1063 = vpack.c.b16 %v909, %v902
      %v1064 = vpack.c.b16 %v910, %v903
      %v1065 = vpack.c.b16 %v911, %v904
      %v1066 = vpack.c.b16 %v912, %v905
      %v1067 = vpack.c.b16 %v913, %v906
      %v1068 = vpack.c.b16 %v914, %v907
      %v1069 = vpack.c.b16 %v922, %v915
      %v1070 = vpack.c.b16 %v923, %v916
      %v1071 = vpack.c.b16 %v924, %v917
      %v1072 = vpack.c.b16 %v925, %v918
      %v1073 = vpack.c.b16 %v926, %v919
      %v1074 = vpack.c.b16 %v927, %v920
      %v1075 = vpack.c.b16 %v928, %v921
      %v1076 = vpack.c.b16 %v936, %v929
      %v1077 = vpack.c.b16 %v937, %v930
      %v1078 = vpack.c.b16 %v938, %v931
      %v1079 = vpack.c.b16 %v939, %v932
      %v1080 = vpack.c.b16 %v940, %v933
      %v1081 = vpack.c.b16 %v941, %v934
      %v1082 = vpack.c.b16 %v942, %v935
      %v1083 = vpack.c.b16 %v950, %v943
      %v1084 = vpack.c.b16 %v951, %v944
      %v1085 = vpack.c.b16 %v952, %v945
      %v1086 = vpack.c.b16 %v953, %v946
      %v1087 = vpack.c.b16 %v954, %v947
      %v1088 = vpack.c.b16 %v955, %v948
      %v1089 = vpack.c.b16 %v956, %v949
      %v1090 = vpack.c.b16 %v964, %v957
      %v1091 = vpack.c.b16 %v965, %v958
      %v1092 = vpack.c.b16 %v966, %v959
      %v1093 = vpack.c.b16 %v967, %v960
      %v1094 = vpack.c.b16 %v968, %v961
      %v1095 = vpack.c.b16 %v969, %v962
      %v1096 = vpack.c.b16 %v970, %v963
      %v1097 = vpack.c.b16 %v978, %v971
      %v1098 = vpack.c.b16 %v979, %v972
      %v1099 = vpack.c.b16 %v980, %v973
      %v1100 = vpack.c.b16 %v981, %v974
      %v1101 = vpack.c.b16 %v982, %v975
      %v1102 = vpack.c.b16 %v983, %v976
      %v1103 = vpack.c.b16 %v984, %v977
      %v1104 = vpack.c.b16 %v992, %v985
      %v1105 = vpack.c.b16 %v993, %v986
      %v1106 = vpack.c.b16 %v994, %v987
      %v1107 = vpack.c.b16 %v995, %v988
      %v1108 = vpack.c.b16 %v996, %v989
      %v1109 = vpack.c.b16 %v997, %v990
      %v1110 = vpack.c.b16 %v998, %v991
      %v1447 = vunpack.c.l.b16 %v413
      %v1448 = vunpack.c.h.b16 %v413
      %v1449 = vunpack.c.l.b16 %v414
      %v1450 = vunpack.c.h.b16 %v414
      %v1451 = vunpack.c.l.b16 %v415
      %v1452 = vunpack.c.h.b16 %v415
      %v1453 = vunpack.c.l.b16 %v416
      %v1454 = vunpack.c.h.b16 %v416
      %v1455 = vunpack.c.l.b16 %v417
      %v1456 = vunpack.c.h.b16 %v417
      %v1457 = vunpack.c.l.b16 %v418
      %v1458 = vunpack.c.h.b16 %v418
      %v1459 = vunpack.c.l.b16 %v419
      %v1460 = vunpack.c.h.b16 %v419
      %v1461 = vunpack.c.l.b16 %v420
      %v1462 = vunpack.c.h.b16 %v420
      %v1463 = vunpack.c.l.b16 %v421
      %v1464 = vunpack.c.h.b16 %v421
      %v1465 = vunpack.c.l.b16 %v422
      %v1466 = vunpack.c.h.b16 %v422
      %v1467 = vunpack.c.l.b16 %v423
      %v1468 = vunpack.c.h.b16 %v423
      %v1469 = vunpack.c.l.b16 %v424
      %v1470 = vunpack.c.h.b16 %v424
      %v1471 = vunpack.c.l.b16 %v425
      %v1472 = vunpack.c.h.b16 %v425
      %v1473 = vunpack.c.l.b16 %v426
      %v1474 = vunpack.c.h.b16 %v426
      %v1475 = vunpack.c.l.b16 %v427
      %v1476 = vunpack.c.h.b16 %v427
      %v1477 = vunpack.c.l.b16 %v428
      %v1478 = vunpack.c.h.b16 %v428
      %v1479 = vunpack.c.l.b16 %v429
      %v1480 = vunpack.c.h.b16 %v429
      %v1481 = vunpack.c.l.b16 %v430
      %v1482 = vunpack.c.h.b16 %v430
      %v1483 = vunpack.c.l.b16 %v431
      %v1484 = vunpack.c.h.b16 %v431
      %v1485 = vunpack.c.l.b16 %v432
      %v1486 = vunpack.c.h.b16 %v432
      %v1487 = vunpack.c.l.b16 %v433
      %v1488 = vunpack.c.h.b16 %v433
      %v1489 = vunpack.c.l.b16 %v434
      %v1490 = vunpack.c.h.b16 %v434
      %v1491 = vunpack.c.l.b16 %v435
      %v1492 = vunpack.c.h.b16 %v435
      %v1493 = vunpack.c.l.b16 %v436
      %v1494 = vunpack.c.h.b16 %v436
      %v1495 = vunpack.c.l.b16 %v437
      %v1496 = vunpack.c.h.b16 %v437
      %v1497 = vunpack.c.l.b16 %v438
      %v1498 = vunpack.c.h.b16 %v438
      %v1499 = vunpack.c.l.b16 %v439
      %v1500 = vunpack.c.h.b16 %v439
      %v1501 = vunpack.c.l.b16 %v440
      %v1502 = vunpack.c.h.b16 %v440
      %v1503 = vunpack.c.l.b16 %v441
      %v1504 = vunpack.c.h.b16 %v441
      %v1505 = vunpack.c.l.b16 %v442
      %v1506 = vunpack.c.h.b16 %v442
      %v1507 = vunpack.c.l.b16 %v443
      %v1508 = vunpack.c.h.b16 %v443
      %v1509 = vunpack.c.l.b16 %v444
      %v1510 = vunpack.c.h.b16 %v444
      %v1511 = vunpack.c.l.b16 %v445
      %v1512 = vunpack.c.h.b16 %v445
      %v1513 = vunpack.c.l.b16 %v446
      %v1514 = vunpack.c.h.b16 %v446
      %v1515 = vunpack.c.l.b16 %v447
      %v1516 = vunpack.c.h.b16 %v447
      %v1517 = vunpack.c.l.b16 %v448
      %v1518 = vunpack.c.h.b16 %v448
      %v1519 = vunpack.c.l.b16 %v449
      %v1520 = vunpack.c.h.b16 %v449
      %v1521 = vunpack.c.l.b16 %v450
      %v1522 = vunpack.c.h.b16 %v450
      %v1523 = vunpack.c.l.b16 %v451
      %v1524 = vunpack.c.h.b16 %v451
      %v1525 = vunpack.c.l.b16 %v452
      %v1526 = vunpack.c.h.b16 %v452
      %v1527 = vunpack.c.l.b16 %v453
      %v1528 = vunpack.c.h.b16 %v453
      %v1529 = vunpack.c.l.b16 %v454
      %v1530 = vunpack.c.h.b16 %v454
      %v1531 = vunpack.c.l.b16 %v455
      %v1532 = vunpack.c.h.b16 %v455
      %v1533 = vunpack.c.l.b16 %v456
      %v1534 = vunpack.c.h.b16 %v456
      %v1535 = vunpack.c.l.b16 %v457
      %v1536 = vunpack.c.h.b16 %v457
      %v1537 = vunpack.c.l.b16 %v458
      %v1538 = vunpack.c.h.b16 %v458
      %v1539 = vunpack.c.l.b16 %v459
      %v1540 = vunpack.c.h.b16 %v459
      %v1541 = vunpack.c.l.b16 %v460
      %v1542 = vunpack.c.h.b16 %v460
      %v1543 = vunpack.c.l.b16 %v461
      %v1544 = vunpack.c.h.b16 %v461
      %v1545 = vunpack.c.l.b16 %v462
      %v1546 = vunpack.c.h.b16 %v462
      %v1547 = vunpack.c.l.b16 %v463
      %v1548 = vunpack.c.h.b16 %v463
      %v1549 = vunpack.c.l.b16 %v464
      %v1550 = vunpack.c.h.b16 %v464
      %v1551 = vunpack.c.l.b16 %v465
      %v1552 = vunpack.c.h.b16 %v465
      %v1553 = vunpack.c.l.b16 %v466
      %v1554 = vunpack.c.h.b16 %v466
      %v1555 = vunpack.c.l.b16 %v467
      %v1556 = vunpack.c.h.b16 %v467
      %v1557 = vunpack.c.l.b16 %v468
      %v1558 = vunpack.c.h.b16 %v468
      %v1559 = vunpack.c.l.b16 %v469
      %v1560 = vunpack.c.h.b16 %v469
      %v1561 = vunpack.c.l.b16 %v470
      %v1562 = vunpack.c.h.b16 %v470
      %v1563 = vunpack.c.l.b16 %v471
      %v1564 = vunpack.c.h.b16 %v471
      %v1565 = vunpack.c.l.b16 %v472
      %v1566 = vunpack.c.h.b16 %v472
      %v1567 = vunpack.c.l.b16 %v473
      %v1568 = vunpack.c.h.b16 %v473
      %v1569 = vunpack.c.l.b16 %v474
      %v1570 = vunpack.c.h.b16 %v474
      %v1571 = vunpack.c.l.b16 %v475
      %v1572 = vunpack.c.h.b16 %v475
      %v1573 = vunpack.c.l.b16 %v476
      %v1574 = vunpack.c.h.b16 %v476
      %v1575 = vunpack.c.l.b16 %v477
      %v1576 = vunpack.c.h.b16 %v477
      %v1577 = vunpack.c.l.b16 %v478
      %v1578 = vunpack.c.h.b16 %v478
      %v1579 = vunpack.c.l.b16 %v479
      %v1580 = vunpack.c.h.b16 %v479
      %v1581 = vunpack.c.l.b16 %v480
      %v1582 = vunpack.c.h.b16 %v480
      %v1583 = vunpack.c.l.b16 %v481
      %v1584 = vunpack.c.h.b16 %v481
      %v1585 = vunpack.c.l.b16 %v482
      %v1586 = vunpack.c.h.b16 %v482
      %v1587 = vunpack.c.l.b16 %v483
      %v1588 = vunpack.c.h.b16 %v483
      %v1589 = vunpack.c.l.b16 %v484
      %v1590 = vunpack.c.h.b16 %v484
      %v1591 = vunpack.c.l.b16 %v485
      %v1592 = vunpack.c.h.b16 %v485
      %v1593 = vunpack.c.l.b16 %v486
      %v1594 = vunpack.c.h.b16 %v486
      %v1595 = vunpack.c.l.b16 %v487
      %v1596 = vunpack.c.h.b16 %v487
      %v1597 = vunpack.c.l.b16 %v488
      %v1598 = vunpack.c.h.b16 %v488
      %v1599 = vunpack.c.l.b16 %v489
      %v1600 = vunpack.c.h.b16 %v489
      %v1601 = vunpack.c.l.b16 %v490
      %v1602 = vunpack.c.h.b16 %v490
      %v1603 = vunpack.c.l.b16 %v491
      %v1604 = vunpack.c.h.b16 %v491
      %v1605 = vunpack.c.l.b16 %v492
      %v1606 = vunpack.c.h.b16 %v492
      %v1607 = vunpack.c.l.b16 %v493
      %v1608 = vunpack.c.h.b16 %v493
      %v1609 = vunpack.c.l.b16 %v494
      %v1610 = vunpack.c.h.b16 %v494
      %v1611 = vunpack.c.l.b16 %v495
      %v1612 = vunpack.c.h.b16 %v495
      %v1613 = vunpack.c.l.b16 %v496
      %v1614 = vunpack.c.h.b16 %v496
      %v1615 = vunpack.c.l.b16 %v497
      %v1616 = vunpack.c.h.b16 %v497
      %v1617 = vunpack.c.l.b16 %v498
      %v1618 = vunpack.c.h.b16 %v498
      %v1619 = vunpack.c.l.b16 %v499
      %v1620 = vunpack.c.h.b16 %v499
      %v1621 = vunpack.c.l.b16 %v500
      %v1622 = vunpack.c.h.b16 %v500
      %v1623 = vunpack.c.l.b16 %v501
      %v1624 = vunpack.c.h.b16 %v501
      %v1625 = vunpack.c.l.b16 %v502
      %v1626 = vunpack.c.h.b16 %v502
      %v1627 = vunpack.c.l.b16 %v503
      %v1628 = vunpack.c.h.b16 %v503
      %v1629 = vunpack.c.l.b16 %v504
      %v1630 = vunpack.c.h.b16 %v504
      %v1631 = vunpack.c.l.b16 %v505
      %v1632 = vunpack.c.h.b16 %v505
      %v1633 = vunpack.c.l.b16 %v506
      %v1634 = vunpack.c.h.b16 %v506
      %v1635 = vunpack.c.l.b16 %v507
      %v1636 = vunpack.c.h.b16 %v507
      %v1637 = vunpack.c.l.b16 %v508
      %v1638 = vunpack.c.h.b16 %v508
      %v1639 = vunpack.c.l.b16 %v509
      %v1640 = vunpack.c.h.b16 %v509
      %v1641 = vunpack.c.l.b16 %v510
      %v1642 = vunpack.c.h.b16 %v510
      %v1643 = vunpack.c.l.b16 %v511
      %v1644 = vunpack.c.h.b16 %v511
      %v1645 = vunpack.c.l.b16 %v512
      %v1646 = vunpack.c.h.b16 %v512
      %v1647 = vunpack.c.l.b16 %v513
      %v1648 = vunpack.c.h.b16 %v513
      %v1649 = vunpack.c.l.b16 %v514
      %v1650 = vunpack.c.h.b16 %v514
      %v1651 = vunpack.c.l.b16 %v515
      %v1652 = vunpack.c.h.b16 %v515
      %v1653 = vunpack.c.l.b16 %v516
      %v1654 = vunpack.c.h.b16 %v516
      %v1655 = vunpack.c.l.b16 %v517
      %v1656 = vunpack.c.h.b16 %v517
      %v1657 = vunpack.c.l.b16 %v518
      %v1658 = vunpack.c.h.b16 %v518
      %v1659 = vunpack.c.l.b16 %v519
      %v1660 = vunpack.c.h.b16 %v519
      %v1661 = vunpack.c.l.b16 %v520
      %v1662 = vunpack.c.h.b16 %v520
      %v1663 = vunpack.c.l.b16 %v521
      %v1664 = vunpack.c.h.b16 %v521
      %v1665 = vunpack.c.l.b16 %v522
      %v1666 = vunpack.c.h.b16 %v522
      %v1667 = vunpack.c.l.b16 %v523
      %v1668 = vunpack.c.h.b16 %v523
      %v1669 = vunpack.c.l.b16 %v524
      %v1670 = vunpack.c.h.b16 %v524
      %v1671 = vunpack.c.l.b16 %v525
      %v1672 = vunpack.c.h.b16 %v525
      %v1673 = vunpack.c.l.b16 %v526
      %v1674 = vunpack.c.h.b16 %v526
      %v1675 = vunpack.c.l.b16 %v527
      %v1676 = vunpack.c.h.b16 %v527
      %v1677 = vunpack.c.l.b16 %v528
      %v1678 = vunpack.c.h.b16 %v528
      %v1679 = vunpack.c.l.b16 %v529
      %v1680 = vunpack.c.h.b16 %v529
      %v1681 = vunpack.c.l.b16 %v530
      %v1682 = vunpack.c.h.b16 %v530
      %v1683 = vunpack.c.l.b16 %v531
      %v1684 = vunpack.c.h.b16 %v531
      %v1685 = vunpack.c.l.b16 %v532
      %v1686 = vunpack.c.h.b16 %v532
      %v1687 = vunpack.c.l.b16 %v533
      %v1688 = vunpack.c.h.b16 %v533
      %v1689 = vunpack.c.l.b16 %v534
      %v1690 = vunpack.c.h.b16 %v534
      %v1691 = vunpack.c.l.b16 %v535
      %v1692 = vunpack.c.h.b16 %v535
      %v1693 = vunpack.c.l.b16 %v536
      %v1694 = vunpack.c.h.b16 %v536
      %v1695 = vunpack.c.l.b16 %v537
      %v1696 = vunpack.c.h.b16 %v537
      %v1697 = vunpack.c.l.b16 %v538
      %v1698 = vunpack.c.h.b16 %v538
      %v1699 = vunpack.c.l.b16 %v539
      %v1700 = vunpack.c.h.b16 %v539
      %v1701 = vunpack.c.l.b16 %v540
      %v1702 = vunpack.c.h.b16 %v540
      %v1703 = vunpack.c.l.b16 %v541
      %v1704 = vunpack.c.h.b16 %v541
      %v1705 = vunpack.c.l.b16 %v542
      %v1706 = vunpack.c.h.b16 %v542
      %v1707 = vunpack.c.l.b16 %v543
      %v1708 = vunpack.c.h.b16 %v543
      %v1709 = vunpack.c.l.b16 %v544
      %v1710 = vunpack.c.h.b16 %v544
      %v1711 = vunpack.c.l.b16 %v545
      %v1712 = vunpack.c.h.b16 %v545
      %v1713 = vunpack.c.l.b16 %v546
      %v1714 = vunpack.c.h.b16 %v546
      %v1715 = vunpack.c.l.b16 %v547
      %v1716 = vunpack.c.h.b16 %v547
      %v1717 = vunpack.c.l.b16 %v548
      %v1718 = vunpack.c.h.b16 %v548
      %v1719 = vunpack.c.l.b16 %v549
      %v1720 = vunpack.c.h.b16 %v549
      %v1721 = vunpack.c.l.b16 %v550
      %v1722 = vunpack.c.h.b16 %v550
      %v1723 = vunpack.c.l.b16 %v551
      %v1724 = vunpack.c.h.b16 %v551
      %v1725 = vunpack.c.l.b16 %v552
      %v1726 = vunpack.c.h.b16 %v552
      %v1727 = vunpack.c.l.b16 %v553
      %v1728 = vunpack.c.h.b16 %v553
      %v1729 = vunpack.c.l.b16 %v554
      %v1730 = vunpack.c.h.b16 %v554
      %v1731 = vunpack.c.l.b16 %v555
      %v1732 = vunpack.c.h.b16 %v555
      %v1733 = vunpack.c.l.b16 %v556
      %v1734 = vunpack.c.h.b16 %v556
      %v1735 = vunpack.c.l.b16 %v557
      %v1736 = vunpack.c.h.b16 %v557
      %v1737 = vunpack.c.l.b16 %v558
      %v1738 = vunpack.c.h.b16 %v558
      %v1739 = vunpack.c.l.b16 %v559
      %v1740 = vunpack.c.h.b16 %v559
      %v1741 = vunpack.c.l.b16 %v560
      %v1742 = vunpack.c.h.b16 %v560
      %v1743 = vunpack.c.l.b16 %v561
      %v1744 = vunpack.c.h.b16 %v561
      %v1745 = vunpack.c.l.b16 %v562
      %v1746 = vunpack.c.h.b16 %v562
      %v1747 = vunpack.c.l.b16 %v563
      %v1748 = vunpack.c.h.b16 %v563
      %v1749 = vunpack.c.l.b16 %v564
      %v1750 = vunpack.c.h.b16 %v564
      %v1751 = vunpack.c.l.b16 %v565
      %v1752 = vunpack.c.h.b16 %v565
      %v1753 = vunpack.c.l.b16 %v566
      %v1754 = vunpack.c.h.b16 %v566
      %v1755 = vunpack.c.l.b16 %v567
      %v1756 = vunpack.c.h.b16 %v567
      %v1757 = vunpack.c.l.b16 %v568
      %v1758 = vunpack.c.h.b16 %v568
      %v1759 = vunpack.c.l.b16 %v569
      %v1760 = vunpack.c.h.b16 %v569
      %v1761 = vunpack.c.l.b16 %v570
      %v1762 = vunpack.c.h.b16 %v570
      %v1763 = vunpack.c.l.b16 %v571
      %v1764 = vunpack.c.h.b16 %v571
      %v1765 = vunpack.c.l.b16 %v572
      %v1766 = vunpack.c.h.b16 %v572
      %v1767 = vunpack.c.l.b16 %v573
      %v1768 = vunpack.c.h.b16 %v573
      %v1769 = vunpack.c.l.b16 %v574
      %v1770 = vunpack.c.h.b16 %v574
      %v1771 = vunpack.c.l.b16 %v575
      %v1772 = vunpack.c.h.b16 %v575
      %v1773 = vunpack.c.l.b16 %v576
      %v1774 = vunpack.c.h.b16 %v576
      %v1775 = vunpack.c.l.b16 %v577
      %v1776 = vunpack.c.h.b16 %v577
      %v1777 = vunpack.c.l.b16 %v578
      %v1778 = vunpack.c.h.b16 %v578
      %v1779 = vunpack.c.l.b16 %v579
      %v1780 = vunpack.c.h.b16 %v579
      %v1781 = vunpack.c.l.b16 %v580
      %v1782 = vunpack.c.h.b16 %v580
      %v1783 = vunpack.c.l.b16 %v581
      %v1784 = vunpack.c.h.b16 %v581
      %v1785 = vunpack.c.l.b16 %v582
      %v1786 = vunpack.c.h.b16 %v582
      %v1787 = vunpack.c.l.b16 %v583
      %v1788 = vunpack.c.h.b16 %v583
      %v1789 = vunpack.c.l.b16 %v584
      %v1790 = vunpack.c.h.b16 %v584
      %v1791 = vunpack.c.l.b16 %v585
      %v1792 = vunpack.c.h.b16 %v585
      %v1793 = vunpack.c.l.b16 %v586
      %v1794 = vunpack.c.h.b16 %v586
      %v1795 = vunpack.c.l.b16 %v587
      %v1796 = vunpack.c.h.b16 %v587
      %v1797 = vunpack.c.l.b16 %v588
      %v1798 = vunpack.c.h.b16 %v588
      %v1799 = vunpack.c.l.b16 %v589
      %v1800 = vunpack.c.h.b16 %v589
      %v1801 = vunpack.c.l.b16 %v590
      %v1802 = vunpack.c.h.b16 %v590
      %v1803 = vunpack.c.l.b16 %v591
      %v1804 = vunpack.c.h.b16 %v591
      %v1805 = vunpack.c.l.b16 %v592
      %v1806 = vunpack.c.h.b16 %v592
      %v1807 = vunpack.c.l.b16 %v593
      %v1808 = vunpack.c.h.b16 %v593
      %v1809 = vunpack.c.l.b16 %v594
      %v1810 = vunpack.c.h.b16 %v594
      %v1811 = vunpack.c.l.b16 %v595
      %v1812 = vunpack.c.h.b16 %v595
      %v1813 = vunpack.c.l.b16 %v596
      %v1814 = vunpack.c.h.b16 %v596
      %v1815 = vunpack.c.l.b16 %v597
      %v1816 = vunpack.c.h.b16 %v597
      %v1817 = vunpack.c.l.b16 %v598
      %v1818 = vunpack.c.h.b16 %v598
      %v1819 = vunpack.c.l.b16 %v599
      %v1820 = vunpack.c.h.b16 %v599
      %v1821 = vunpack.c.l.b16 %v600
      %v1822 = vunpack.c.h.b16 %v600
      %v1823 = vunpack.c.l.b16 %v601
      %v1824 = vunpack.c.h.b16 %v601
      %v1825 = vunpack.c.l.b16 %v602
      %v1826 = vunpack.c.h.b16 %v602
      %v1827 = vunpack.c.l.b16 %v603
      %v1828 = vunpack.c.h.b16 %v603
      %v1829 = vunpack.c.l.b16 %v604
      %v1830 = vunpack.c.h.b16 %v604
      %v1831 = vunpack.c.l.b16 %v605
      %v1832 = vunpack.c.h.b16 %v605
      %v1833 = vunpack.c.l.b16 %v606
      %v1834 = vunpack.c.h.b16 %v606
      %v1835 = vunpack.c.l.b16 %v607
      %v1836 = vunpack.c.h.b16 %v607
      %v1837 = vunpack.c.l.b16 %v608
      %v1838 = vunpack.c.h.b16 %v608
      %v1839 = vunpack.c.l.b16 %v609
      %v1840 = vunpack.c.h.b16 %v609
      %v1841 = vunpack.c.l.b16 %v610
      %v1842 = vunpack.c.h.b16 %v610
      %v1843 = vunpack.c.l.b16 %v611
      %v1844 = vunpack.c.h.b16 %v611
      %v1845 = vunpack.c.l.b16 %v612
      %v1846 = vunpack.c.h.b16 %v612
      %v1847 = vunpack.c.l.b16 %v613
      %v1848 = vunpack.c.h.b16 %v613
      %v1849 = vunpack.c.l.b16 %v614
      %v1850 = vunpack.c.h.b16 %v614
      %v1851 = vunpack.c.l.b16 %v615
      %v1852 = vunpack.c.h.b16 %v615
      %v1853 = vunpack.c.l.b16 %v616
      %v1854 = vunpack.c.h.b16 %v616
      %v1855 = vunpack.c.l.b16 %v617
      %v1856 = vunpack.c.h.b16 %v617
      %v1857 = vunpack.c.l.b16 %v618
      %v1858 = vunpack.c.h.b16 %v618
      %v1859 = vunpack.c.l.b16 %v619
      %v1860 = vunpack.c.h.b16 %v619
      %v1861 = vunpack.c.l.b16 %v620
      %v1862 = vunpack.c.h.b16 %v620
      %v1863 = vunpack.c.l.b16 %v621
      %v1864 = vunpack.c.h.b16 %v621
      %v1865 = vunpack.c.l.b16 %v622
      %v1866 = vunpack.c.h.b16 %v622
      %v1867 = vunpack.c.l.b16 %v623
      %v1868 = vunpack.c.h.b16 %v623
      %v1869 = vunpack.c.l.b16 %v624
      %v1870 = vunpack.c.h.b16 %v624
      %v1871 = vunpack.c.l.b16 %v625
      %v1872 = vunpack.c.h.b16 %v625
      %v1873 = vunpack.c.l.b16 %v626
      %v1874 = vunpack.c.h.b16 %v626
      %v1875 = vunpack.c.l.b16 %v627
      %v1876 = vunpack.c.h.b16 %v627
      %v1877 = vunpack.c.l.b16 %v628
      %v1878 = vunpack.c.h.b16 %v628
      %v1879 = vunpack.c.l.b16 %v629
      %v1880 = vunpack.c.h.b16 %v629
      %v1881 = vunpack.c.l.b16 %v630
      %v1882 = vunpack.c.h.b16 %v630
      %v1883 = vunpack.c.l.b16 %v631
      %v1884 = vunpack.c.h.b16 %v631
      %v1885 = vunpack.c.l.b16 %v632
      %v1886 = vunpack.c.h.b16 %v632
      %v1887 = vunpack.c.l.b16 %v633
      %v1888 = vunpack.c.h.b16 %v633
      %v1889 = vunpack.c.l.b16 %v634
      %v1890 = vunpack.c.h.b16 %v634
      %v1891 = vunpack.c.l.b16 %v635
      %v1892 = vunpack.c.h.b16 %v635
      %v1893 = vunpack.c.l.b16 %v636
      %v1894 = vunpack.c.h.b16 %v636
      %v1895 = vpack.c.b16 %v1451, %v1447
      %v1896 = vpack.c.b16 %v1452, %v1448
      %v1897 = vpack.c.b16 %v1453, %v1449
      %v1898 = vpack.c.b16 %v1454, %v1450
      %v1899 = vpack.c.b16 %v1459, %v1455
      %v1900 = vpack.c.b16 %v1460, %v1456
      %v1901 = vpack.c.b16 %v1461, %v1457
      %v1902 = vpack.c.b16 %v1462, %v1458
      %v1903 = vpack.c.b16 %v1467, %v1463
      %v1904 = vpack.c.b16 %v1468, %v1464
      %v1905 = vpack.c.b16 %v1469, %v1465
      %v1906 = vpack.c.b16 %v1470, %v1466
      %v1907 = vpack.c.b16 %v1475, %v1471
      %v1908 = vpack.c.b16 %v1476, %v1472
      %v1909 = vpack.c.b16 %v1477, %v1473
      %v1910 = vpack.c.b16 %v1478, %v1474
      %v1911 = vpack.c.b16 %v1483, %v1479
      %v1912 = vpack.c.b16 %v1484, %v1480
      %v1913 = vpack.c.b16 %v1485, %v1481
      %v1914 = vpack.c.b16 %v1486, %v1482
      %v1915 = vpack.c.b16 %v1491, %v1487
      %v1916 = vpack.c.b16 %v1492, %v1488
      %v1917 = vpack.c.b16 %v1493, %v1489
      %v1918 = vpack.c.b16 %v1494, %v1490
      %v1919 = vpack.c.b16 %v1499, %v1495
      %v1920 = vpack.c.b16 %v1500, %v1496
      %v1921 = vpack.c.b16 %v1501, %v1497
      %v1922 = vpack.c.b16 %v1502, %v1498
      %v1923 = vpack.c.b16 %v1507, %v1503
      %v1924 = vpack.c.b16 %v1508, %v1504
      %v1925 = vpack.c.b16 %v1509, %v1505
      %v1926 = vpack.c.b16 %v1510, %v1506
      %v1927 = vpack.c.b16 %v1515, %v1511
      %v1928 = vpack.c.b16 %v1516, %v1512
      %v1929 = vpack.c.b16 %v1517, %v1513
      %v1930 = vpack.c.b16 %v1518, %v1514
      %v1931 = vpack.c.b16 %v1523, %v1519
      %v1932 = vpack.c.b16 %v1524, %v1520
      %v1933 = vpack.c.b16 %v1525, %v1521
      %v1934 = vpack.c.b16 %v1526, %v1522
      %v1935 = vpack.c.b16 %v1531, %v1527
      %v1936 = vpack.c.b16 %v1532, %v1528
      %v1937 = vpack.c.b16 %v1533, %v1529
      %v1938 = vpack.c.b16 %v1534, %v1530
      %v1939 = vpack.c.b16 %v1539, %v1535
      %v1940 = vpack.c.b16 %v1540, %v1536
      %v1941 = vpack.c.b16 %v1541, %v1537
      %v1942 = vpack.c.b16 %v1542, %v1538
      %v1943 = vpack.c.b16 %v1547, %v1543
      %v1944 = vpack.c.b16 %v1548, %v1544
      %v1945 = vpack.c.b16 %v1549, %v1545
      %v1946 = vpack.c.b16 %v1550, %v1546
      %v1947 = vpack.c.b16 %v1555, %v1551
      %v1948 = vpack.c.b16 %v1556, %v1552
      %v1949 = vpack.c.b16 %v1557, %v1553
      %v1950 = vpack.c.b16 %v1558, %v1554
      %v1951 = vpack.c.b16 %v1563, %v1559
      %v1952 = vpack.c.b16 %v1564, %v1560
      %v1953 = vpack.c.b16 %v1565, %v1561
      %v1954 = vpack.c.b16 %v1566, %v1562
      %v1955 = vpack.c.b16 %v1571, %v1567
      %v1956 = vpack.c.b16 %v1572, %v1568
      %v1957 = vpack.c.b16 %v1573, %v1569
      %v1958 = vpack.c.b16 %v1574, %v1570
      %v1959 = vpack.c.b16 %v1579, %v1575
      %v1960 = vpack.c.b16 %v1580, %v1576
      %v1961 = vpack.c.b16 %v1581, %v1577
      %v1962 = vpack.c.b16 %v1582, %v1578
      %v1963 = vpack.c.b16 %v1587, %v1583
      %v1964 = vpack.c.b16 %v1588, %v1584
      %v1965 = vpack.c.b16 %v1589, %v1585
      %v1966 = vpack.c.b16 %v1590, %v1586
      %v1967 = vpack.c.b16 %v1595, %v1591
      %v1968 = vpack.c.b16 %v1596, %v1592
      %v1969 = vpack.c.b16 %v1597, %v1593
      %v1970 = vpack.c.b16 %v1598, %v1594
      %v1971 = vpack.c.b16 %v1603, %v1599
      %v1972 = vpack.c.b16 %v1604, %v1600
      %v1973 = vpack.c.b16 %v1605, %v1601
      %v1974 = vpack.c.b16 %v1606, %v1602
      %v1975 = vpack.c.b16 %v1611, %v1607
      %v1976 = vpack.c.b16 %v1612, %v1608
      %v1977 = vpack.c.b16 %v1613, %v1609
      %v1978 = vpack.c.b16 %v1614, %v1610
      %v1979 = vpack.c.b16 %v1619, %v1615
      %v1980 = vpack.c.b16 %v1620, %v1616
      %v1981 = vpack.c.b16 %v1621, %v1617
      %v1982 = vpack.c.b16 %v1622, %v1618
      %v1983 = vpack.c.b16 %v1627, %v1623
      %v1984 = vpack.c.b16 %v1628, %v1624
      %v1985 = vpack.c.b16 %v1629, %v1625
      %v1986 = vpack.c.b16 %v1630, %v1626
      %v1987 = vpack.c.b16 %v1635, %v1631
      %v1988 = vpack.c.b16 %v1636, %v1632
      %v1989 = vpack.c.b16 %v1637, %v1633
      %v1990 = vpack.c.b16 %v1638, %v1634
      %v1991 = vpack.c.b16 %v1643, %v1639
      %v1992 = vpack.c.b16 %v1644, %v1640
      %v1993 = vpack.c.b16 %v1645, %v1641
      %v1994 = vpack.c.b16 %v1646, %v1642
      %v1995 = vpack.c.b16 %v1651, %v1647
      %v1996 = vpack.c.b16 %v1652, %v1648
      %v1997 = vpack.c.b16 %v1653, %v1649
      %v1998 = vpack.c.b16 %v1654, %v1650
      %v1999 = vpack.c.b16 %v1659, %v1655
      %v2000 = vpack.c.b16 %v1660, %v1656
      %v2001 = vpack.c.b16 %v1661, %v1657
      %v2002 = vpack.c.b16 %v1662, %v1658
      %v2003 = vpack.c.b16 %v1667, %v1663
      %v2004 = vpack.c.b16 %v1668, %v1664
      %v2005 = vpack.c.b16 %v1669, %v1665
      %v2006 = vpack.c.b16 %v1670, %v1666
      %v2007 = vpack.c.b16 %v1675, %v1671
      %v2008 = vpack.c.b16 %v1676, %v1672
      %v2009 = vpack.c.b16 %v1677, %v1673
      %v2010 = vpack.c.b16 %v1678, %v1674
      %v2011 = vpack.c.b16 %v1683, %v1679
      %v2012 = vpack.c.b16 %v1684, %v1680
      %v2013 = vpack.c.b16 %v1685, %v1681
      %v2014 = vpack.c.b16 %v1686, %v1682
      %v2015 = vpack.c.b16 %v1691, %v1687
      %v2016 = vpack.c.b16 %v1692, %v1688
      %v2017 = vpack.c.b16 %v1693, %v1689
      %v2018 = vpack.c.b16 %v1694, %v1690
      %v2019 = vpack.c.b16 %v1699, %v1695
      %v2020 = vpack.c.b16 %v1700, %v1696
      %v2021 = vpack.c.b16 %v1701, %v1697
      %v2022 = vpack.c.b16 %v1702, %v1698
      %v2023 = vpack.c.b16 %v1707, %v1703
      %v2024 = vpack.c.b16 %v1708, %v1704
      %v2025 = vpack.c.b16 %v1709, %v1705
      %v2026 = vpack.c.b16 %v1710, %v1706
      %v2027 = vpack.c.b16 %v1715, %v1711
      %v2028 = vpack.c.b16 %v1716, %v1712
      %v2029 = vpack.c.b16 %v1717, %v1713
      %v2030 = vpack.c.b16 %v1718, %v1714
      %v2031 = vpack.c.b16 %v1723, %v1719
      %v2032 = vpack.c.b16 %v1724, %v1720
      %v2033 = vpack.c.b16 %v1725, %v1721
      %v2034 = vpack.c.b16 %v1726, %v1722
      %v2035 = vpack.c.b16 %v1731, %v1727
      %v2036 = vpack.c.b16 %v1732, %v1728
      %v2037 = vpack.c.b16 %v1733, %v1729
      %v2038 = vpack.c.b16 %v1734, %v1730
      %v2039 = vpack.c.b16 %v1739, %v1735
      %v2040 = vpack.c.b16 %v1740, %v1736
      %v2041 = vpack.c.b16 %v1741, %v1737
      %v2042 = vpack.c.b16 %v1742, %v1738
      %v2043 = vpack.c.b16 %v1747, %v1743
      %v2044 = vpack.c.b16 %v1748, %v1744
      %v2045 = vpack.c.b16 %v1749, %v1745
      %v2046 = vpack.c.b16 %v1750, %v1746
      %v2047 = vpack.c.b16 %v1755, %v1751
      %v2048 = vpack.c.b16 %v1756, %v1752
      %v2049 = vpack.c.b16 %v1757, %v1753
      %v2050 = vpack.c.b16 %v1758, %v1754
      %v2051 = vpack.c.b16 %v1763, %v1759
      %v2052 = vpack.c.b16 %v1764, %v1760
      %v2053 = vpack.c.b16 %v1765, %v1761
      %v2054 = vpack.c.b16 %v1766, %v1762
      %v2055 = vpack.c.b16 %v1771, %v1767
      %v2056 = vpack.c.b16 %v1772, %v1768
      %v2057 = vpack.c.b16 %v1773, %v1769
      %v2058 = vpack.c.b16 %v1774, %v1770
      %v2059 = vpack.c.b16 %v1779, %v1775
      %v2060 = vpack.c.b16 %v1780, %v1776
      %v2061 = vpack.c.b16 %v1781, %v1777
      %v2062 = vpack.c.b16 %v1782, %v1778
      %v2063 = vpack.c.b16 %v1787, %v1783
      %v2064 = vpack.c.b16 %v1788, %v1784
      %v2065 = vpack.c.b16 %v1789, %v1785
      %v2066 = vpack.c.b16 %v1790, %v1786
      %v2067 = vpack.c.b16 %v1795, %v1791
      %v2068 = vpack.c.b16 %v1796, %v1792
      %v2069 = vpack.c.b16 %v1797, %v1793
      %v2070 = vpack.c.b16 %v1798, %v1794
      %v2071 = vpack.c.b16 %v1803, %v1799
      %v2072 = vpack.c.b16 %v1804, %v1800
      %v2073 = vpack.c.b16 %v1805, %v1801
      %v2074 = vpack.c.b16 %v1806, %v1802
      %v2075 = vpack.c.b16 %v1811, %v1807
      %v2076 = vpack.c.b16 %v1812, %v1808
      %v2077 = vpack.c.b16 %v1813, %v1809
      %v2078 = vpack.c.b16 %v1814, %v1810
      %v2079 = vpack.c.b16 %v1819, %v1815
      %v2080 = vpack.c.b16 %v1820, %v1816
      %v2081 = vpack.c.b16 %v1821, %v1817
      %v2082 = vpack.c.b16 %v1822, %v1818
      %v2083 = vpack.c.b16 %v1827, %v1823
      %v2084 = vpack.c.b16 %v1828, %v1824
      %v2085 = vpack.c.b16 %v1829, %v1825
      %v2086 = vpack.c.b16 %v1830, %v1826
      %v2087 = vpack.c.b16 %v1835, %v1831
      %v2088 = vpack.c.b16 %v1836, %v1832
      %v2089 = vpack.c.b16 %v1837, %v1833
      %v2090 = vpack.c.b16 %v1838, %v1834
      %v2091 = vpack.c.b16 %v1843, %v1839
      %v2092 = vpack.c.b16 %v1844, %v1840
      %v2093 = vpack.c.b16 %v1845, %v1841
      %v2094 = vpack.c.b16 %v1846, %v1842
      %v2095 = vpack.c.b16 %v1851, %v1847
      %v2096 = vpack.c.b16 %v1852, %v1848
      %v2097 = vpack.c.b16 %v1853, %v1849
      %v2098 = vpack.c.b16 %v1854, %v1850
      %v2099 = vpack.c.b16 %v1859, %v1855
      %v2100 = vpack.c.b16 %v1860, %v1856
      %v2101 = vpack.c.b16 %v1861, %v1857
      %v2102 = vpack.c.b16 %v1862, %v1858
      %v2103 = vpack.c.b16 %v1867, %v1863
      %v2104 = vpack.c.b16 %v1868, %v1864
      %v2105 = vpack.c.b16 %v1869, %v1865
      %v2106 = vpack.c.b16 %v1870, %v1866
      %v2107 = vpack.c.b16 %v1875, %v1871
      %v2108 = vpack.c.b16 %v1876, %v1872
      %v2109 = vpack.c.b16 %v1877, %v1873
      %v2110 = vpack.c.b16 %v1878, %v1874
      %v2111 = vpack.c.b16 %v1883, %v1879
      %v2112 = vpack.c.b16 %v1884, %v1880
      %v2113 = vpack.c.b16 %v1885, %v1881
      %v2114 = vpack.c.b16 %v1886, %v1882
      %v2115 = vpack.c.b16 %v1891, %v1887
      %v2116 = vpack.c.b16 %v1892, %v1888
      %v2117 = vpack.c.b16 %v1893, %v1889
      %v2118 = vpack.c.b16 %v1894, %v1890
      %2343 = vmatpush.bf16.msra.mxu0 %v1923
      %2344 = vmatpush.bf16.msra.mxu0 %v1919
      %2345 = vmatpush.bf16.msra.mxu0 %v1915
      %2346 = vmatpush.bf16.msra.mxu0 %v1911
      %2347 = vmatpush.bf16.msra.mxu0 %v1907
      %2348 = vmatpush.bf16.msra.mxu0 %v1903
      %2349 = vmatpush.bf16.msra.mxu0 %v1899
      %2350 = vmatpush.bf16.msra.mxu0 %v1895
      %2351 = vmatmul.bf16.gmra.mxu0 %v999
      %v2352 = vpop.f32.mrf.mxu0
      %v2353 = vadd.f32 %v639, %v2352
      %v2354 = vpop.f32.mrf.mxu0
      %v2355 = vadd.f32 %v639, %v2354
      %2356 = vmatmul.bf16.gmra.mxu0 %v1006
      %v2357 = vpop.f32.mrf.mxu0
      %v2358 = vadd.f32 %v639, %v2357
      %v2359 = vpop.f32.mrf.mxu0
      %v2360 = vadd.f32 %v639, %v2359
      %2361 = vmatmul.bf16.gmra.mxu0 %v1013
      %v2362 = vpop.f32.mrf.mxu0
      %v2363 = vadd.f32 %v639, %v2362
      %v2364 = vpop.f32.mrf.mxu0
      %v2365 = vadd.f32 %v639, %v2364
      %2366 = vmatmul.bf16.gmra.mxu0 %v1020
      %v2367 = vpop.f32.mrf.mxu0
      %v2368 = vadd.f32 %v639, %v2367
      %v2369 = vpop.f32.mrf.mxu0
      %v2370 = vadd.f32 %v639, %v2369
      %2371 = vmatmul.bf16.gmra.mxu0 %v1027
      %v2372 = vpop.f32.mrf.mxu0
      %v2373 = vadd.f32 %v639, %v2372
      %v2374 = vpop.f32.mrf.mxu0
      %v2375 = vadd.f32 %v639, %v2374
      %2376 = vmatmul.bf16.gmra.mxu0 %v1034
      %v2377 = vpop.f32.mrf.mxu0
      %v2378 = vadd.f32 %v639, %v2377
      %v2379 = vpop.f32.mrf.mxu0
      %v2380 = vadd.f32 %v639, %v2379
      %2381 = vmatmul.bf16.gmra.mxu0 %v1041
      %v2382 = vpop.f32.mrf.mxu0
      %v2383 = vadd.f32 %v639, %v2382
      %v2384 = vpop.f32.mrf.mxu0
      %v2385 = vadd.f32 %v639, %v2384
      %2386 = vmatmul.bf16.gmra.mxu0 %v1048
      %v2387 = vpop.f32.mrf.mxu0
      %v2388 = vadd.f32 %v639, %v2387
      %v2389 = vpop.f32.mrf.mxu0
      %v2390 = vadd.f32 %v639, %v2389
      %2391 = vmatmul.bf16.gmra.mxu0 %v1055
      %v2392 = vpop.f32.mrf.mxu0
      %v2393 = vadd.f32 %v639, %v2392
      %v2394 = vpop.f32.mrf.mxu0
      %v2395 = vadd.f32 %v639, %v2394
      %2396 = vmatmul.bf16.gmra.mxu0 %v1062
      %v2397 = vpop.f32.mrf.mxu0
      %v2398 = vadd.f32 %v639, %v2397
      %v2399 = vpop.f32.mrf.mxu0
      %v2400 = vadd.f32 %v639, %v2399
      %2401 = vmatmul.bf16.gmra.mxu0 %v1069
      %v2402 = vpop.f32.mrf.mxu0
      %v2403 = vadd.f32 %v639, %v2402
      %v2404 = vpop.f32.mrf.mxu0
      %v2405 = vadd.f32 %v639, %v2404
      %2406 = vmatmul.bf16.gmra.mxu0 %v1076
      %v2407 = vpop.f32.mrf.mxu0
      %v2408 = vadd.f32 %v639, %v2407
      %v2409 = vpop.f32.mrf.mxu0
      %v2410 = vadd.f32 %v639, %v2409
      %2411 = vmatmul.bf16.gmra.mxu0 %v1083
      %v2412 = vpop.f32.mrf.mxu0
      %v2413 = vadd.f32 %v639, %v2412
      %v2414 = vpop.f32.mrf.mxu0
      %v2415 = vadd.f32 %v639, %v2414
      %2416 = vmatmul.bf16.gmra.mxu0 %v1090
      %v2417 = vpop.f32.mrf.mxu0
      %v2418 = vadd.f32 %v639, %v2417
      %v2419 = vpop.f32.mrf.mxu0
      %v2420 = vadd.f32 %v639, %v2419
      %2421 = vmatmul.bf16.gmra.mxu0 %v1097
      %v2422 = vpop.f32.mrf.mxu0
      %v2423 = vadd.f32 %v639, %v2422
      %v2424 = vpop.f32.mrf.mxu0
      %v2425 = vadd.f32 %v639, %v2424
      %2426 = vmatmul.bf16.gmra.mxu0 %v1104
      %v2427 = vpop.f32.mrf.mxu0
      %v2428 = vadd.f32 %v639, %v2427
      %v2429 = vpop.f32.mrf.mxu0
      %v2430 = vadd.f32 %v639, %v2429
      %2431 = vdwg.mxu0
      %2432 = vmatpush.bf16.msra.mxu0 %v1955
      %2433 = vmatpush.bf16.msra.mxu0 %v1951
      %2434 = vmatpush.bf16.msra.mxu0 %v1947
      %2435 = vmatpush.bf16.msra.mxu0 %v1943
      %2436 = vmatpush.bf16.msra.mxu0 %v1939
      %2437 = vmatpush.bf16.msra.mxu0 %v1935
      %2438 = vmatpush.bf16.msra.mxu0 %v1931
      %2439 = vmatpush.bf16.msra.mxu0 %v1927
      %2440 = vmatmul.bf16.gmra.mxu0 %v1000
      %v2441 = vpop.f32.mrf.mxu0
      %v2442 = vadd.f32 %v2353, %v2441
      %v2443 = vpop.f32.mrf.mxu0
      %v2444 = vadd.f32 %v2355, %v2443
      %2445 = vmatmul.bf16.gmra.mxu0 %v1007
      %v2446 = vpop.f32.mrf.mxu0
      %v2447 = vadd.f32 %v2358, %v2446
      %v2448 = vpop.f32.mrf.mxu0
      %v2449 = vadd.f32 %v2360, %v2448
      %2450 = vmatmul.bf16.gmra.mxu0 %v1014
      %v2451 = vpop.f32.mrf.mxu0
      %v2452 = vadd.f32 %v2363, %v2451
      %v2453 = vpop.f32.mrf.mxu0
      %v2454 = vadd.f32 %v2365, %v2453
      %2455 = vmatmul.bf16.gmra.mxu0 %v1021
      %v2456 = vpop.f32.mrf.mxu0
      %v2457 = vadd.f32 %v2368, %v2456
      %v2458 = vpop.f32.mrf.mxu0
      %v2459 = vadd.f32 %v2370, %v2458
      %2460 = vmatmul.bf16.gmra.mxu0 %v1028
      %v2461 = vpop.f32.mrf.mxu0
      %v2462 = vadd.f32 %v2373, %v2461
      %v2463 = vpop.f32.mrf.mxu0
      %v2464 = vadd.f32 %v2375, %v2463
      %2465 = vmatmul.bf16.gmra.mxu0 %v1035
      %v2466 = vpop.f32.mrf.mxu0
      %v2467 = vadd.f32 %v2378, %v2466
      %v2468 = vpop.f32.mrf.mxu0
      %v2469 = vadd.f32 %v2380, %v2468
      %2470 = vmatmul.bf16.gmra.mxu0 %v1042
      %v2471 = vpop.f32.mrf.mxu0
      %v2472 = vadd.f32 %v2383, %v2471
      %v2473 = vpop.f32.mrf.mxu0
      %v2474 = vadd.f32 %v2385, %v2473
      %2475 = vmatmul.bf16.gmra.mxu0 %v1049
      %v2476 = vpop.f32.mrf.mxu0
      %v2477 = vadd.f32 %v2388, %v2476
      %v2478 = vpop.f32.mrf.mxu0
      %v2479 = vadd.f32 %v2390, %v2478
      %2480 = vmatmul.bf16.gmra.mxu0 %v1056
      %v2481 = vpop.f32.mrf.mxu0
      %v2482 = vadd.f32 %v2393, %v2481
      %v2483 = vpop.f32.mrf.mxu0
      %v2484 = vadd.f32 %v2395, %v2483
      %2485 = vmatmul.bf16.gmra.mxu0 %v1063
      %v2486 = vpop.f32.mrf.mxu0
      %v2487 = vadd.f32 %v2398, %v2486
      %v2488 = vpop.f32.mrf.mxu0
      %v2489 = vadd.f32 %v2400, %v2488
      %2490 = vmatmul.bf16.gmra.mxu0 %v1070
      %v2491 = vpop.f32.mrf.mxu0
      %v2492 = vadd.f32 %v2403, %v2491
      %v2493 = vpop.f32.mrf.mxu0
      %v2494 = vadd.f32 %v2405, %v2493
      %2495 = vmatmul.bf16.gmra.mxu0 %v1077
      %v2496 = vpop.f32.mrf.mxu0
      %v2497 = vadd.f32 %v2408, %v2496
      %v2498 = vpop.f32.mrf.mxu0
      %v2499 = vadd.f32 %v2410, %v2498
      %2500 = vmatmul.bf16.gmra.mxu0 %v1084
      %v2501 = vpop.f32.mrf.mxu0
      %v2502 = vadd.f32 %v2413, %v2501
      %v2503 = vpop.f32.mrf.mxu0
      %v2504 = vadd.f32 %v2415, %v2503
      %2505 = vmatmul.bf16.gmra.mxu0 %v1091
      %v2506 = vpop.f32.mrf.mxu0
      %v2507 = vadd.f32 %v2418, %v2506
      %v2508 = vpop.f32.mrf.mxu0
      %v2509 = vadd.f32 %v2420, %v2508
      %2510 = vmatmul.bf16.gmra.mxu0 %v1098
      %v2511 = vpop.f32.mrf.mxu0
      %v2512 = vadd.f32 %v2423, %v2511
      %v2513 = vpop.f32.mrf.mxu0
      %v2514 = vadd.f32 %v2425, %v2513
      %2515 = vmatmul.bf16.gmra.mxu0 %v1105
      %v2516 = vpop.f32.mrf.mxu0
      %v2517 = vadd.f32 %v2428, %v2516
      %v2518 = vpop.f32.mrf.mxu0
      %v2519 = vadd.f32 %v2430, %v2518
      %2520 = vdwg.mxu0
      %2521 = vmatpush.bf16.msra.mxu0 %v1987
      %2522 = vmatpush.bf16.msra.mxu0 %v1983
      %2523 = vmatpush.bf16.msra.mxu0 %v1979
      %2524 = vmatpush.bf16.msra.mxu0 %v1975
      %2525 = vmatpush.bf16.msra.mxu0 %v1971
      %2526 = vmatpush.bf16.msra.mxu0 %v1967
      %2527 = vmatpush.bf16.msra.mxu0 %v1963
      %2528 = vmatpush.bf16.msra.mxu0 %v1959
      %2529 = vmatmul.bf16.gmra.mxu0 %v1001
      %v2530 = vpop.f32.mrf.mxu0
      %v2531 = vadd.f32 %v2442, %v2530
      %v2532 = vpop.f32.mrf.mxu0
      %v2533 = vadd.f32 %v2444, %v2532
      %2534 = vmatmul.bf16.gmra.mxu0 %v1008
      %v2535 = vpop.f32.mrf.mxu0
      %v2536 = vadd.f32 %v2447, %v2535
      %v2537 = vpop.f32.mrf.mxu0
      %v2538 = vadd.f32 %v2449, %v2537
      %2539 = vmatmul.bf16.gmra.mxu0 %v1015
      %v2540 = vpop.f32.mrf.mxu0
      %v2541 = vadd.f32 %v2452, %v2540
      %v2542 = vpop.f32.mrf.mxu0
      %v2543 = vadd.f32 %v2454, %v2542
      %2544 = vmatmul.bf16.gmra.mxu0 %v1022
      %v2545 = vpop.f32.mrf.mxu0
      %v2546 = vadd.f32 %v2457, %v2545
      %v2547 = vpop.f32.mrf.mxu0
      %v2548 = vadd.f32 %v2459, %v2547
      %2549 = vmatmul.bf16.gmra.mxu0 %v1029
      %v2550 = vpop.f32.mrf.mxu0
      %v2551 = vadd.f32 %v2462, %v2550
      %v2552 = vpop.f32.mrf.mxu0
      %v2553 = vadd.f32 %v2464, %v2552
      %2554 = vmatmul.bf16.gmra.mxu0 %v1036
      %v2555 = vpop.f32.mrf.mxu0
      %v2556 = vadd.f32 %v2467, %v2555
      %v2557 = vpop.f32.mrf.mxu0
      %v2558 = vadd.f32 %v2469, %v2557
      %2559 = vmatmul.bf16.gmra.mxu0 %v1043
      %v2560 = vpop.f32.mrf.mxu0
      %v2561 = vadd.f32 %v2472, %v2560
      %v2562 = vpop.f32.mrf.mxu0
      %v2563 = vadd.f32 %v2474, %v2562
      %2564 = vmatmul.bf16.gmra.mxu0 %v1050
      %v2565 = vpop.f32.mrf.mxu0
      %v2566 = vadd.f32 %v2477, %v2565
      %v2567 = vpop.f32.mrf.mxu0
      %v2568 = vadd.f32 %v2479, %v2567
      %2569 = vmatmul.bf16.gmra.mxu0 %v1057
      %v2570 = vpop.f32.mrf.mxu0
      %v2571 = vadd.f32 %v2482, %v2570
      %v2572 = vpop.f32.mrf.mxu0
      %v2573 = vadd.f32 %v2484, %v2572
      %2574 = vmatmul.bf16.gmra.mxu0 %v1064
      %v2575 = vpop.f32.mrf.mxu0
      %v2576 = vadd.f32 %v2487, %v2575
      %v2577 = vpop.f32.mrf.mxu0
      %v2578 = vadd.f32 %v2489, %v2577
      %2579 = vmatmul.bf16.gmra.mxu0 %v1071
      %v2580 = vpop.f32.mrf.mxu0
      %v2581 = vadd.f32 %v2492, %v2580
      %v2582 = vpop.f32.mrf.mxu0
      %v2583 = vadd.f32 %v2494, %v2582
      %2584 = vmatmul.bf16.gmra.mxu0 %v1078
      %v2585 = vpop.f32.mrf.mxu0
      %v2586 = vadd.f32 %v2497, %v2585
      %v2587 = vpop.f32.mrf.mxu0
      %v2588 = vadd.f32 %v2499, %v2587
      %2589 = vmatmul.bf16.gmra.mxu0 %v1085
      %v2590 = vpop.f32.mrf.mxu0
      %v2591 = vadd.f32 %v2502, %v2590
      %v2592 = vpop.f32.mrf.mxu0
      %v2593 = vadd.f32 %v2504, %v2592
      %2594 = vmatmul.bf16.gmra.mxu0 %v1092
      %v2595 = vpop.f32.mrf.mxu0
      %v2596 = vadd.f32 %v2507, %v2595
      %v2597 = vpop.f32.mrf.mxu0
      %v2598 = vadd.f32 %v2509, %v2597
      %2599 = vmatmul.bf16.gmra.mxu0 %v1099
      %v2600 = vpop.f32.mrf.mxu0
      %v2601 = vadd.f32 %v2512, %v2600
      %v2602 = vpop.f32.mrf.mxu0
      %v2603 = vadd.f32 %v2514, %v2602
      %2604 = vmatmul.bf16.gmra.mxu0 %v1106
      %v2605 = vpop.f32.mrf.mxu0
      %v2606 = vadd.f32 %v2517, %v2605
      %v2607 = vpop.f32.mrf.mxu0
      %v2608 = vadd.f32 %v2519, %v2607
      %2609 = vdwg.mxu0
      %2610 = vmatpush.bf16.msra.mxu0 %v2019
      %2611 = vmatpush.bf16.msra.mxu0 %v2015
      %2612 = vmatpush.bf16.msra.mxu0 %v2011
      %2613 = vmatpush.bf16.msra.mxu0 %v2007
      %2614 = vmatpush.bf16.msra.mxu0 %v2003
      %2615 = vmatpush.bf16.msra.mxu0 %v1999
      %2616 = vmatpush.bf16.msra.mxu0 %v1995
      %2617 = vmatpush.bf16.msra.mxu0 %v1991
      %2618 = vmatmul.bf16.gmra.mxu0 %v1002
      %v2619 = vpop.f32.mrf.mxu0
      %v2620 = vadd.f32 %v2531, %v2619
      %v2621 = vpop.f32.mrf.mxu0
      %v2622 = vadd.f32 %v2533, %v2621
      %2623 = vmatmul.bf16.gmra.mxu0 %v1009
      %v2624 = vpop.f32.mrf.mxu0
      %v2625 = vadd.f32 %v2536, %v2624
      %v2626 = vpop.f32.mrf.mxu0
      %v2627 = vadd.f32 %v2538, %v2626
      %2628 = vmatmul.bf16.gmra.mxu0 %v1016
      %v2629 = vpop.f32.mrf.mxu0
      %v2630 = vadd.f32 %v2541, %v2629
      %v2631 = vpop.f32.mrf.mxu0
      %v2632 = vadd.f32 %v2543, %v2631
      %2633 = vmatmul.bf16.gmra.mxu0 %v1023
      %v2634 = vpop.f32.mrf.mxu0
      %v2635 = vadd.f32 %v2546, %v2634
      %v2636 = vpop.f32.mrf.mxu0
      %v2637 = vadd.f32 %v2548, %v2636
      %2638 = vmatmul.bf16.gmra.mxu0 %v1030
      %v2639 = vpop.f32.mrf.mxu0
      %v2640 = vadd.f32 %v2551, %v2639
      %v2641 = vpop.f32.mrf.mxu0
      %v2642 = vadd.f32 %v2553, %v2641
      %2643 = vmatmul.bf16.gmra.mxu0 %v1037
      %v2644 = vpop.f32.mrf.mxu0
      %v2645 = vadd.f32 %v2556, %v2644
      %v2646 = vpop.f32.mrf.mxu0
      %v2647 = vadd.f32 %v2558, %v2646
      %2648 = vmatmul.bf16.gmra.mxu0 %v1044
      %v2649 = vpop.f32.mrf.mxu0
      %v2650 = vadd.f32 %v2561, %v2649
      %v2651 = vpop.f32.mrf.mxu0
      %v2652 = vadd.f32 %v2563, %v2651
      %2653 = vmatmul.bf16.gmra.mxu0 %v1051
      %v2654 = vpop.f32.mrf.mxu0
      %v2655 = vadd.f32 %v2566, %v2654
      %v2656 = vpop.f32.mrf.mxu0
      %v2657 = vadd.f32 %v2568, %v2656
      %2658 = vmatmul.bf16.gmra.mxu0 %v1058
      %v2659 = vpop.f32.mrf.mxu0
      %v2660 = vadd.f32 %v2571, %v2659
      %v2661 = vpop.f32.mrf.mxu0
      %v2662 = vadd.f32 %v2573, %v2661
      %2663 = vmatmul.bf16.gmra.mxu0 %v1065
      %v2664 = vpop.f32.mrf.mxu0
      %v2665 = vadd.f32 %v2576, %v2664
      %v2666 = vpop.f32.mrf.mxu0
      %v2667 = vadd.f32 %v2578, %v2666
      %2668 = vmatmul.bf16.gmra.mxu0 %v1072
      %v2669 = vpop.f32.mrf.mxu0
      %v2670 = vadd.f32 %v2581, %v2669
      %v2671 = vpop.f32.mrf.mxu0
      %v2672 = vadd.f32 %v2583, %v2671
      %2673 = vmatmul.bf16.gmra.mxu0 %v1079
      %v2674 = vpop.f32.mrf.mxu0
      %v2675 = vadd.f32 %v2586, %v2674
      %v2676 = vpop.f32.mrf.mxu0
      %v2677 = vadd.f32 %v2588, %v2676
      %2678 = vmatmul.bf16.gmra.mxu0 %v1086
      %v2679 = vpop.f32.mrf.mxu0
      %v2680 = vadd.f32 %v2591, %v2679
      %v2681 = vpop.f32.mrf.mxu0
      %v2682 = vadd.f32 %v2593, %v2681
      %2683 = vmatmul.bf16.gmra.mxu0 %v1093
      %v2684 = vpop.f32.mrf.mxu0
      %v2685 = vadd.f32 %v2596, %v2684
      %v2686 = vpop.f32.mrf.mxu0
      %v2687 = vadd.f32 %v2598, %v2686
      %2688 = vmatmul.bf16.gmra.mxu0 %v1100
      %v2689 = vpop.f32.mrf.mxu0
      %v2690 = vadd.f32 %v2601, %v2689
      %v2691 = vpop.f32.mrf.mxu0
      %v2692 = vadd.f32 %v2603, %v2691
      %2693 = vmatmul.bf16.gmra.mxu0 %v1107
      %v2694 = vpop.f32.mrf.mxu0
      %v2695 = vadd.f32 %v2606, %v2694
      %v2696 = vpop.f32.mrf.mxu0
      %v2697 = vadd.f32 %v2608, %v2696
      %2698 = vdwg.mxu0
      %2699 = vmatpush.bf16.msra.mxu0 %v2051
      %2700 = vmatpush.bf16.msra.mxu0 %v2047
      %2701 = vmatpush.bf16.msra.mxu0 %v2043
      %2702 = vmatpush.bf16.msra.mxu0 %v2039
      %2703 = vmatpush.bf16.msra.mxu0 %v2035
      %2704 = vmatpush.bf16.msra.mxu0 %v2031
      %2705 = vmatpush.bf16.msra.mxu0 %v2027
      %2706 = vmatpush.bf16.msra.mxu0 %v2023
      %2707 = vmatmul.bf16.gmra.mxu0 %v1003
      %v2708 = vpop.f32.mrf.mxu0
      %v2709 = vadd.f32 %v2620, %v2708
      %v2710 = vpop.f32.mrf.mxu0
      %v2711 = vadd.f32 %v2622, %v2710
      %2712 = vmatmul.bf16.gmra.mxu0 %v1010
      %v2713 = vpop.f32.mrf.mxu0
      %v2714 = vadd.f32 %v2625, %v2713
      %v2715 = vpop.f32.mrf.mxu0
      %v2716 = vadd.f32 %v2627, %v2715
      %2717 = vmatmul.bf16.gmra.mxu0 %v1017
      %v2718 = vpop.f32.mrf.mxu0
      %v2719 = vadd.f32 %v2630, %v2718
      %v2720 = vpop.f32.mrf.mxu0
      %v2721 = vadd.f32 %v2632, %v2720
      %2722 = vmatmul.bf16.gmra.mxu0 %v1024
      %v2723 = vpop.f32.mrf.mxu0
      %v2724 = vadd.f32 %v2635, %v2723
      %v2725 = vpop.f32.mrf.mxu0
      %v2726 = vadd.f32 %v2637, %v2725
      %2727 = vmatmul.bf16.gmra.mxu0 %v1031
      %v2728 = vpop.f32.mrf.mxu0
      %v2729 = vadd.f32 %v2640, %v2728
      %v2730 = vpop.f32.mrf.mxu0
      %v2731 = vadd.f32 %v2642, %v2730
      %2732 = vmatmul.bf16.gmra.mxu0 %v1038
      %v2733 = vpop.f32.mrf.mxu0
      %v2734 = vadd.f32 %v2645, %v2733
      %v2735 = vpop.f32.mrf.mxu0
      %v2736 = vadd.f32 %v2647, %v2735
      %2737 = vmatmul.bf16.gmra.mxu0 %v1045
      %v2738 = vpop.f32.mrf.mxu0
      %v2739 = vadd.f32 %v2650, %v2738
      %v2740 = vpop.f32.mrf.mxu0
      %v2741 = vadd.f32 %v2652, %v2740
      %2742 = vmatmul.bf16.gmra.mxu0 %v1052
      %v2743 = vpop.f32.mrf.mxu0
      %v2744 = vadd.f32 %v2655, %v2743
      %v2745 = vpop.f32.mrf.mxu0
      %v2746 = vadd.f32 %v2657, %v2745
      %2747 = vmatmul.bf16.gmra.mxu0 %v1059
      %v2748 = vpop.f32.mrf.mxu0
      %v2749 = vadd.f32 %v2660, %v2748
      %v2750 = vpop.f32.mrf.mxu0
      %v2751 = vadd.f32 %v2662, %v2750
      %2752 = vmatmul.bf16.gmra.mxu0 %v1066
      %v2753 = vpop.f32.mrf.mxu0
      %v2754 = vadd.f32 %v2665, %v2753
      %v2755 = vpop.f32.mrf.mxu0
      %v2756 = vadd.f32 %v2667, %v2755
      %2757 = vmatmul.bf16.gmra.mxu0 %v1073
      %v2758 = vpop.f32.mrf.mxu0
      %v2759 = vadd.f32 %v2670, %v2758
      %v2760 = vpop.f32.mrf.mxu0
      %v2761 = vadd.f32 %v2672, %v2760
      %2762 = vmatmul.bf16.gmra.mxu0 %v1080
      %v2763 = vpop.f32.mrf.mxu0
      %v2764 = vadd.f32 %v2675, %v2763
      %v2765 = vpop.f32.mrf.mxu0
      %v2766 = vadd.f32 %v2677, %v2765
      %2767 = vmatmul.bf16.gmra.mxu0 %v1087
      %v2768 = vpop.f32.mrf.mxu0
      %v2769 = vadd.f32 %v2680, %v2768
      %v2770 = vpop.f32.mrf.mxu0
      %v2771 = vadd.f32 %v2682, %v2770
      %2772 = vmatmul.bf16.gmra.mxu0 %v1094
      %v2773 = vpop.f32.mrf.mxu0
      %v2774 = vadd.f32 %v2685, %v2773
      %v2775 = vpop.f32.mrf.mxu0
      %v2776 = vadd.f32 %v2687, %v2775
      %2777 = vmatmul.bf16.gmra.mxu0 %v1101
      %v2778 = vpop.f32.mrf.mxu0
      %v2779 = vadd.f32 %v2690, %v2778
      %v2780 = vpop.f32.mrf.mxu0
      %v2781 = vadd.f32 %v2692, %v2780
      %2782 = vmatmul.bf16.gmra.mxu0 %v1108
      %v2783 = vpop.f32.mrf.mxu0
      %v2784 = vadd.f32 %v2695, %v2783
      %v2785 = vpop.f32.mrf.mxu0
      %v2786 = vadd.f32 %v2697, %v2785
      %2787 = vdwg.mxu0
      %2788 = vmatpush.bf16.msra.mxu0 %v2083
      %2789 = vmatpush.bf16.msra.mxu0 %v2079
      %2790 = vmatpush.bf16.msra.mxu0 %v2075
      %2791 = vmatpush.bf16.msra.mxu0 %v2071
      %2792 = vmatpush.bf16.msra.mxu0 %v2067
      %2793 = vmatpush.bf16.msra.mxu0 %v2063
      %2794 = vmatpush.bf16.msra.mxu0 %v2059
      %2795 = vmatpush.bf16.msra.mxu0 %v2055
      %2796 = vmatmul.bf16.gmra.mxu0 %v1004
      %v2797 = vpop.f32.mrf.mxu0
      %v2798 = vadd.f32 %v2709, %v2797
      %v2799 = vpop.f32.mrf.mxu0
      %v2800 = vadd.f32 %v2711, %v2799
      %2801 = vmatmul.bf16.gmra.mxu0 %v1011
      %v2802 = vpop.f32.mrf.mxu0
      %v2803 = vadd.f32 %v2714, %v2802
      %v2804 = vpop.f32.mrf.mxu0
      %v2805 = vadd.f32 %v2716, %v2804
      %2806 = vmatmul.bf16.gmra.mxu0 %v1018
      %v2807 = vpop.f32.mrf.mxu0
      %v2808 = vadd.f32 %v2719, %v2807
      %v2809 = vpop.f32.mrf.mxu0
      %v2810 = vadd.f32 %v2721, %v2809
      %2811 = vmatmul.bf16.gmra.mxu0 %v1025
      %v2812 = vpop.f32.mrf.mxu0
      %v2813 = vadd.f32 %v2724, %v2812
      %v2814 = vpop.f32.mrf.mxu0
      %v2815 = vadd.f32 %v2726, %v2814
      %2816 = vmatmul.bf16.gmra.mxu0 %v1032
      %v2817 = vpop.f32.mrf.mxu0
      %v2818 = vadd.f32 %v2729, %v2817
      %v2819 = vpop.f32.mrf.mxu0
      %v2820 = vadd.f32 %v2731, %v2819
      %2821 = vmatmul.bf16.gmra.mxu0 %v1039
      %v2822 = vpop.f32.mrf.mxu0
      %v2823 = vadd.f32 %v2734, %v2822
      %v2824 = vpop.f32.mrf.mxu0
      %v2825 = vadd.f32 %v2736, %v2824
      %2826 = vmatmul.bf16.gmra.mxu0 %v1046
      %v2827 = vpop.f32.mrf.mxu0
      %v2828 = vadd.f32 %v2739, %v2827
      %v2829 = vpop.f32.mrf.mxu0
      %v2830 = vadd.f32 %v2741, %v2829
      %2831 = vmatmul.bf16.gmra.mxu0 %v1053
      %v2832 = vpop.f32.mrf.mxu0
      %v2833 = vadd.f32 %v2744, %v2832
      %v2834 = vpop.f32.mrf.mxu0
      %v2835 = vadd.f32 %v2746, %v2834
      %2836 = vmatmul.bf16.gmra.mxu0 %v1060
      %v2837 = vpop.f32.mrf.mxu0
      %v2838 = vadd.f32 %v2749, %v2837
      %v2839 = vpop.f32.mrf.mxu0
      %v2840 = vadd.f32 %v2751, %v2839
      %2841 = vmatmul.bf16.gmra.mxu0 %v1067
      %v2842 = vpop.f32.mrf.mxu0
      %v2843 = vadd.f32 %v2754, %v2842
      %v2844 = vpop.f32.mrf.mxu0
      %v2845 = vadd.f32 %v2756, %v2844
      %2846 = vmatmul.bf16.gmra.mxu0 %v1074
      %v2847 = vpop.f32.mrf.mxu0
      %v2848 = vadd.f32 %v2759, %v2847
      %v2849 = vpop.f32.mrf.mxu0
      %v2850 = vadd.f32 %v2761, %v2849
      %2851 = vmatmul.bf16.gmra.mxu0 %v1081
      %v2852 = vpop.f32.mrf.mxu0
      %v2853 = vadd.f32 %v2764, %v2852
      %v2854 = vpop.f32.mrf.mxu0
      %v2855 = vadd.f32 %v2766, %v2854
      %2856 = vmatmul.bf16.gmra.mxu0 %v1088
      %v2857 = vpop.f32.mrf.mxu0
      %v2858 = vadd.f32 %v2769, %v2857
      %v2859 = vpop.f32.mrf.mxu0
      %v2860 = vadd.f32 %v2771, %v2859
      %2861 = vmatmul.bf16.gmra.mxu0 %v1095
      %v2862 = vpop.f32.mrf.mxu0
      %v2863 = vadd.f32 %v2774, %v2862
      %v2864 = vpop.f32.mrf.mxu0
      %v2865 = vadd.f32 %v2776, %v2864
      %2866 = vmatmul.bf16.gmra.mxu0 %v1102
      %v2867 = vpop.f32.mrf.mxu0
      %v2868 = vadd.f32 %v2779, %v2867
      %v2869 = vpop.f32.mrf.mxu0
      %v2870 = vadd.f32 %v2781, %v2869
      %2871 = vmatmul.bf16.gmra.mxu0 %v1109
      %v2872 = vpop.f32.mrf.mxu0
      %v2873 = vadd.f32 %v2784, %v2872
      %v2874 = vpop.f32.mrf.mxu0
      %v2875 = vadd.f32 %v2786, %v2874
      %2876 = vdwg.mxu0
      %2877 = vmatpush.bf16.msra.mxu0 %v2115
      %2878 = vmatpush.bf16.msra.mxu0 %v2111
      %2879 = vmatpush.bf16.msra.mxu0 %v2107
      %2880 = vmatpush.bf16.msra.mxu0 %v2103
      %2881 = vmatpush.bf16.msra.mxu0 %v2099
      %2882 = vmatpush.bf16.msra.mxu0 %v2095
      %2883 = vmatpush.bf16.msra.mxu0 %v2091
      %2884 = vmatpush.bf16.msra.mxu0 %v2087
      %2885 = vmatmul.bf16.gmra.mxu0 %v1005
      %v2886 = vpop.f32.mrf.mxu0
      %v2887 = vadd.f32 %v2798, %v2886
      %v2888 = vpop.f32.mrf.mxu0
      %v2889 = vadd.f32 %v2800, %v2888
      %2890 = vmatmul.bf16.gmra.mxu0 %v1012
      %v2891 = vpop.f32.mrf.mxu0
      %v2892 = vadd.f32 %v2803, %v2891
      %v2893 = vpop.f32.mrf.mxu0
      %v2894 = vadd.f32 %v2805, %v2893
      %2895 = vmatmul.bf16.gmra.mxu0 %v1019
      %v2896 = vpop.f32.mrf.mxu0
      %v2897 = vadd.f32 %v2808, %v2896
      %v2898 = vpop.f32.mrf.mxu0
      %v2899 = vadd.f32 %v2810, %v2898
      %2900 = vmatmul.bf16.gmra.mxu0 %v1026
      %v2901 = vpop.f32.mrf.mxu0
      %v2902 = vadd.f32 %v2813, %v2901
      %v2903 = vpop.f32.mrf.mxu0
      %v2904 = vadd.f32 %v2815, %v2903
      %2905 = vmatmul.bf16.gmra.mxu0 %v1033
      %v2906 = vpop.f32.mrf.mxu0
      %v2907 = vadd.f32 %v2818, %v2906
      %v2908 = vpop.f32.mrf.mxu0
      %v2909 = vadd.f32 %v2820, %v2908
      %2910 = vmatmul.bf16.gmra.mxu0 %v1040
      %v2911 = vpop.f32.mrf.mxu0
      %v2912 = vadd.f32 %v2823, %v2911
      %v2913 = vpop.f32.mrf.mxu0
      %v2914 = vadd.f32 %v2825, %v2913
      %2915 = vmatmul.bf16.gmra.mxu0 %v1047
      %v2916 = vpop.f32.mrf.mxu0
      %v2917 = vadd.f32 %v2828, %v2916
      %v2918 = vpop.f32.mrf.mxu0
      %v2919 = vadd.f32 %v2830, %v2918
      %2920 = vmatmul.bf16.gmra.mxu0 %v1054
      %v2921 = vpop.f32.mrf.mxu0
      %v2922 = vadd.f32 %v2833, %v2921
      %v2923 = vpop.f32.mrf.mxu0
      %v2924 = vadd.f32 %v2835, %v2923
      %2925 = vmatmul.bf16.gmra.mxu0 %v1061
      %v2926 = vpop.f32.mrf.mxu0
      %v2927 = vadd.f32 %v2838, %v2926
      %v2928 = vpop.f32.mrf.mxu0
      %v2929 = vadd.f32 %v2840, %v2928
      %2930 = vmatmul.bf16.gmra.mxu0 %v1068
      %v2931 = vpop.f32.mrf.mxu0
      %v2932 = vadd.f32 %v2843, %v2931
      %v2933 = vpop.f32.mrf.mxu0
      %v2934 = vadd.f32 %v2845, %v2933
      %2935 = vmatmul.bf16.gmra.mxu0 %v1075
      %v2936 = vpop.f32.mrf.mxu0
      %v2937 = vadd.f32 %v2848, %v2936
      %v2938 = vpop.f32.mrf.mxu0
      %v2939 = vadd.f32 %v2850, %v2938
      %2940 = vmatmul.bf16.gmra.mxu0 %v1082
      %v2941 = vpop.f32.mrf.mxu0
      %v2942 = vadd.f32 %v2853, %v2941
      %v2943 = vpop.f32.mrf.mxu0
      %v2944 = vadd.f32 %v2855, %v2943
      %2945 = vmatmul.bf16.gmra.mxu0 %v1089
      %v2946 = vpop.f32.mrf.mxu0
      %v2947 = vadd.f32 %v2858, %v2946
      %v2948 = vpop.f32.mrf.mxu0
      %v2949 = vadd.f32 %v2860, %v2948
      %2950 = vmatmul.bf16.gmra.mxu0 %v1096
      %v2951 = vpop.f32.mrf.mxu0
      %v2952 = vadd.f32 %v2863, %v2951
      %v2953 = vpop.f32.mrf.mxu0
      %v2954 = vadd.f32 %v2865, %v2953
      %2955 = vmatmul.bf16.gmra.mxu0 %v1103
      %v2956 = vpop.f32.mrf.mxu0
      %v2957 = vadd.f32 %v2868, %v2956
      %v2958 = vpop.f32.mrf.mxu0
      %v2959 = vadd.f32 %v2870, %v2958
      %2960 = vmatmul.bf16.gmra.mxu0 %v1110
      %v2961 = vpop.f32.mrf.mxu0
      %v2962 = vadd.f32 %v2873, %v2961
      %v2963 = vpop.f32.mrf.mxu0
      %v2964 = vadd.f32 %v2875, %v2963
      %2965 = vdwg.mxu0
      %2966 = vmatpush.bf16.msra.mxu0 %v1924
      %2967 = vmatpush.bf16.msra.mxu0 %v1920
      %2968 = vmatpush.bf16.msra.mxu0 %v1916
      %2969 = vmatpush.bf16.msra.mxu0 %v1912
      %2970 = vmatpush.bf16.msra.mxu0 %v1908
      %2971 = vmatpush.bf16.msra.mxu0 %v1904
      %2972 = vmatpush.bf16.msra.mxu0 %v1900
      %2973 = vmatpush.bf16.msra.mxu0 %v1896
      %2974 = vmatmul.bf16.gmra.mxu0 %v999
      %v2975 = vpop.f32.mrf.mxu0
      %v2976 = vadd.f32 %v640, %v2975
      %v2977 = vpop.f32.mrf.mxu0
      %v2978 = vadd.f32 %v640, %v2977
      %2979 = vmatmul.bf16.gmra.mxu0 %v1006
      %v2980 = vpop.f32.mrf.mxu0
      %v2981 = vadd.f32 %v640, %v2980
      %v2982 = vpop.f32.mrf.mxu0
      %v2983 = vadd.f32 %v640, %v2982
      %2984 = vmatmul.bf16.gmra.mxu0 %v1013
      %v2985 = vpop.f32.mrf.mxu0
      %v2986 = vadd.f32 %v640, %v2985
      %v2987 = vpop.f32.mrf.mxu0
      %v2988 = vadd.f32 %v640, %v2987
      %2989 = vmatmul.bf16.gmra.mxu0 %v1020
      %v2990 = vpop.f32.mrf.mxu0
      %v2991 = vadd.f32 %v640, %v2990
      %v2992 = vpop.f32.mrf.mxu0
      %v2993 = vadd.f32 %v640, %v2992
      %2994 = vmatmul.bf16.gmra.mxu0 %v1027
      %v2995 = vpop.f32.mrf.mxu0
      %v2996 = vadd.f32 %v640, %v2995
      %v2997 = vpop.f32.mrf.mxu0
      %v2998 = vadd.f32 %v640, %v2997
      %2999 = vmatmul.bf16.gmra.mxu0 %v1034
      %v3000 = vpop.f32.mrf.mxu0
      %v3001 = vadd.f32 %v640, %v3000
      %v3002 = vpop.f32.mrf.mxu0
      %v3003 = vadd.f32 %v640, %v3002
      %3004 = vmatmul.bf16.gmra.mxu0 %v1041
      %v3005 = vpop.f32.mrf.mxu0
      %v3006 = vadd.f32 %v640, %v3005
      %v3007 = vpop.f32.mrf.mxu0
      %v3008 = vadd.f32 %v640, %v3007
      %3009 = vmatmul.bf16.gmra.mxu0 %v1048
      %v3010 = vpop.f32.mrf.mxu0
      %v3011 = vadd.f32 %v640, %v3010
      %v3012 = vpop.f32.mrf.mxu0
      %v3013 = vadd.f32 %v640, %v3012
      %3014 = vmatmul.bf16.gmra.mxu0 %v1055
      %v3015 = vpop.f32.mrf.mxu0
      %v3016 = vadd.f32 %v640, %v3015
      %v3017 = vpop.f32.mrf.mxu0
      %v3018 = vadd.f32 %v640, %v3017
      %3019 = vmatmul.bf16.gmra.mxu0 %v1062
      %v3020 = vpop.f32.mrf.mxu0
      %v3021 = vadd.f32 %v640, %v3020
      %v3022 = vpop.f32.mrf.mxu0
      %v3023 = vadd.f32 %v640, %v3022
      %3024 = vmatmul.bf16.gmra.mxu0 %v1069
      %v3025 = vpop.f32.mrf.mxu0
      %v3026 = vadd.f32 %v640, %v3025
      %v3027 = vpop.f32.mrf.mxu0
      %v3028 = vadd.f32 %v640, %v3027
      %3029 = vmatmul.bf16.gmra.mxu0 %v1076
      %v3030 = vpop.f32.mrf.mxu0
      %v3031 = vadd.f32 %v640, %v3030
      %v3032 = vpop.f32.mrf.mxu0
      %v3033 = vadd.f32 %v640, %v3032
      %3034 = vmatmul.bf16.gmra.mxu0 %v1083
      %v3035 = vpop.f32.mrf.mxu0
      %v3036 = vadd.f32 %v640, %v3035
      %v3037 = vpop.f32.mrf.mxu0
      %v3038 = vadd.f32 %v640, %v3037
      %3039 = vmatmul.bf16.gmra.mxu0 %v1090
      %v3040 = vpop.f32.mrf.mxu0
      %v3041 = vadd.f32 %v640, %v3040
      %v3042 = vpop.f32.mrf.mxu0
      %v3043 = vadd.f32 %v640, %v3042
      %3044 = vmatmul.bf16.gmra.mxu0 %v1097
      %v3045 = vpop.f32.mrf.mxu0
      %v3046 = vadd.f32 %v640, %v3045
      %v3047 = vpop.f32.mrf.mxu0
      %v3048 = vadd.f32 %v640, %v3047
      %3049 = vmatmul.bf16.gmra.mxu0 %v1104
      %v3050 = vpop.f32.mrf.mxu0
      %v3051 = vadd.f32 %v640, %v3050
      %v3052 = vpop.f32.mrf.mxu0
      %v3053 = vadd.f32 %v640, %v3052
      %3054 = vdwg.mxu0
      %3055 = vmatpush.bf16.msra.mxu0 %v1956
      %3056 = vmatpush.bf16.msra.mxu0 %v1952
      %3057 = vmatpush.bf16.msra.mxu0 %v1948
      %3058 = vmatpush.bf16.msra.mxu0 %v1944
      %3059 = vmatpush.bf16.msra.mxu0 %v1940
      %3060 = vmatpush.bf16.msra.mxu0 %v1936
      %3061 = vmatpush.bf16.msra.mxu0 %v1932
      %3062 = vmatpush.bf16.msra.mxu0 %v1928
      %3063 = vmatmul.bf16.gmra.mxu0 %v1000
      %v3064 = vpop.f32.mrf.mxu0
      %v3065 = vadd.f32 %v2976, %v3064
      %v3066 = vpop.f32.mrf.mxu0
      %v3067 = vadd.f32 %v2978, %v3066
      %3068 = vmatmul.bf16.gmra.mxu0 %v1007
      %v3069 = vpop.f32.mrf.mxu0
      %v3070 = vadd.f32 %v2981, %v3069
      %v3071 = vpop.f32.mrf.mxu0
      %v3072 = vadd.f32 %v2983, %v3071
      %3073 = vmatmul.bf16.gmra.mxu0 %v1014
      %v3074 = vpop.f32.mrf.mxu0
      %v3075 = vadd.f32 %v2986, %v3074
      %v3076 = vpop.f32.mrf.mxu0
      %v3077 = vadd.f32 %v2988, %v3076
      %3078 = vmatmul.bf16.gmra.mxu0 %v1021
      %v3079 = vpop.f32.mrf.mxu0
      %v3080 = vadd.f32 %v2991, %v3079
      %v3081 = vpop.f32.mrf.mxu0
      %v3082 = vadd.f32 %v2993, %v3081
      %3083 = vmatmul.bf16.gmra.mxu0 %v1028
      %v3084 = vpop.f32.mrf.mxu0
      %v3085 = vadd.f32 %v2996, %v3084
      %v3086 = vpop.f32.mrf.mxu0
      %v3087 = vadd.f32 %v2998, %v3086
      %3088 = vmatmul.bf16.gmra.mxu0 %v1035
      %v3089 = vpop.f32.mrf.mxu0
      %v3090 = vadd.f32 %v3001, %v3089
      %v3091 = vpop.f32.mrf.mxu0
      %v3092 = vadd.f32 %v3003, %v3091
      %3093 = vmatmul.bf16.gmra.mxu0 %v1042
      %v3094 = vpop.f32.mrf.mxu0
      %v3095 = vadd.f32 %v3006, %v3094
      %v3096 = vpop.f32.mrf.mxu0
      %v3097 = vadd.f32 %v3008, %v3096
      %3098 = vmatmul.bf16.gmra.mxu0 %v1049
      %v3099 = vpop.f32.mrf.mxu0
      %v3100 = vadd.f32 %v3011, %v3099
      %v3101 = vpop.f32.mrf.mxu0
      %v3102 = vadd.f32 %v3013, %v3101
      %3103 = vmatmul.bf16.gmra.mxu0 %v1056
      %v3104 = vpop.f32.mrf.mxu0
      %v3105 = vadd.f32 %v3016, %v3104
      %v3106 = vpop.f32.mrf.mxu0
      %v3107 = vadd.f32 %v3018, %v3106
      %3108 = vmatmul.bf16.gmra.mxu0 %v1063
      %v3109 = vpop.f32.mrf.mxu0
      %v3110 = vadd.f32 %v3021, %v3109
      %v3111 = vpop.f32.mrf.mxu0
      %v3112 = vadd.f32 %v3023, %v3111
      %3113 = vmatmul.bf16.gmra.mxu0 %v1070
      %v3114 = vpop.f32.mrf.mxu0
      %v3115 = vadd.f32 %v3026, %v3114
      %v3116 = vpop.f32.mrf.mxu0
      %v3117 = vadd.f32 %v3028, %v3116
      %3118 = vmatmul.bf16.gmra.mxu0 %v1077
      %v3119 = vpop.f32.mrf.mxu0
      %v3120 = vadd.f32 %v3031, %v3119
      %v3121 = vpop.f32.mrf.mxu0
      %v3122 = vadd.f32 %v3033, %v3121
      %3123 = vmatmul.bf16.gmra.mxu0 %v1084
      %v3124 = vpop.f32.mrf.mxu0
      %v3125 = vadd.f32 %v3036, %v3124
      %v3126 = vpop.f32.mrf.mxu0
      %v3127 = vadd.f32 %v3038, %v3126
      %3128 = vmatmul.bf16.gmra.mxu0 %v1091
      %v3129 = vpop.f32.mrf.mxu0
      %v3130 = vadd.f32 %v3041, %v3129
      %v3131 = vpop.f32.mrf.mxu0
      %v3132 = vadd.f32 %v3043, %v3131
      %3133 = vmatmul.bf16.gmra.mxu0 %v1098
      %v3134 = vpop.f32.mrf.mxu0
      %v3135 = vadd.f32 %v3046, %v3134
      %v3136 = vpop.f32.mrf.mxu0
      %v3137 = vadd.f32 %v3048, %v3136
      %3138 = vmatmul.bf16.gmra.mxu0 %v1105
      %v3139 = vpop.f32.mrf.mxu0
      %v3140 = vadd.f32 %v3051, %v3139
      %v3141 = vpop.f32.mrf.mxu0
      %v3142 = vadd.f32 %v3053, %v3141
      %3143 = vdwg.mxu0
      %3144 = vmatpush.bf16.msra.mxu0 %v1988
      %3145 = vmatpush.bf16.msra.mxu0 %v1984
      %3146 = vmatpush.bf16.msra.mxu0 %v1980
      %3147 = vmatpush.bf16.msra.mxu0 %v1976
      %3148 = vmatpush.bf16.msra.mxu0 %v1972
      %3149 = vmatpush.bf16.msra.mxu0 %v1968
      %3150 = vmatpush.bf16.msra.mxu0 %v1964
      %3151 = vmatpush.bf16.msra.mxu0 %v1960
      %3152 = vmatmul.bf16.gmra.mxu0 %v1001
      %v3153 = vpop.f32.mrf.mxu0
      %v3154 = vadd.f32 %v3065, %v3153
      %v3155 = vpop.f32.mrf.mxu0
      %v3156 = vadd.f32 %v3067, %v3155
      %3157 = vmatmul.bf16.gmra.mxu0 %v1008
      %v3158 = vpop.f32.mrf.mxu0
      %v3159 = vadd.f32 %v3070, %v3158
      %v3160 = vpop.f32.mrf.mxu0
      %v3161 = vadd.f32 %v3072, %v3160
      %3162 = vmatmul.bf16.gmra.mxu0 %v1015
      %v3163 = vpop.f32.mrf.mxu0
      %v3164 = vadd.f32 %v3075, %v3163
      %v3165 = vpop.f32.mrf.mxu0
      %v3166 = vadd.f32 %v3077, %v3165
      %3167 = vmatmul.bf16.gmra.mxu0 %v1022
      %v3168 = vpop.f32.mrf.mxu0
      %v3169 = vadd.f32 %v3080, %v3168
      %v3170 = vpop.f32.mrf.mxu0
      %v3171 = vadd.f32 %v3082, %v3170
      %3172 = vmatmul.bf16.gmra.mxu0 %v1029
      %v3173 = vpop.f32.mrf.mxu0
      %v3174 = vadd.f32 %v3085, %v3173
      %v3175 = vpop.f32.mrf.mxu0
      %v3176 = vadd.f32 %v3087, %v3175
      %3177 = vmatmul.bf16.gmra.mxu0 %v1036
      %v3178 = vpop.f32.mrf.mxu0
      %v3179 = vadd.f32 %v3090, %v3178
      %v3180 = vpop.f32.mrf.mxu0
      %v3181 = vadd.f32 %v3092, %v3180
      %3182 = vmatmul.bf16.gmra.mxu0 %v1043
      %v3183 = vpop.f32.mrf.mxu0
      %v3184 = vadd.f32 %v3095, %v3183
      %v3185 = vpop.f32.mrf.mxu0
      %v3186 = vadd.f32 %v3097, %v3185
      %3187 = vmatmul.bf16.gmra.mxu0 %v1050
      %v3188 = vpop.f32.mrf.mxu0
      %v3189 = vadd.f32 %v3100, %v3188
      %v3190 = vpop.f32.mrf.mxu0
      %v3191 = vadd.f32 %v3102, %v3190
      %3192 = vmatmul.bf16.gmra.mxu0 %v1057
      %v3193 = vpop.f32.mrf.mxu0
      %v3194 = vadd.f32 %v3105, %v3193
      %v3195 = vpop.f32.mrf.mxu0
      %v3196 = vadd.f32 %v3107, %v3195
      %3197 = vmatmul.bf16.gmra.mxu0 %v1064
      %v3198 = vpop.f32.mrf.mxu0
      %v3199 = vadd.f32 %v3110, %v3198
      %v3200 = vpop.f32.mrf.mxu0
      %v3201 = vadd.f32 %v3112, %v3200
      %3202 = vmatmul.bf16.gmra.mxu0 %v1071
      %v3203 = vpop.f32.mrf.mxu0
      %v3204 = vadd.f32 %v3115, %v3203
      %v3205 = vpop.f32.mrf.mxu0
      %v3206 = vadd.f32 %v3117, %v3205
      %3207 = vmatmul.bf16.gmra.mxu0 %v1078
      %v3208 = vpop.f32.mrf.mxu0
      %v3209 = vadd.f32 %v3120, %v3208
      %v3210 = vpop.f32.mrf.mxu0
      %v3211 = vadd.f32 %v3122, %v3210
      %3212 = vmatmul.bf16.gmra.mxu0 %v1085
      %v3213 = vpop.f32.mrf.mxu0
      %v3214 = vadd.f32 %v3125, %v3213
      %v3215 = vpop.f32.mrf.mxu0
      %v3216 = vadd.f32 %v3127, %v3215
      %3217 = vmatmul.bf16.gmra.mxu0 %v1092
      %v3218 = vpop.f32.mrf.mxu0
      %v3219 = vadd.f32 %v3130, %v3218
      %v3220 = vpop.f32.mrf.mxu0
      %v3221 = vadd.f32 %v3132, %v3220
      %3222 = vmatmul.bf16.gmra.mxu0 %v1099
      %v3223 = vpop.f32.mrf.mxu0
      %v3224 = vadd.f32 %v3135, %v3223
      %v3225 = vpop.f32.mrf.mxu0
      %v3226 = vadd.f32 %v3137, %v3225
      %3227 = vmatmul.bf16.gmra.mxu0 %v1106
      %v3228 = vpop.f32.mrf.mxu0
      %v3229 = vadd.f32 %v3140, %v3228
      %v3230 = vpop.f32.mrf.mxu0
      %v3231 = vadd.f32 %v3142, %v3230
      %3232 = vdwg.mxu0
      %3233 = vmatpush.bf16.msra.mxu0 %v2020
      %3234 = vmatpush.bf16.msra.mxu0 %v2016
      %3235 = vmatpush.bf16.msra.mxu0 %v2012
      %3236 = vmatpush.bf16.msra.mxu0 %v2008
      %3237 = vmatpush.bf16.msra.mxu0 %v2004
      %3238 = vmatpush.bf16.msra.mxu0 %v2000
      %3239 = vmatpush.bf16.msra.mxu0 %v1996
      %3240 = vmatpush.bf16.msra.mxu0 %v1992
      %3241 = vmatmul.bf16.gmra.mxu0 %v1002
      %v3242 = vpop.f32.mrf.mxu0
      %v3243 = vadd.f32 %v3154, %v3242
      %v3244 = vpop.f32.mrf.mxu0
      %v3245 = vadd.f32 %v3156, %v3244
      %3246 = vmatmul.bf16.gmra.mxu0 %v1009
      %v3247 = vpop.f32.mrf.mxu0
      %v3248 = vadd.f32 %v3159, %v3247
      %v3249 = vpop.f32.mrf.mxu0
      %v3250 = vadd.f32 %v3161, %v3249
      %3251 = vmatmul.bf16.gmra.mxu0 %v1016
      %v3252 = vpop.f32.mrf.mxu0
      %v3253 = vadd.f32 %v3164, %v3252
      %v3254 = vpop.f32.mrf.mxu0
      %v3255 = vadd.f32 %v3166, %v3254
      %3256 = vmatmul.bf16.gmra.mxu0 %v1023
      %v3257 = vpop.f32.mrf.mxu0
      %v3258 = vadd.f32 %v3169, %v3257
      %v3259 = vpop.f32.mrf.mxu0
      %v3260 = vadd.f32 %v3171, %v3259
      %3261 = vmatmul.bf16.gmra.mxu0 %v1030
      %v3262 = vpop.f32.mrf.mxu0
      %v3263 = vadd.f32 %v3174, %v3262
      %v3264 = vpop.f32.mrf.mxu0
      %v3265 = vadd.f32 %v3176, %v3264
      %3266 = vmatmul.bf16.gmra.mxu0 %v1037
      %v3267 = vpop.f32.mrf.mxu0
      %v3268 = vadd.f32 %v3179, %v3267
      %v3269 = vpop.f32.mrf.mxu0
      %v3270 = vadd.f32 %v3181, %v3269
      %3271 = vmatmul.bf16.gmra.mxu0 %v1044
      %v3272 = vpop.f32.mrf.mxu0
      %v3273 = vadd.f32 %v3184, %v3272
      %v3274 = vpop.f32.mrf.mxu0
      %v3275 = vadd.f32 %v3186, %v3274
      %3276 = vmatmul.bf16.gmra.mxu0 %v1051
      %v3277 = vpop.f32.mrf.mxu0
      %v3278 = vadd.f32 %v3189, %v3277
      %v3279 = vpop.f32.mrf.mxu0
      %v3280 = vadd.f32 %v3191, %v3279
      %3281 = vmatmul.bf16.gmra.mxu0 %v1058
      %v3282 = vpop.f32.mrf.mxu0
      %v3283 = vadd.f32 %v3194, %v3282
      %v3284 = vpop.f32.mrf.mxu0
      %v3285 = vadd.f32 %v3196, %v3284
      %3286 = vmatmul.bf16.gmra.mxu0 %v1065
      %v3287 = vpop.f32.mrf.mxu0
      %v3288 = vadd.f32 %v3199, %v3287
      %v3289 = vpop.f32.mrf.mxu0
      %v3290 = vadd.f32 %v3201, %v3289
      %3291 = vmatmul.bf16.gmra.mxu0 %v1072
      %v3292 = vpop.f32.mrf.mxu0
      %v3293 = vadd.f32 %v3204, %v3292
      %v3294 = vpop.f32.mrf.mxu0
      %v3295 = vadd.f32 %v3206, %v3294
      %3296 = vmatmul.bf16.gmra.mxu0 %v1079
      %v3297 = vpop.f32.mrf.mxu0
      %v3298 = vadd.f32 %v3209, %v3297
      %v3299 = vpop.f32.mrf.mxu0
      %v3300 = vadd.f32 %v3211, %v3299
      %3301 = vmatmul.bf16.gmra.mxu0 %v1086
      %v3302 = vpop.f32.mrf.mxu0
      %v3303 = vadd.f32 %v3214, %v3302
      %v3304 = vpop.f32.mrf.mxu0
      %v3305 = vadd.f32 %v3216, %v3304
      %3306 = vmatmul.bf16.gmra.mxu0 %v1093
      %v3307 = vpop.f32.mrf.mxu0
      %v3308 = vadd.f32 %v3219, %v3307
      %v3309 = vpop.f32.mrf.mxu0
      %v3310 = vadd.f32 %v3221, %v3309
      %3311 = vmatmul.bf16.gmra.mxu0 %v1100
      %v3312 = vpop.f32.mrf.mxu0
      %v3313 = vadd.f32 %v3224, %v3312
      %v3314 = vpop.f32.mrf.mxu0
      %v3315 = vadd.f32 %v3226, %v3314
      %3316 = vmatmul.bf16.gmra.mxu0 %v1107
      %v3317 = vpop.f32.mrf.mxu0
      %v3318 = vadd.f32 %v3229, %v3317
      %v3319 = vpop.f32.mrf.mxu0
      %v3320 = vadd.f32 %v3231, %v3319
      %3321 = vdwg.mxu0
      %3322 = vmatpush.bf16.msra.mxu0 %v2052
      %3323 = vmatpush.bf16.msra.mxu0 %v2048
      %3324 = vmatpush.bf16.msra.mxu0 %v2044
      %3325 = vmatpush.bf16.msra.mxu0 %v2040
      %3326 = vmatpush.bf16.msra.mxu0 %v2036
      %3327 = vmatpush.bf16.msra.mxu0 %v2032
      %3328 = vmatpush.bf16.msra.mxu0 %v2028
      %3329 = vmatpush.bf16.msra.mxu0 %v2024
      %3330 = vmatmul.bf16.gmra.mxu0 %v1003
      %v3331 = vpop.f32.mrf.mxu0
      %v3332 = vadd.f32 %v3243, %v3331
      %v3333 = vpop.f32.mrf.mxu0
      %v3334 = vadd.f32 %v3245, %v3333
      %3335 = vmatmul.bf16.gmra.mxu0 %v1010
      %v3336 = vpop.f32.mrf.mxu0
      %v3337 = vadd.f32 %v3248, %v3336
      %v3338 = vpop.f32.mrf.mxu0
      %v3339 = vadd.f32 %v3250, %v3338
      %3340 = vmatmul.bf16.gmra.mxu0 %v1017
      %v3341 = vpop.f32.mrf.mxu0
      %v3342 = vadd.f32 %v3253, %v3341
      %v3343 = vpop.f32.mrf.mxu0
      %v3344 = vadd.f32 %v3255, %v3343
      %3345 = vmatmul.bf16.gmra.mxu0 %v1024
      %v3346 = vpop.f32.mrf.mxu0
      %v3347 = vadd.f32 %v3258, %v3346
      %v3348 = vpop.f32.mrf.mxu0
      %v3349 = vadd.f32 %v3260, %v3348
      %3350 = vmatmul.bf16.gmra.mxu0 %v1031
      %v3351 = vpop.f32.mrf.mxu0
      %v3352 = vadd.f32 %v3263, %v3351
      %v3353 = vpop.f32.mrf.mxu0
      %v3354 = vadd.f32 %v3265, %v3353
      %3355 = vmatmul.bf16.gmra.mxu0 %v1038
      %v3356 = vpop.f32.mrf.mxu0
      %v3357 = vadd.f32 %v3268, %v3356
      %v3358 = vpop.f32.mrf.mxu0
      %v3359 = vadd.f32 %v3270, %v3358
      %3360 = vmatmul.bf16.gmra.mxu0 %v1045
      %v3361 = vpop.f32.mrf.mxu0
      %v3362 = vadd.f32 %v3273, %v3361
      %v3363 = vpop.f32.mrf.mxu0
      %v3364 = vadd.f32 %v3275, %v3363
      %3365 = vmatmul.bf16.gmra.mxu0 %v1052
      %v3366 = vpop.f32.mrf.mxu0
      %v3367 = vadd.f32 %v3278, %v3366
      %v3368 = vpop.f32.mrf.mxu0
      %v3369 = vadd.f32 %v3280, %v3368
      %3370 = vmatmul.bf16.gmra.mxu0 %v1059
      %v3371 = vpop.f32.mrf.mxu0
      %v3372 = vadd.f32 %v3283, %v3371
      %v3373 = vpop.f32.mrf.mxu0
      %v3374 = vadd.f32 %v3285, %v3373
      %3375 = vmatmul.bf16.gmra.mxu0 %v1066
      %v3376 = vpop.f32.mrf.mxu0
      %v3377 = vadd.f32 %v3288, %v3376
      %v3378 = vpop.f32.mrf.mxu0
      %v3379 = vadd.f32 %v3290, %v3378
      %3380 = vmatmul.bf16.gmra.mxu0 %v1073
      %v3381 = vpop.f32.mrf.mxu0
      %v3382 = vadd.f32 %v3293, %v3381
      %v3383 = vpop.f32.mrf.mxu0
      %v3384 = vadd.f32 %v3295, %v3383
      %3385 = vmatmul.bf16.gmra.mxu0 %v1080
      %v3386 = vpop.f32.mrf.mxu0
      %v3387 = vadd.f32 %v3298, %v3386
      %v3388 = vpop.f32.mrf.mxu0
      %v3389 = vadd.f32 %v3300, %v3388
      %3390 = vmatmul.bf16.gmra.mxu0 %v1087
      %v3391 = vpop.f32.mrf.mxu0
      %v3392 = vadd.f32 %v3303, %v3391
      %v3393 = vpop.f32.mrf.mxu0
      %v3394 = vadd.f32 %v3305, %v3393
      %3395 = vmatmul.bf16.gmra.mxu0 %v1094
      %v3396 = vpop.f32.mrf.mxu0
      %v3397 = vadd.f32 %v3308, %v3396
      %v3398 = vpop.f32.mrf.mxu0
      %v3399 = vadd.f32 %v3310, %v3398
      %3400 = vmatmul.bf16.gmra.mxu0 %v1101
      %v3401 = vpop.f32.mrf.mxu0
      %v3402 = vadd.f32 %v3313, %v3401
      %v3403 = vpop.f32.mrf.mxu0
      %v3404 = vadd.f32 %v3315, %v3403
      %3405 = vmatmul.bf16.gmra.mxu0 %v1108
      %v3406 = vpop.f32.mrf.mxu0
      %v3407 = vadd.f32 %v3318, %v3406
      %v3408 = vpop.f32.mrf.mxu0
      %v3409 = vadd.f32 %v3320, %v3408
      %3410 = vdwg.mxu0
      %3411 = vmatpush.bf16.msra.mxu0 %v2084
      %3412 = vmatpush.bf16.msra.mxu0 %v2080
      %3413 = vmatpush.bf16.msra.mxu0 %v2076
      %3414 = vmatpush.bf16.msra.mxu0 %v2072
      %3415 = vmatpush.bf16.msra.mxu0 %v2068
      %3416 = vmatpush.bf16.msra.mxu0 %v2064
      %3417 = vmatpush.bf16.msra.mxu0 %v2060
      %3418 = vmatpush.bf16.msra.mxu0 %v2056
      %3419 = vmatmul.bf16.gmra.mxu0 %v1004
      %v3420 = vpop.f32.mrf.mxu0
      %v3421 = vadd.f32 %v3332, %v3420
      %v3422 = vpop.f32.mrf.mxu0
      %v3423 = vadd.f32 %v3334, %v3422
      %3424 = vmatmul.bf16.gmra.mxu0 %v1011
      %v3425 = vpop.f32.mrf.mxu0
      %v3426 = vadd.f32 %v3337, %v3425
      %v3427 = vpop.f32.mrf.mxu0
      %v3428 = vadd.f32 %v3339, %v3427
      %3429 = vmatmul.bf16.gmra.mxu0 %v1018
      %v3430 = vpop.f32.mrf.mxu0
      %v3431 = vadd.f32 %v3342, %v3430
      %v3432 = vpop.f32.mrf.mxu0
      %v3433 = vadd.f32 %v3344, %v3432
      %3434 = vmatmul.bf16.gmra.mxu0 %v1025
      %v3435 = vpop.f32.mrf.mxu0
      %v3436 = vadd.f32 %v3347, %v3435
      %v3437 = vpop.f32.mrf.mxu0
      %v3438 = vadd.f32 %v3349, %v3437
      %3439 = vmatmul.bf16.gmra.mxu0 %v1032
      %v3440 = vpop.f32.mrf.mxu0
      %v3441 = vadd.f32 %v3352, %v3440
      %v3442 = vpop.f32.mrf.mxu0
      %v3443 = vadd.f32 %v3354, %v3442
      %3444 = vmatmul.bf16.gmra.mxu0 %v1039
      %v3445 = vpop.f32.mrf.mxu0
      %v3446 = vadd.f32 %v3357, %v3445
      %v3447 = vpop.f32.mrf.mxu0
      %v3448 = vadd.f32 %v3359, %v3447
      %3449 = vmatmul.bf16.gmra.mxu0 %v1046
      %v3450 = vpop.f32.mrf.mxu0
      %v3451 = vadd.f32 %v3362, %v3450
      %v3452 = vpop.f32.mrf.mxu0
      %v3453 = vadd.f32 %v3364, %v3452
      %3454 = vmatmul.bf16.gmra.mxu0 %v1053
      %v3455 = vpop.f32.mrf.mxu0
      %v3456 = vadd.f32 %v3367, %v3455
      %v3457 = vpop.f32.mrf.mxu0
      %v3458 = vadd.f32 %v3369, %v3457
      %3459 = vmatmul.bf16.gmra.mxu0 %v1060
      %v3460 = vpop.f32.mrf.mxu0
      %v3461 = vadd.f32 %v3372, %v3460
      %v3462 = vpop.f32.mrf.mxu0
      %v3463 = vadd.f32 %v3374, %v3462
      %3464 = vmatmul.bf16.gmra.mxu0 %v1067
      %v3465 = vpop.f32.mrf.mxu0
      %v3466 = vadd.f32 %v3377, %v3465
      %v3467 = vpop.f32.mrf.mxu0
      %v3468 = vadd.f32 %v3379, %v3467
      %3469 = vmatmul.bf16.gmra.mxu0 %v1074
      %v3470 = vpop.f32.mrf.mxu0
      %v3471 = vadd.f32 %v3382, %v3470
      %v3472 = vpop.f32.mrf.mxu0
      %v3473 = vadd.f32 %v3384, %v3472
      %3474 = vmatmul.bf16.gmra.mxu0 %v1081
      %v3475 = vpop.f32.mrf.mxu0
      %v3476 = vadd.f32 %v3387, %v3475
      %v3477 = vpop.f32.mrf.mxu0
      %v3478 = vadd.f32 %v3389, %v3477
      %3479 = vmatmul.bf16.gmra.mxu0 %v1088
      %v3480 = vpop.f32.mrf.mxu0
      %v3481 = vadd.f32 %v3392, %v3480
      %v3482 = vpop.f32.mrf.mxu0
      %v3483 = vadd.f32 %v3394, %v3482
      %3484 = vmatmul.bf16.gmra.mxu0 %v1095
      %v3485 = vpop.f32.mrf.mxu0
      %v3486 = vadd.f32 %v3397, %v3485
      %v3487 = vpop.f32.mrf.mxu0
      %v3488 = vadd.f32 %v3399, %v3487
      %3489 = vmatmul.bf16.gmra.mxu0 %v1102
      %v3490 = vpop.f32.mrf.mxu0
      %v3491 = vadd.f32 %v3402, %v3490
      %v3492 = vpop.f32.mrf.mxu0
      %v3493 = vadd.f32 %v3404, %v3492
      %3494 = vmatmul.bf16.gmra.mxu0 %v1109
      %v3495 = vpop.f32.mrf.mxu0
      %v3496 = vadd.f32 %v3407, %v3495
      %v3497 = vpop.f32.mrf.mxu0
      %v3498 = vadd.f32 %v3409, %v3497
      %3499 = vdwg.mxu0
      %3500 = vmatpush.bf16.msra.mxu0 %v2116
      %3501 = vmatpush.bf16.msra.mxu0 %v2112
      %3502 = vmatpush.bf16.msra.mxu0 %v2108
      %3503 = vmatpush.bf16.msra.mxu0 %v2104
      %3504 = vmatpush.bf16.msra.mxu0 %v2100
      %3505 = vmatpush.bf16.msra.mxu0 %v2096
      %3506 = vmatpush.bf16.msra.mxu0 %v2092
      %3507 = vmatpush.bf16.msra.mxu0 %v2088
      %3508 = vmatmul.bf16.gmra.mxu0 %v1005
      %v3509 = vpop.f32.mrf.mxu0
      %v3510 = vadd.f32 %v3421, %v3509
      %v3511 = vpop.f32.mrf.mxu0
      %v3512 = vadd.f32 %v3423, %v3511
      %3513 = vmatmul.bf16.gmra.mxu0 %v1012
      %v3514 = vpop.f32.mrf.mxu0
      %v3515 = vadd.f32 %v3426, %v3514
      %v3516 = vpop.f32.mrf.mxu0
      %v3517 = vadd.f32 %v3428, %v3516
      %3518 = vmatmul.bf16.gmra.mxu0 %v1019
      %v3519 = vpop.f32.mrf.mxu0
      %v3520 = vadd.f32 %v3431, %v3519
      %v3521 = vpop.f32.mrf.mxu0
      %v3522 = vadd.f32 %v3433, %v3521
      %3523 = vmatmul.bf16.gmra.mxu0 %v1026
      %v3524 = vpop.f32.mrf.mxu0
      %v3525 = vadd.f32 %v3436, %v3524
      %v3526 = vpop.f32.mrf.mxu0
      %v3527 = vadd.f32 %v3438, %v3526
      %3528 = vmatmul.bf16.gmra.mxu0 %v1033
      %v3529 = vpop.f32.mrf.mxu0
      %v3530 = vadd.f32 %v3441, %v3529
      %v3531 = vpop.f32.mrf.mxu0
      %v3532 = vadd.f32 %v3443, %v3531
      %3533 = vmatmul.bf16.gmra.mxu0 %v1040
      %v3534 = vpop.f32.mrf.mxu0
      %v3535 = vadd.f32 %v3446, %v3534
      %v3536 = vpop.f32.mrf.mxu0
      %v3537 = vadd.f32 %v3448, %v3536
      %3538 = vmatmul.bf16.gmra.mxu0 %v1047
      %v3539 = vpop.f32.mrf.mxu0
      %v3540 = vadd.f32 %v3451, %v3539
      %v3541 = vpop.f32.mrf.mxu0
      %v3542 = vadd.f32 %v3453, %v3541
      %3543 = vmatmul.bf16.gmra.mxu0 %v1054
      %v3544 = vpop.f32.mrf.mxu0
      %v3545 = vadd.f32 %v3456, %v3544
      %v3546 = vpop.f32.mrf.mxu0
      %v3547 = vadd.f32 %v3458, %v3546
      %3548 = vmatmul.bf16.gmra.mxu0 %v1061
      %v3549 = vpop.f32.mrf.mxu0
      %v3550 = vadd.f32 %v3461, %v3549
      %v3551 = vpop.f32.mrf.mxu0
      %v3552 = vadd.f32 %v3463, %v3551
      %3553 = vmatmul.bf16.gmra.mxu0 %v1068
      %v3554 = vpop.f32.mrf.mxu0
      %v3555 = vadd.f32 %v3466, %v3554
      %v3556 = vpop.f32.mrf.mxu0
      %v3557 = vadd.f32 %v3468, %v3556
      %3558 = vmatmul.bf16.gmra.mxu0 %v1075
      %v3559 = vpop.f32.mrf.mxu0
      %v3560 = vadd.f32 %v3471, %v3559
      %v3561 = vpop.f32.mrf.mxu0
      %v3562 = vadd.f32 %v3473, %v3561
      %3563 = vmatmul.bf16.gmra.mxu0 %v1082
      %v3564 = vpop.f32.mrf.mxu0
      %v3565 = vadd.f32 %v3476, %v3564
      %v3566 = vpop.f32.mrf.mxu0
      %v3567 = vadd.f32 %v3478, %v3566
      %3568 = vmatmul.bf16.gmra.mxu0 %v1089
      %v3569 = vpop.f32.mrf.mxu0
      %v3570 = vadd.f32 %v3481, %v3569
      %v3571 = vpop.f32.mrf.mxu0
      %v3572 = vadd.f32 %v3483, %v3571
      %3573 = vmatmul.bf16.gmra.mxu0 %v1096
      %v3574 = vpop.f32.mrf.mxu0
      %v3575 = vadd.f32 %v3486, %v3574
      %v3576 = vpop.f32.mrf.mxu0
      %v3577 = vadd.f32 %v3488, %v3576
      %3578 = vmatmul.bf16.gmra.mxu0 %v1103
      %v3579 = vpop.f32.mrf.mxu0
      %v3580 = vadd.f32 %v3491, %v3579
      %v3581 = vpop.f32.mrf.mxu0
      %v3582 = vadd.f32 %v3493, %v3581
      %3583 = vmatmul.bf16.gmra.mxu0 %v1110
      %v3584 = vpop.f32.mrf.mxu0
      %v3585 = vadd.f32 %v3496, %v3584
      %v3586 = vpop.f32.mrf.mxu0
      %v3587 = vadd.f32 %v3498, %v3586
      %3588 = vdwg.mxu0
      %3589 = vmatpush.bf16.msra.mxu0 %v1925
      %3590 = vmatpush.bf16.msra.mxu0 %v1921
      %3591 = vmatpush.bf16.msra.mxu0 %v1917
      %3592 = vmatpush.bf16.msra.mxu0 %v1913
      %3593 = vmatpush.bf16.msra.mxu0 %v1909
      %3594 = vmatpush.bf16.msra.mxu0 %v1905
      %3595 = vmatpush.bf16.msra.mxu0 %v1901
      %3596 = vmatpush.bf16.msra.mxu0 %v1897
      %3597 = vmatmul.bf16.gmra.mxu0 %v999
      %v3598 = vpop.f32.mrf.mxu0
      %v3599 = vadd.f32 %v641, %v3598
      %v3600 = vpop.f32.mrf.mxu0
      %v3601 = vadd.f32 %v641, %v3600
      %3602 = vmatmul.bf16.gmra.mxu0 %v1006
      %v3603 = vpop.f32.mrf.mxu0
      %v3604 = vadd.f32 %v641, %v3603
      %v3605 = vpop.f32.mrf.mxu0
      %v3606 = vadd.f32 %v641, %v3605
      %3607 = vmatmul.bf16.gmra.mxu0 %v1013
      %v3608 = vpop.f32.mrf.mxu0
      %v3609 = vadd.f32 %v641, %v3608
      %v3610 = vpop.f32.mrf.mxu0
      %v3611 = vadd.f32 %v641, %v3610
      %3612 = vmatmul.bf16.gmra.mxu0 %v1020
      %v3613 = vpop.f32.mrf.mxu0
      %v3614 = vadd.f32 %v641, %v3613
      %v3615 = vpop.f32.mrf.mxu0
      %v3616 = vadd.f32 %v641, %v3615
      %3617 = vmatmul.bf16.gmra.mxu0 %v1027
      %v3618 = vpop.f32.mrf.mxu0
      %v3619 = vadd.f32 %v641, %v3618
      %v3620 = vpop.f32.mrf.mxu0
      %v3621 = vadd.f32 %v641, %v3620
      %3622 = vmatmul.bf16.gmra.mxu0 %v1034
      %v3623 = vpop.f32.mrf.mxu0
      %v3624 = vadd.f32 %v641, %v3623
      %v3625 = vpop.f32.mrf.mxu0
      %v3626 = vadd.f32 %v641, %v3625
      %3627 = vmatmul.bf16.gmra.mxu0 %v1041
      %v3628 = vpop.f32.mrf.mxu0
      %v3629 = vadd.f32 %v641, %v3628
      %v3630 = vpop.f32.mrf.mxu0
      %v3631 = vadd.f32 %v641, %v3630
      %3632 = vmatmul.bf16.gmra.mxu0 %v1048
      %v3633 = vpop.f32.mrf.mxu0
      %v3634 = vadd.f32 %v641, %v3633
      %v3635 = vpop.f32.mrf.mxu0
      %v3636 = vadd.f32 %v641, %v3635
      %3637 = vmatmul.bf16.gmra.mxu0 %v1055
      %v3638 = vpop.f32.mrf.mxu0
      %v3639 = vadd.f32 %v641, %v3638
      %v3640 = vpop.f32.mrf.mxu0
      %v3641 = vadd.f32 %v641, %v3640
      %3642 = vmatmul.bf16.gmra.mxu0 %v1062
      %v3643 = vpop.f32.mrf.mxu0
      %v3644 = vadd.f32 %v641, %v3643
      %v3645 = vpop.f32.mrf.mxu0
      %v3646 = vadd.f32 %v641, %v3645
      %3647 = vmatmul.bf16.gmra.mxu0 %v1069
      %v3648 = vpop.f32.mrf.mxu0
      %v3649 = vadd.f32 %v641, %v3648
      %v3650 = vpop.f32.mrf.mxu0
      %v3651 = vadd.f32 %v641, %v3650
      %3652 = vmatmul.bf16.gmra.mxu0 %v1076
      %v3653 = vpop.f32.mrf.mxu0
      %v3654 = vadd.f32 %v641, %v3653
      %v3655 = vpop.f32.mrf.mxu0
      %v3656 = vadd.f32 %v641, %v3655
      %3657 = vmatmul.bf16.gmra.mxu0 %v1083
      %v3658 = vpop.f32.mrf.mxu0
      %v3659 = vadd.f32 %v641, %v3658
      %v3660 = vpop.f32.mrf.mxu0
      %v3661 = vadd.f32 %v641, %v3660
      %3662 = vmatmul.bf16.gmra.mxu0 %v1090
      %v3663 = vpop.f32.mrf.mxu0
      %v3664 = vadd.f32 %v641, %v3663
      %v3665 = vpop.f32.mrf.mxu0
      %v3666 = vadd.f32 %v641, %v3665
      %3667 = vmatmul.bf16.gmra.mxu0 %v1097
      %v3668 = vpop.f32.mrf.mxu0
      %v3669 = vadd.f32 %v641, %v3668
      %v3670 = vpop.f32.mrf.mxu0
      %v3671 = vadd.f32 %v641, %v3670
      %3672 = vmatmul.bf16.gmra.mxu0 %v1104
      %v3673 = vpop.f32.mrf.mxu0
      %v3674 = vadd.f32 %v641, %v3673
      %v3675 = vpop.f32.mrf.mxu0
      %v3676 = vadd.f32 %v641, %v3675
      %3677 = vdwg.mxu0
      %3678 = vmatpush.bf16.msra.mxu0 %v1957
      %3679 = vmatpush.bf16.msra.mxu0 %v1953
      %3680 = vmatpush.bf16.msra.mxu0 %v1949
      %3681 = vmatpush.bf16.msra.mxu0 %v1945
      %3682 = vmatpush.bf16.msra.mxu0 %v1941
      %3683 = vmatpush.bf16.msra.mxu0 %v1937
      %3684 = vmatpush.bf16.msra.mxu0 %v1933
      %3685 = vmatpush.bf16.msra.mxu0 %v1929
      %3686 = vmatmul.bf16.gmra.mxu0 %v1000
      %v3687 = vpop.f32.mrf.mxu0
      %v3688 = vadd.f32 %v3599, %v3687
      %v3689 = vpop.f32.mrf.mxu0
      %v3690 = vadd.f32 %v3601, %v3689
      %3691 = vmatmul.bf16.gmra.mxu0 %v1007
      %v3692 = vpop.f32.mrf.mxu0
      %v3693 = vadd.f32 %v3604, %v3692
      %v3694 = vpop.f32.mrf.mxu0
      %v3695 = vadd.f32 %v3606, %v3694
      %3696 = vmatmul.bf16.gmra.mxu0 %v1014
      %v3697 = vpop.f32.mrf.mxu0
      %v3698 = vadd.f32 %v3609, %v3697
      %v3699 = vpop.f32.mrf.mxu0
      %v3700 = vadd.f32 %v3611, %v3699
      %3701 = vmatmul.bf16.gmra.mxu0 %v1021
      %v3702 = vpop.f32.mrf.mxu0
      %v3703 = vadd.f32 %v3614, %v3702
      %v3704 = vpop.f32.mrf.mxu0
      %v3705 = vadd.f32 %v3616, %v3704
      %3706 = vmatmul.bf16.gmra.mxu0 %v1028
      %v3707 = vpop.f32.mrf.mxu0
      %v3708 = vadd.f32 %v3619, %v3707
      %v3709 = vpop.f32.mrf.mxu0
      %v3710 = vadd.f32 %v3621, %v3709
      %3711 = vmatmul.bf16.gmra.mxu0 %v1035
      %v3712 = vpop.f32.mrf.mxu0
      %v3713 = vadd.f32 %v3624, %v3712
      %v3714 = vpop.f32.mrf.mxu0
      %v3715 = vadd.f32 %v3626, %v3714
      %3716 = vmatmul.bf16.gmra.mxu0 %v1042
      %v3717 = vpop.f32.mrf.mxu0
      %v3718 = vadd.f32 %v3629, %v3717
      %v3719 = vpop.f32.mrf.mxu0
      %v3720 = vadd.f32 %v3631, %v3719
      %3721 = vmatmul.bf16.gmra.mxu0 %v1049
      %v3722 = vpop.f32.mrf.mxu0
      %v3723 = vadd.f32 %v3634, %v3722
      %v3724 = vpop.f32.mrf.mxu0
      %v3725 = vadd.f32 %v3636, %v3724
      %3726 = vmatmul.bf16.gmra.mxu0 %v1056
      %v3727 = vpop.f32.mrf.mxu0
      %v3728 = vadd.f32 %v3639, %v3727
      %v3729 = vpop.f32.mrf.mxu0
      %v3730 = vadd.f32 %v3641, %v3729
      %3731 = vmatmul.bf16.gmra.mxu0 %v1063
      %v3732 = vpop.f32.mrf.mxu0
      %v3733 = vadd.f32 %v3644, %v3732
      %v3734 = vpop.f32.mrf.mxu0
      %v3735 = vadd.f32 %v3646, %v3734
      %3736 = vmatmul.bf16.gmra.mxu0 %v1070
      %v3737 = vpop.f32.mrf.mxu0
      %v3738 = vadd.f32 %v3649, %v3737
      %v3739 = vpop.f32.mrf.mxu0
      %v3740 = vadd.f32 %v3651, %v3739
      %3741 = vmatmul.bf16.gmra.mxu0 %v1077
      %v3742 = vpop.f32.mrf.mxu0
      %v3743 = vadd.f32 %v3654, %v3742
      %v3744 = vpop.f32.mrf.mxu0
      %v3745 = vadd.f32 %v3656, %v3744
      %3746 = vmatmul.bf16.gmra.mxu0 %v1084
      %v3747 = vpop.f32.mrf.mxu0
      %v3748 = vadd.f32 %v3659, %v3747
      %v3749 = vpop.f32.mrf.mxu0
      %v3750 = vadd.f32 %v3661, %v3749
      %3751 = vmatmul.bf16.gmra.mxu0 %v1091
      %v3752 = vpop.f32.mrf.mxu0
      %v3753 = vadd.f32 %v3664, %v3752
      %v3754 = vpop.f32.mrf.mxu0
      %v3755 = vadd.f32 %v3666, %v3754
      %3756 = vmatmul.bf16.gmra.mxu0 %v1098
      %v3757 = vpop.f32.mrf.mxu0
      %v3758 = vadd.f32 %v3669, %v3757
      %v3759 = vpop.f32.mrf.mxu0
      %v3760 = vadd.f32 %v3671, %v3759
      %3761 = vmatmul.bf16.gmra.mxu0 %v1105
      %v3762 = vpop.f32.mrf.mxu0
      %v3763 = vadd.f32 %v3674, %v3762
      %v3764 = vpop.f32.mrf.mxu0
      %v3765 = vadd.f32 %v3676, %v3764
      %3766 = vdwg.mxu0
      %3767 = vmatpush.bf16.msra.mxu0 %v1989
      %3768 = vmatpush.bf16.msra.mxu0 %v1985
      %3769 = vmatpush.bf16.msra.mxu0 %v1981
      %3770 = vmatpush.bf16.msra.mxu0 %v1977
      %3771 = vmatpush.bf16.msra.mxu0 %v1973
      %3772 = vmatpush.bf16.msra.mxu0 %v1969
      %3773 = vmatpush.bf16.msra.mxu0 %v1965
      %3774 = vmatpush.bf16.msra.mxu0 %v1961
      %3775 = vmatmul.bf16.gmra.mxu0 %v1001
      %v3776 = vpop.f32.mrf.mxu0
      %v3777 = vadd.f32 %v3688, %v3776
      %v3778 = vpop.f32.mrf.mxu0
      %v3779 = vadd.f32 %v3690, %v3778
      %3780 = vmatmul.bf16.gmra.mxu0 %v1008
      %v3781 = vpop.f32.mrf.mxu0
      %v3782 = vadd.f32 %v3693, %v3781
      %v3783 = vpop.f32.mrf.mxu0
      %v3784 = vadd.f32 %v3695, %v3783
      %3785 = vmatmul.bf16.gmra.mxu0 %v1015
      %v3786 = vpop.f32.mrf.mxu0
      %v3787 = vadd.f32 %v3698, %v3786
      %v3788 = vpop.f32.mrf.mxu0
      %v3789 = vadd.f32 %v3700, %v3788
      %3790 = vmatmul.bf16.gmra.mxu0 %v1022
      %v3791 = vpop.f32.mrf.mxu0
      %v3792 = vadd.f32 %v3703, %v3791
      %v3793 = vpop.f32.mrf.mxu0
      %v3794 = vadd.f32 %v3705, %v3793
      %3795 = vmatmul.bf16.gmra.mxu0 %v1029
      %v3796 = vpop.f32.mrf.mxu0
      %v3797 = vadd.f32 %v3708, %v3796
      %v3798 = vpop.f32.mrf.mxu0
      %v3799 = vadd.f32 %v3710, %v3798
      %3800 = vmatmul.bf16.gmra.mxu0 %v1036
      %v3801 = vpop.f32.mrf.mxu0
      %v3802 = vadd.f32 %v3713, %v3801
      %v3803 = vpop.f32.mrf.mxu0
      %v3804 = vadd.f32 %v3715, %v3803
      %3805 = vmatmul.bf16.gmra.mxu0 %v1043
      %v3806 = vpop.f32.mrf.mxu0
      %v3807 = vadd.f32 %v3718, %v3806
      %v3808 = vpop.f32.mrf.mxu0
      %v3809 = vadd.f32 %v3720, %v3808
      %3810 = vmatmul.bf16.gmra.mxu0 %v1050
      %v3811 = vpop.f32.mrf.mxu0
      %v3812 = vadd.f32 %v3723, %v3811
      %v3813 = vpop.f32.mrf.mxu0
      %v3814 = vadd.f32 %v3725, %v3813
      %3815 = vmatmul.bf16.gmra.mxu0 %v1057
      %v3816 = vpop.f32.mrf.mxu0
      %v3817 = vadd.f32 %v3728, %v3816
      %v3818 = vpop.f32.mrf.mxu0
      %v3819 = vadd.f32 %v3730, %v3818
      %3820 = vmatmul.bf16.gmra.mxu0 %v1064
      %v3821 = vpop.f32.mrf.mxu0
      %v3822 = vadd.f32 %v3733, %v3821
      %v3823 = vpop.f32.mrf.mxu0
      %v3824 = vadd.f32 %v3735, %v3823
      %3825 = vmatmul.bf16.gmra.mxu0 %v1071
      %v3826 = vpop.f32.mrf.mxu0
      %v3827 = vadd.f32 %v3738, %v3826
      %v3828 = vpop.f32.mrf.mxu0
      %v3829 = vadd.f32 %v3740, %v3828
      %3830 = vmatmul.bf16.gmra.mxu0 %v1078
      %v3831 = vpop.f32.mrf.mxu0
      %v3832 = vadd.f32 %v3743, %v3831
      %v3833 = vpop.f32.mrf.mxu0
      %v3834 = vadd.f32 %v3745, %v3833
      %3835 = vmatmul.bf16.gmra.mxu0 %v1085
      %v3836 = vpop.f32.mrf.mxu0
      %v3837 = vadd.f32 %v3748, %v3836
      %v3838 = vpop.f32.mrf.mxu0
      %v3839 = vadd.f32 %v3750, %v3838
      %3840 = vmatmul.bf16.gmra.mxu0 %v1092
      %v3841 = vpop.f32.mrf.mxu0
      %v3842 = vadd.f32 %v3753, %v3841
      %v3843 = vpop.f32.mrf.mxu0
      %v3844 = vadd.f32 %v3755, %v3843
      %3845 = vmatmul.bf16.gmra.mxu0 %v1099
      %v3846 = vpop.f32.mrf.mxu0
      %v3847 = vadd.f32 %v3758, %v3846
      %v3848 = vpop.f32.mrf.mxu0
      %v3849 = vadd.f32 %v3760, %v3848
      %3850 = vmatmul.bf16.gmra.mxu0 %v1106
      %v3851 = vpop.f32.mrf.mxu0
      %v3852 = vadd.f32 %v3763, %v3851
      %v3853 = vpop.f32.mrf.mxu0
      %v3854 = vadd.f32 %v3765, %v3853
      %3855 = vdwg.mxu0
      %3856 = vmatpush.bf16.msra.mxu0 %v2021
      %3857 = vmatpush.bf16.msra.mxu0 %v2017
      %3858 = vmatpush.bf16.msra.mxu0 %v2013
      %3859 = vmatpush.bf16.msra.mxu0 %v2009
      %3860 = vmatpush.bf16.msra.mxu0 %v2005
      %3861 = vmatpush.bf16.msra.mxu0 %v2001
      %3862 = vmatpush.bf16.msra.mxu0 %v1997
      %3863 = vmatpush.bf16.msra.mxu0 %v1993
      %3864 = vmatmul.bf16.gmra.mxu0 %v1002
      %v3865 = vpop.f32.mrf.mxu0
      %v3866 = vadd.f32 %v3777, %v3865
      %v3867 = vpop.f32.mrf.mxu0
      %v3868 = vadd.f32 %v3779, %v3867
      %3869 = vmatmul.bf16.gmra.mxu0 %v1009
      %v3870 = vpop.f32.mrf.mxu0
      %v3871 = vadd.f32 %v3782, %v3870
      %v3872 = vpop.f32.mrf.mxu0
      %v3873 = vadd.f32 %v3784, %v3872
      %3874 = vmatmul.bf16.gmra.mxu0 %v1016
      %v3875 = vpop.f32.mrf.mxu0
      %v3876 = vadd.f32 %v3787, %v3875
      %v3877 = vpop.f32.mrf.mxu0
      %v3878 = vadd.f32 %v3789, %v3877
      %3879 = vmatmul.bf16.gmra.mxu0 %v1023
      %v3880 = vpop.f32.mrf.mxu0
      %v3881 = vadd.f32 %v3792, %v3880
      %v3882 = vpop.f32.mrf.mxu0
      %v3883 = vadd.f32 %v3794, %v3882
      %3884 = vmatmul.bf16.gmra.mxu0 %v1030
      %v3885 = vpop.f32.mrf.mxu0
      %v3886 = vadd.f32 %v3797, %v3885
      %v3887 = vpop.f32.mrf.mxu0
      %v3888 = vadd.f32 %v3799, %v3887
      %3889 = vmatmul.bf16.gmra.mxu0 %v1037
      %v3890 = vpop.f32.mrf.mxu0
      %v3891 = vadd.f32 %v3802, %v3890
      %v3892 = vpop.f32.mrf.mxu0
      %v3893 = vadd.f32 %v3804, %v3892
      %3894 = vmatmul.bf16.gmra.mxu0 %v1044
      %v3895 = vpop.f32.mrf.mxu0
      %v3896 = vadd.f32 %v3807, %v3895
      %v3897 = vpop.f32.mrf.mxu0
      %v3898 = vadd.f32 %v3809, %v3897
      %3899 = vmatmul.bf16.gmra.mxu0 %v1051
      %v3900 = vpop.f32.mrf.mxu0
      %v3901 = vadd.f32 %v3812, %v3900
      %v3902 = vpop.f32.mrf.mxu0
      %v3903 = vadd.f32 %v3814, %v3902
      %3904 = vmatmul.bf16.gmra.mxu0 %v1058
      %v3905 = vpop.f32.mrf.mxu0
      %v3906 = vadd.f32 %v3817, %v3905
      %v3907 = vpop.f32.mrf.mxu0
      %v3908 = vadd.f32 %v3819, %v3907
      %3909 = vmatmul.bf16.gmra.mxu0 %v1065
      %v3910 = vpop.f32.mrf.mxu0
      %v3911 = vadd.f32 %v3822, %v3910
      %v3912 = vpop.f32.mrf.mxu0
      %v3913 = vadd.f32 %v3824, %v3912
      %3914 = vmatmul.bf16.gmra.mxu0 %v1072
      %v3915 = vpop.f32.mrf.mxu0
      %v3916 = vadd.f32 %v3827, %v3915
      %v3917 = vpop.f32.mrf.mxu0
      %v3918 = vadd.f32 %v3829, %v3917
      %3919 = vmatmul.bf16.gmra.mxu0 %v1079
      %v3920 = vpop.f32.mrf.mxu0
      %v3921 = vadd.f32 %v3832, %v3920
      %v3922 = vpop.f32.mrf.mxu0
      %v3923 = vadd.f32 %v3834, %v3922
      %3924 = vmatmul.bf16.gmra.mxu0 %v1086
      %v3925 = vpop.f32.mrf.mxu0
      %v3926 = vadd.f32 %v3837, %v3925
      %v3927 = vpop.f32.mrf.mxu0
      %v3928 = vadd.f32 %v3839, %v3927
      %3929 = vmatmul.bf16.gmra.mxu0 %v1093
      %v3930 = vpop.f32.mrf.mxu0
      %v3931 = vadd.f32 %v3842, %v3930
      %v3932 = vpop.f32.mrf.mxu0
      %v3933 = vadd.f32 %v3844, %v3932
      %3934 = vmatmul.bf16.gmra.mxu0 %v1100
      %v3935 = vpop.f32.mrf.mxu0
      %v3936 = vadd.f32 %v3847, %v3935
      %v3937 = vpop.f32.mrf.mxu0
      %v3938 = vadd.f32 %v3849, %v3937
      %3939 = vmatmul.bf16.gmra.mxu0 %v1107
      %v3940 = vpop.f32.mrf.mxu0
      %v3941 = vadd.f32 %v3852, %v3940
      %v3942 = vpop.f32.mrf.mxu0
      %v3943 = vadd.f32 %v3854, %v3942
      %3944 = vdwg.mxu0
      %3945 = vmatpush.bf16.msra.mxu0 %v2053
      %3946 = vmatpush.bf16.msra.mxu0 %v2049
      %3947 = vmatpush.bf16.msra.mxu0 %v2045
      %3948 = vmatpush.bf16.msra.mxu0 %v2041
      %3949 = vmatpush.bf16.msra.mxu0 %v2037
      %3950 = vmatpush.bf16.msra.mxu0 %v2033
      %3951 = vmatpush.bf16.msra.mxu0 %v2029
      %3952 = vmatpush.bf16.msra.mxu0 %v2025
      %3953 = vmatmul.bf16.gmra.mxu0 %v1003
      %v3954 = vpop.f32.mrf.mxu0
      %v3955 = vadd.f32 %v3866, %v3954
      %v3956 = vpop.f32.mrf.mxu0
      %v3957 = vadd.f32 %v3868, %v3956
      %3958 = vmatmul.bf16.gmra.mxu0 %v1010
      %v3959 = vpop.f32.mrf.mxu0
      %v3960 = vadd.f32 %v3871, %v3959
      %v3961 = vpop.f32.mrf.mxu0
      %v3962 = vadd.f32 %v3873, %v3961
      %3963 = vmatmul.bf16.gmra.mxu0 %v1017
      %v3964 = vpop.f32.mrf.mxu0
      %v3965 = vadd.f32 %v3876, %v3964
      %v3966 = vpop.f32.mrf.mxu0
      %v3967 = vadd.f32 %v3878, %v3966
      %3968 = vmatmul.bf16.gmra.mxu0 %v1024
      %v3969 = vpop.f32.mrf.mxu0
      %v3970 = vadd.f32 %v3881, %v3969
      %v3971 = vpop.f32.mrf.mxu0
      %v3972 = vadd.f32 %v3883, %v3971
      %3973 = vmatmul.bf16.gmra.mxu0 %v1031
      %v3974 = vpop.f32.mrf.mxu0
      %v3975 = vadd.f32 %v3886, %v3974
      %v3976 = vpop.f32.mrf.mxu0
      %v3977 = vadd.f32 %v3888, %v3976
      %3978 = vmatmul.bf16.gmra.mxu0 %v1038
      %v3979 = vpop.f32.mrf.mxu0
      %v3980 = vadd.f32 %v3891, %v3979
      %v3981 = vpop.f32.mrf.mxu0
      %v3982 = vadd.f32 %v3893, %v3981
      %3983 = vmatmul.bf16.gmra.mxu0 %v1045
      %v3984 = vpop.f32.mrf.mxu0
      %v3985 = vadd.f32 %v3896, %v3984
      %v3986 = vpop.f32.mrf.mxu0
      %v3987 = vadd.f32 %v3898, %v3986
      %3988 = vmatmul.bf16.gmra.mxu0 %v1052
      %v3989 = vpop.f32.mrf.mxu0
      %v3990 = vadd.f32 %v3901, %v3989
      %v3991 = vpop.f32.mrf.mxu0
      %v3992 = vadd.f32 %v3903, %v3991
      %3993 = vmatmul.bf16.gmra.mxu0 %v1059
      %v3994 = vpop.f32.mrf.mxu0
      %v3995 = vadd.f32 %v3906, %v3994
      %v3996 = vpop.f32.mrf.mxu0
      %v3997 = vadd.f32 %v3908, %v3996
      %3998 = vmatmul.bf16.gmra.mxu0 %v1066
      %v3999 = vpop.f32.mrf.mxu0
      %v4000 = vadd.f32 %v3911, %v3999
      %v4001 = vpop.f32.mrf.mxu0
      %v4002 = vadd.f32 %v3913, %v4001
      %4003 = vmatmul.bf16.gmra.mxu0 %v1073
      %v4004 = vpop.f32.mrf.mxu0
      %v4005 = vadd.f32 %v3916, %v4004
      %v4006 = vpop.f32.mrf.mxu0
      %v4007 = vadd.f32 %v3918, %v4006
      %4008 = vmatmul.bf16.gmra.mxu0 %v1080
      %v4009 = vpop.f32.mrf.mxu0
      %v4010 = vadd.f32 %v3921, %v4009
      %v4011 = vpop.f32.mrf.mxu0
      %v4012 = vadd.f32 %v3923, %v4011
      %4013 = vmatmul.bf16.gmra.mxu0 %v1087
      %v4014 = vpop.f32.mrf.mxu0
      %v4015 = vadd.f32 %v3926, %v4014
      %v4016 = vpop.f32.mrf.mxu0
      %v4017 = vadd.f32 %v3928, %v4016
      %4018 = vmatmul.bf16.gmra.mxu0 %v1094
      %v4019 = vpop.f32.mrf.mxu0
      %v4020 = vadd.f32 %v3931, %v4019
      %v4021 = vpop.f32.mrf.mxu0
      %v4022 = vadd.f32 %v3933, %v4021
      %4023 = vmatmul.bf16.gmra.mxu0 %v1101
      %v4024 = vpop.f32.mrf.mxu0
      %v4025 = vadd.f32 %v3936, %v4024
      %v4026 = vpop.f32.mrf.mxu0
      %v4027 = vadd.f32 %v3938, %v4026
      %4028 = vmatmul.bf16.gmra.mxu0 %v1108
      %v4029 = vpop.f32.mrf.mxu0
      %v4030 = vadd.f32 %v3941, %v4029
      %v4031 = vpop.f32.mrf.mxu0
      %v4032 = vadd.f32 %v3943, %v4031
      %4033 = vdwg.mxu0
      %4034 = vmatpush.bf16.msra.mxu0 %v2085
      %4035 = vmatpush.bf16.msra.mxu0 %v2081
      %4036 = vmatpush.bf16.msra.mxu0 %v2077
      %4037 = vmatpush.bf16.msra.mxu0 %v2073
      %4038 = vmatpush.bf16.msra.mxu0 %v2069
      %4039 = vmatpush.bf16.msra.mxu0 %v2065
      %4040 = vmatpush.bf16.msra.mxu0 %v2061
      %4041 = vmatpush.bf16.msra.mxu0 %v2057
      %4042 = vmatmul.bf16.gmra.mxu0 %v1004
      %v4043 = vpop.f32.mrf.mxu0
      %v4044 = vadd.f32 %v3955, %v4043
      %v4045 = vpop.f32.mrf.mxu0
      %v4046 = vadd.f32 %v3957, %v4045
      %4047 = vmatmul.bf16.gmra.mxu0 %v1011
      %v4048 = vpop.f32.mrf.mxu0
      %v4049 = vadd.f32 %v3960, %v4048
      %v4050 = vpop.f32.mrf.mxu0
      %v4051 = vadd.f32 %v3962, %v4050
      %4052 = vmatmul.bf16.gmra.mxu0 %v1018
      %v4053 = vpop.f32.mrf.mxu0
      %v4054 = vadd.f32 %v3965, %v4053
      %v4055 = vpop.f32.mrf.mxu0
      %v4056 = vadd.f32 %v3967, %v4055
      %4057 = vmatmul.bf16.gmra.mxu0 %v1025
      %v4058 = vpop.f32.mrf.mxu0
      %v4059 = vadd.f32 %v3970, %v4058
      %v4060 = vpop.f32.mrf.mxu0
      %v4061 = vadd.f32 %v3972, %v4060
      %4062 = vmatmul.bf16.gmra.mxu0 %v1032
      %v4063 = vpop.f32.mrf.mxu0
      %v4064 = vadd.f32 %v3975, %v4063
      %v4065 = vpop.f32.mrf.mxu0
      %v4066 = vadd.f32 %v3977, %v4065
      %4067 = vmatmul.bf16.gmra.mxu0 %v1039
      %v4068 = vpop.f32.mrf.mxu0
      %v4069 = vadd.f32 %v3980, %v4068
      %v4070 = vpop.f32.mrf.mxu0
      %v4071 = vadd.f32 %v3982, %v4070
      %4072 = vmatmul.bf16.gmra.mxu0 %v1046
      %v4073 = vpop.f32.mrf.mxu0
      %v4074 = vadd.f32 %v3985, %v4073
      %v4075 = vpop.f32.mrf.mxu0
      %v4076 = vadd.f32 %v3987, %v4075
      %4077 = vmatmul.bf16.gmra.mxu0 %v1053
      %v4078 = vpop.f32.mrf.mxu0
      %v4079 = vadd.f32 %v3990, %v4078
      %v4080 = vpop.f32.mrf.mxu0
      %v4081 = vadd.f32 %v3992, %v4080
      %4082 = vmatmul.bf16.gmra.mxu0 %v1060
      %v4083 = vpop.f32.mrf.mxu0
      %v4084 = vadd.f32 %v3995, %v4083
      %v4085 = vpop.f32.mrf.mxu0
      %v4086 = vadd.f32 %v3997, %v4085
      %4087 = vmatmul.bf16.gmra.mxu0 %v1067
      %v4088 = vpop.f32.mrf.mxu0
      %v4089 = vadd.f32 %v4000, %v4088
      %v4090 = vpop.f32.mrf.mxu0
      %v4091 = vadd.f32 %v4002, %v4090
      %4092 = vmatmul.bf16.gmra.mxu0 %v1074
      %v4093 = vpop.f32.mrf.mxu0
      %v4094 = vadd.f32 %v4005, %v4093
      %v4095 = vpop.f32.mrf.mxu0
      %v4096 = vadd.f32 %v4007, %v4095
      %4097 = vmatmul.bf16.gmra.mxu0 %v1081
      %v4098 = vpop.f32.mrf.mxu0
      %v4099 = vadd.f32 %v4010, %v4098
      %v4100 = vpop.f32.mrf.mxu0
      %v4101 = vadd.f32 %v4012, %v4100
      %4102 = vmatmul.bf16.gmra.mxu0 %v1088
      %v4103 = vpop.f32.mrf.mxu0
      %v4104 = vadd.f32 %v4015, %v4103
      %v4105 = vpop.f32.mrf.mxu0
      %v4106 = vadd.f32 %v4017, %v4105
      %4107 = vmatmul.bf16.gmra.mxu0 %v1095
      %v4108 = vpop.f32.mrf.mxu0
      %v4109 = vadd.f32 %v4020, %v4108
      %v4110 = vpop.f32.mrf.mxu0
      %v4111 = vadd.f32 %v4022, %v4110
      %4112 = vmatmul.bf16.gmra.mxu0 %v1102
      %v4113 = vpop.f32.mrf.mxu0
      %v4114 = vadd.f32 %v4025, %v4113
      %v4115 = vpop.f32.mrf.mxu0
      %v4116 = vadd.f32 %v4027, %v4115
      %4117 = vmatmul.bf16.gmra.mxu0 %v1109
      %v4118 = vpop.f32.mrf.mxu0
      %v4119 = vadd.f32 %v4030, %v4118
      %v4120 = vpop.f32.mrf.mxu0
      %v4121 = vadd.f32 %v4032, %v4120
      %4122 = vdwg.mxu0
      %4123 = vmatpush.bf16.msra.mxu0 %v2117
      %4124 = vmatpush.bf16.msra.mxu0 %v2113
      %4125 = vmatpush.bf16.msra.mxu0 %v2109
      %4126 = vmatpush.bf16.msra.mxu0 %v2105
      %4127 = vmatpush.bf16.msra.mxu0 %v2101
      %4128 = vmatpush.bf16.msra.mxu0 %v2097
      %4129 = vmatpush.bf16.msra.mxu0 %v2093
      %4130 = vmatpush.bf16.msra.mxu0 %v2089
      %4131 = vmatmul.bf16.gmra.mxu0 %v1005
      %v4132 = vpop.f32.mrf.mxu0
      %v4133 = vadd.f32 %v4044, %v4132
      %v4134 = vpop.f32.mrf.mxu0
      %v4135 = vadd.f32 %v4046, %v4134
      %4136 = vmatmul.bf16.gmra.mxu0 %v1012
      %v4137 = vpop.f32.mrf.mxu0
      %v4138 = vadd.f32 %v4049, %v4137
      %v4139 = vpop.f32.mrf.mxu0
      %v4140 = vadd.f32 %v4051, %v4139
      %4141 = vmatmul.bf16.gmra.mxu0 %v1019
      %v4142 = vpop.f32.mrf.mxu0
      %v4143 = vadd.f32 %v4054, %v4142
      %v4144 = vpop.f32.mrf.mxu0
      %v4145 = vadd.f32 %v4056, %v4144
      %4146 = vmatmul.bf16.gmra.mxu0 %v1026
      %v4147 = vpop.f32.mrf.mxu0
      %v4148 = vadd.f32 %v4059, %v4147
      %v4149 = vpop.f32.mrf.mxu0
      %v4150 = vadd.f32 %v4061, %v4149
      %4151 = vmatmul.bf16.gmra.mxu0 %v1033
      %v4152 = vpop.f32.mrf.mxu0
      %v4153 = vadd.f32 %v4064, %v4152
      %v4154 = vpop.f32.mrf.mxu0
      %v4155 = vadd.f32 %v4066, %v4154
      %4156 = vmatmul.bf16.gmra.mxu0 %v1040
      %v4157 = vpop.f32.mrf.mxu0
      %v4158 = vadd.f32 %v4069, %v4157
      %v4159 = vpop.f32.mrf.mxu0
      %v4160 = vadd.f32 %v4071, %v4159
      %4161 = vmatmul.bf16.gmra.mxu0 %v1047
      %v4162 = vpop.f32.mrf.mxu0
      %v4163 = vadd.f32 %v4074, %v4162
      %v4164 = vpop.f32.mrf.mxu0
      %v4165 = vadd.f32 %v4076, %v4164
      %4166 = vmatmul.bf16.gmra.mxu0 %v1054
      %v4167 = vpop.f32.mrf.mxu0
      %v4168 = vadd.f32 %v4079, %v4167
      %v4169 = vpop.f32.mrf.mxu0
      %v4170 = vadd.f32 %v4081, %v4169
      %4171 = vmatmul.bf16.gmra.mxu0 %v1061
      %v4172 = vpop.f32.mrf.mxu0
      %v4173 = vadd.f32 %v4084, %v4172
      %v4174 = vpop.f32.mrf.mxu0
      %v4175 = vadd.f32 %v4086, %v4174
      %4176 = vmatmul.bf16.gmra.mxu0 %v1068
      %v4177 = vpop.f32.mrf.mxu0
      %v4178 = vadd.f32 %v4089, %v4177
      %v4179 = vpop.f32.mrf.mxu0
      %v4180 = vadd.f32 %v4091, %v4179
      %4181 = vmatmul.bf16.gmra.mxu0 %v1075
      %v4182 = vpop.f32.mrf.mxu0
      %v4183 = vadd.f32 %v4094, %v4182
      %v4184 = vpop.f32.mrf.mxu0
      %v4185 = vadd.f32 %v4096, %v4184
      %4186 = vmatmul.bf16.gmra.mxu0 %v1082
      %v4187 = vpop.f32.mrf.mxu0
      %v4188 = vadd.f32 %v4099, %v4187
      %v4189 = vpop.f32.mrf.mxu0
      %v4190 = vadd.f32 %v4101, %v4189
      %4191 = vmatmul.bf16.gmra.mxu0 %v1089
      %v4192 = vpop.f32.mrf.mxu0
      %v4193 = vadd.f32 %v4104, %v4192
      %v4194 = vpop.f32.mrf.mxu0
      %v4195 = vadd.f32 %v4106, %v4194
      %4196 = vmatmul.bf16.gmra.mxu0 %v1096
      %v4197 = vpop.f32.mrf.mxu0
      %v4198 = vadd.f32 %v4109, %v4197
      %v4199 = vpop.f32.mrf.mxu0
      %v4200 = vadd.f32 %v4111, %v4199
      %4201 = vmatmul.bf16.gmra.mxu0 %v1103
      %v4202 = vpop.f32.mrf.mxu0
      %v4203 = vadd.f32 %v4114, %v4202
      %v4204 = vpop.f32.mrf.mxu0
      %v4205 = vadd.f32 %v4116, %v4204
      %4206 = vmatmul.bf16.gmra.mxu0 %v1110
      %v4207 = vpop.f32.mrf.mxu0
      %v4208 = vadd.f32 %v4119, %v4207
      %v4209 = vpop.f32.mrf.mxu0
      %v4210 = vadd.f32 %v4121, %v4209
      %4211 = vdwg.mxu0
      %4212 = vmatpush.bf16.msra.mxu0 %v1926
      %4213 = vmatpush.bf16.msra.mxu0 %v1922
      %4214 = vmatpush.bf16.msra.mxu0 %v1918
      %4215 = vmatpush.bf16.msra.mxu0 %v1914
      %4216 = vmatpush.bf16.msra.mxu0 %v1910
      %4217 = vmatpush.bf16.msra.mxu0 %v1906
      %4218 = vmatpush.bf16.msra.mxu0 %v1902
      %4219 = vmatpush.bf16.msra.mxu0 %v1898
      %4220 = vmatmul.bf16.gmra.mxu0 %v999
      %v4221 = vpop.f32.mrf.mxu0
      %v4222 = vadd.f32 %v642, %v4221
      %v4223 = vpop.f32.mrf.mxu0
      %v4224 = vadd.f32 %v642, %v4223
      %4225 = vmatmul.bf16.gmra.mxu0 %v1006
      %v4226 = vpop.f32.mrf.mxu0
      %v4227 = vadd.f32 %v642, %v4226
      %v4228 = vpop.f32.mrf.mxu0
      %v4229 = vadd.f32 %v642, %v4228
      %4230 = vmatmul.bf16.gmra.mxu0 %v1013
      %v4231 = vpop.f32.mrf.mxu0
      %v4232 = vadd.f32 %v642, %v4231
      %v4233 = vpop.f32.mrf.mxu0
      %v4234 = vadd.f32 %v642, %v4233
      %4235 = vmatmul.bf16.gmra.mxu0 %v1020
      %v4236 = vpop.f32.mrf.mxu0
      %v4237 = vadd.f32 %v642, %v4236
      %v4238 = vpop.f32.mrf.mxu0
      %v4239 = vadd.f32 %v642, %v4238
      %4240 = vmatmul.bf16.gmra.mxu0 %v1027
      %v4241 = vpop.f32.mrf.mxu0
      %v4242 = vadd.f32 %v642, %v4241
      %v4243 = vpop.f32.mrf.mxu0
      %v4244 = vadd.f32 %v642, %v4243
      %4245 = vmatmul.bf16.gmra.mxu0 %v1034
      %v4246 = vpop.f32.mrf.mxu0
      %v4247 = vadd.f32 %v642, %v4246
      %v4248 = vpop.f32.mrf.mxu0
      %v4249 = vadd.f32 %v642, %v4248
      %4250 = vmatmul.bf16.gmra.mxu0 %v1041
      %v4251 = vpop.f32.mrf.mxu0
      %v4252 = vadd.f32 %v642, %v4251
      %v4253 = vpop.f32.mrf.mxu0
      %v4254 = vadd.f32 %v642, %v4253
      %4255 = vmatmul.bf16.gmra.mxu0 %v1048
      %v4256 = vpop.f32.mrf.mxu0
      %v4257 = vadd.f32 %v642, %v4256
      %v4258 = vpop.f32.mrf.mxu0
      %v4259 = vadd.f32 %v642, %v4258
      %4260 = vmatmul.bf16.gmra.mxu0 %v1055
      %v4261 = vpop.f32.mrf.mxu0
      %v4262 = vadd.f32 %v642, %v4261
      %v4263 = vpop.f32.mrf.mxu0
      %v4264 = vadd.f32 %v642, %v4263
      %4265 = vmatmul.bf16.gmra.mxu0 %v1062
      %v4266 = vpop.f32.mrf.mxu0
      %v4267 = vadd.f32 %v642, %v4266
      %v4268 = vpop.f32.mrf.mxu0
      %v4269 = vadd.f32 %v642, %v4268
      %4270 = vmatmul.bf16.gmra.mxu0 %v1069
      %v4271 = vpop.f32.mrf.mxu0
      %v4272 = vadd.f32 %v642, %v4271
      %v4273 = vpop.f32.mrf.mxu0
      %v4274 = vadd.f32 %v642, %v4273
      %4275 = vmatmul.bf16.gmra.mxu0 %v1076
      %v4276 = vpop.f32.mrf.mxu0
      %v4277 = vadd.f32 %v642, %v4276
      %v4278 = vpop.f32.mrf.mxu0
      %v4279 = vadd.f32 %v642, %v4278
      %4280 = vmatmul.bf16.gmra.mxu0 %v1083
      %v4281 = vpop.f32.mrf.mxu0
      %v4282 = vadd.f32 %v642, %v4281
      %v4283 = vpop.f32.mrf.mxu0
      %v4284 = vadd.f32 %v642, %v4283
      %4285 = vmatmul.bf16.gmra.mxu0 %v1090
      %v4286 = vpop.f32.mrf.mxu0
      %v4287 = vadd.f32 %v642, %v4286
      %v4288 = vpop.f32.mrf.mxu0
      %v4289 = vadd.f32 %v642, %v4288
      %4290 = vmatmul.bf16.gmra.mxu0 %v1097
      %v4291 = vpop.f32.mrf.mxu0
      %v4292 = vadd.f32 %v642, %v4291
      %v4293 = vpop.f32.mrf.mxu0
      %v4294 = vadd.f32 %v642, %v4293
      %4295 = vmatmul.bf16.gmra.mxu0 %v1104
      %v4296 = vpop.f32.mrf.mxu0
      %v4297 = vadd.f32 %v642, %v4296
      %v4298 = vpop.f32.mrf.mxu0
      %v4299 = vadd.f32 %v642, %v4298
      %4300 = vdwg.mxu0
      %4301 = vmatpush.bf16.msra.mxu0 %v1958
      %4302 = vmatpush.bf16.msra.mxu0 %v1954
      %4303 = vmatpush.bf16.msra.mxu0 %v1950
      %4304 = vmatpush.bf16.msra.mxu0 %v1946
      %4305 = vmatpush.bf16.msra.mxu0 %v1942
      %4306 = vmatpush.bf16.msra.mxu0 %v1938
      %4307 = vmatpush.bf16.msra.mxu0 %v1934
      %4308 = vmatpush.bf16.msra.mxu0 %v1930
      %4309 = vmatmul.bf16.gmra.mxu0 %v1000
      %v4310 = vpop.f32.mrf.mxu0
      %v4311 = vadd.f32 %v4222, %v4310
      %v4312 = vpop.f32.mrf.mxu0
      %v4313 = vadd.f32 %v4224, %v4312
      %4314 = vmatmul.bf16.gmra.mxu0 %v1007
      %v4315 = vpop.f32.mrf.mxu0
      %v4316 = vadd.f32 %v4227, %v4315
      %v4317 = vpop.f32.mrf.mxu0
      %v4318 = vadd.f32 %v4229, %v4317
      %4319 = vmatmul.bf16.gmra.mxu0 %v1014
      %v4320 = vpop.f32.mrf.mxu0
      %v4321 = vadd.f32 %v4232, %v4320
      %v4322 = vpop.f32.mrf.mxu0
      %v4323 = vadd.f32 %v4234, %v4322
      %4324 = vmatmul.bf16.gmra.mxu0 %v1021
      %v4325 = vpop.f32.mrf.mxu0
      %v4326 = vadd.f32 %v4237, %v4325
      %v4327 = vpop.f32.mrf.mxu0
      %v4328 = vadd.f32 %v4239, %v4327
      %4329 = vmatmul.bf16.gmra.mxu0 %v1028
      %v4330 = vpop.f32.mrf.mxu0
      %v4331 = vadd.f32 %v4242, %v4330
      %v4332 = vpop.f32.mrf.mxu0
      %v4333 = vadd.f32 %v4244, %v4332
      %4334 = vmatmul.bf16.gmra.mxu0 %v1035
      %v4335 = vpop.f32.mrf.mxu0
      %v4336 = vadd.f32 %v4247, %v4335
      %v4337 = vpop.f32.mrf.mxu0
      %v4338 = vadd.f32 %v4249, %v4337
      %4339 = vmatmul.bf16.gmra.mxu0 %v1042
      %v4340 = vpop.f32.mrf.mxu0
      %v4341 = vadd.f32 %v4252, %v4340
      %v4342 = vpop.f32.mrf.mxu0
      %v4343 = vadd.f32 %v4254, %v4342
      %4344 = vmatmul.bf16.gmra.mxu0 %v1049
      %v4345 = vpop.f32.mrf.mxu0
      %v4346 = vadd.f32 %v4257, %v4345
      %v4347 = vpop.f32.mrf.mxu0
      %v4348 = vadd.f32 %v4259, %v4347
      %4349 = vmatmul.bf16.gmra.mxu0 %v1056
      %v4350 = vpop.f32.mrf.mxu0
      %v4351 = vadd.f32 %v4262, %v4350
      %v4352 = vpop.f32.mrf.mxu0
      %v4353 = vadd.f32 %v4264, %v4352
      %4354 = vmatmul.bf16.gmra.mxu0 %v1063
      %v4355 = vpop.f32.mrf.mxu0
      %v4356 = vadd.f32 %v4267, %v4355
      %v4357 = vpop.f32.mrf.mxu0
      %v4358 = vadd.f32 %v4269, %v4357
      %4359 = vmatmul.bf16.gmra.mxu0 %v1070
      %v4360 = vpop.f32.mrf.mxu0
      %v4361 = vadd.f32 %v4272, %v4360
      %v4362 = vpop.f32.mrf.mxu0
      %v4363 = vadd.f32 %v4274, %v4362
      %4364 = vmatmul.bf16.gmra.mxu0 %v1077
      %v4365 = vpop.f32.mrf.mxu0
      %v4366 = vadd.f32 %v4277, %v4365
      %v4367 = vpop.f32.mrf.mxu0
      %v4368 = vadd.f32 %v4279, %v4367
      %4369 = vmatmul.bf16.gmra.mxu0 %v1084
      %v4370 = vpop.f32.mrf.mxu0
      %v4371 = vadd.f32 %v4282, %v4370
      %v4372 = vpop.f32.mrf.mxu0
      %v4373 = vadd.f32 %v4284, %v4372
      %4374 = vmatmul.bf16.gmra.mxu0 %v1091
      %v4375 = vpop.f32.mrf.mxu0
      %v4376 = vadd.f32 %v4287, %v4375
      %v4377 = vpop.f32.mrf.mxu0
      %v4378 = vadd.f32 %v4289, %v4377
      %4379 = vmatmul.bf16.gmra.mxu0 %v1098
      %v4380 = vpop.f32.mrf.mxu0
      %v4381 = vadd.f32 %v4292, %v4380
      %v4382 = vpop.f32.mrf.mxu0
      %v4383 = vadd.f32 %v4294, %v4382
      %4384 = vmatmul.bf16.gmra.mxu0 %v1105
      %v4385 = vpop.f32.mrf.mxu0
      %v4386 = vadd.f32 %v4297, %v4385
      %v4387 = vpop.f32.mrf.mxu0
      %v4388 = vadd.f32 %v4299, %v4387
      %4389 = vdwg.mxu0
      %4390 = vmatpush.bf16.msra.mxu0 %v1990
      %4391 = vmatpush.bf16.msra.mxu0 %v1986
      %4392 = vmatpush.bf16.msra.mxu0 %v1982
      %4393 = vmatpush.bf16.msra.mxu0 %v1978
      %4394 = vmatpush.bf16.msra.mxu0 %v1974
      %4395 = vmatpush.bf16.msra.mxu0 %v1970
      %4396 = vmatpush.bf16.msra.mxu0 %v1966
      %4397 = vmatpush.bf16.msra.mxu0 %v1962
      %4398 = vmatmul.bf16.gmra.mxu0 %v1001
      %v4399 = vpop.f32.mrf.mxu0
      %v4400 = vadd.f32 %v4311, %v4399
      %v4401 = vpop.f32.mrf.mxu0
      %v4402 = vadd.f32 %v4313, %v4401
      %4403 = vmatmul.bf16.gmra.mxu0 %v1008
      %v4404 = vpop.f32.mrf.mxu0
      %v4405 = vadd.f32 %v4316, %v4404
      %v4406 = vpop.f32.mrf.mxu0
      %v4407 = vadd.f32 %v4318, %v4406
      %4408 = vmatmul.bf16.gmra.mxu0 %v1015
      %v4409 = vpop.f32.mrf.mxu0
      %v4410 = vadd.f32 %v4321, %v4409
      %v4411 = vpop.f32.mrf.mxu0
      %v4412 = vadd.f32 %v4323, %v4411
      %4413 = vmatmul.bf16.gmra.mxu0 %v1022
      %v4414 = vpop.f32.mrf.mxu0
      %v4415 = vadd.f32 %v4326, %v4414
      %v4416 = vpop.f32.mrf.mxu0
      %v4417 = vadd.f32 %v4328, %v4416
      %4418 = vmatmul.bf16.gmra.mxu0 %v1029
      %v4419 = vpop.f32.mrf.mxu0
      %v4420 = vadd.f32 %v4331, %v4419
      %v4421 = vpop.f32.mrf.mxu0
      %v4422 = vadd.f32 %v4333, %v4421
      %4423 = vmatmul.bf16.gmra.mxu0 %v1036
      %v4424 = vpop.f32.mrf.mxu0
      %v4425 = vadd.f32 %v4336, %v4424
      %v4426 = vpop.f32.mrf.mxu0
      %v4427 = vadd.f32 %v4338, %v4426
      %4428 = vmatmul.bf16.gmra.mxu0 %v1043
      %v4429 = vpop.f32.mrf.mxu0
      %v4430 = vadd.f32 %v4341, %v4429
      %v4431 = vpop.f32.mrf.mxu0
      %v4432 = vadd.f32 %v4343, %v4431
      %4433 = vmatmul.bf16.gmra.mxu0 %v1050
      %v4434 = vpop.f32.mrf.mxu0
      %v4435 = vadd.f32 %v4346, %v4434
      %v4436 = vpop.f32.mrf.mxu0
      %v4437 = vadd.f32 %v4348, %v4436
      %4438 = vmatmul.bf16.gmra.mxu0 %v1057
      %v4439 = vpop.f32.mrf.mxu0
      %v4440 = vadd.f32 %v4351, %v4439
      %v4441 = vpop.f32.mrf.mxu0
      %v4442 = vadd.f32 %v4353, %v4441
      %4443 = vmatmul.bf16.gmra.mxu0 %v1064
      %v4444 = vpop.f32.mrf.mxu0
      %v4445 = vadd.f32 %v4356, %v4444
      %v4446 = vpop.f32.mrf.mxu0
      %v4447 = vadd.f32 %v4358, %v4446
      %4448 = vmatmul.bf16.gmra.mxu0 %v1071
      %v4449 = vpop.f32.mrf.mxu0
      %v4450 = vadd.f32 %v4361, %v4449
      %v4451 = vpop.f32.mrf.mxu0
      %v4452 = vadd.f32 %v4363, %v4451
      %4453 = vmatmul.bf16.gmra.mxu0 %v1078
      %v4454 = vpop.f32.mrf.mxu0
      %v4455 = vadd.f32 %v4366, %v4454
      %v4456 = vpop.f32.mrf.mxu0
      %v4457 = vadd.f32 %v4368, %v4456
      %4458 = vmatmul.bf16.gmra.mxu0 %v1085
      %v4459 = vpop.f32.mrf.mxu0
      %v4460 = vadd.f32 %v4371, %v4459
      %v4461 = vpop.f32.mrf.mxu0
      %v4462 = vadd.f32 %v4373, %v4461
      %4463 = vmatmul.bf16.gmra.mxu0 %v1092
      %v4464 = vpop.f32.mrf.mxu0
      %v4465 = vadd.f32 %v4376, %v4464
      %v4466 = vpop.f32.mrf.mxu0
      %v4467 = vadd.f32 %v4378, %v4466
      %4468 = vmatmul.bf16.gmra.mxu0 %v1099
      %v4469 = vpop.f32.mrf.mxu0
      %v4470 = vadd.f32 %v4381, %v4469
      %v4471 = vpop.f32.mrf.mxu0
      %v4472 = vadd.f32 %v4383, %v4471
      %4473 = vmatmul.bf16.gmra.mxu0 %v1106
      %v4474 = vpop.f32.mrf.mxu0
      %v4475 = vadd.f32 %v4386, %v4474
      %v4476 = vpop.f32.mrf.mxu0
      %v4477 = vadd.f32 %v4388, %v4476
      %4478 = vdwg.mxu0
      %4479 = vmatpush.bf16.msra.mxu0 %v2022
      %4480 = vmatpush.bf16.msra.mxu0 %v2018
      %4481 = vmatpush.bf16.msra.mxu0 %v2014
      %4482 = vmatpush.bf16.msra.mxu0 %v2010
      %4483 = vmatpush.bf16.msra.mxu0 %v2006
      %4484 = vmatpush.bf16.msra.mxu0 %v2002
      %4485 = vmatpush.bf16.msra.mxu0 %v1998
      %4486 = vmatpush.bf16.msra.mxu0 %v1994
      %4487 = vmatmul.bf16.gmra.mxu0 %v1002
      %v4488 = vpop.f32.mrf.mxu0
      %v4489 = vadd.f32 %v4400, %v4488
      %v4490 = vpop.f32.mrf.mxu0
      %v4491 = vadd.f32 %v4402, %v4490
      %4492 = vmatmul.bf16.gmra.mxu0 %v1009
      %v4493 = vpop.f32.mrf.mxu0
      %v4494 = vadd.f32 %v4405, %v4493
      %v4495 = vpop.f32.mrf.mxu0
      %v4496 = vadd.f32 %v4407, %v4495
      %4497 = vmatmul.bf16.gmra.mxu0 %v1016
      %v4498 = vpop.f32.mrf.mxu0
      %v4499 = vadd.f32 %v4410, %v4498
      %v4500 = vpop.f32.mrf.mxu0
      %v4501 = vadd.f32 %v4412, %v4500
      %4502 = vmatmul.bf16.gmra.mxu0 %v1023
      %v4503 = vpop.f32.mrf.mxu0
      %v4504 = vadd.f32 %v4415, %v4503
      %v4505 = vpop.f32.mrf.mxu0
      %v4506 = vadd.f32 %v4417, %v4505
      %4507 = vmatmul.bf16.gmra.mxu0 %v1030
      %v4508 = vpop.f32.mrf.mxu0
      %v4509 = vadd.f32 %v4420, %v4508
      %v4510 = vpop.f32.mrf.mxu0
      %v4511 = vadd.f32 %v4422, %v4510
      %4512 = vmatmul.bf16.gmra.mxu0 %v1037
      %v4513 = vpop.f32.mrf.mxu0
      %v4514 = vadd.f32 %v4425, %v4513
      %v4515 = vpop.f32.mrf.mxu0
      %v4516 = vadd.f32 %v4427, %v4515
      %4517 = vmatmul.bf16.gmra.mxu0 %v1044
      %v4518 = vpop.f32.mrf.mxu0
      %v4519 = vadd.f32 %v4430, %v4518
      %v4520 = vpop.f32.mrf.mxu0
      %v4521 = vadd.f32 %v4432, %v4520
      %4522 = vmatmul.bf16.gmra.mxu0 %v1051
      %v4523 = vpop.f32.mrf.mxu0
      %v4524 = vadd.f32 %v4435, %v4523
      %v4525 = vpop.f32.mrf.mxu0
      %v4526 = vadd.f32 %v4437, %v4525
      %4527 = vmatmul.bf16.gmra.mxu0 %v1058
      %v4528 = vpop.f32.mrf.mxu0
      %v4529 = vadd.f32 %v4440, %v4528
      %v4530 = vpop.f32.mrf.mxu0
      %v4531 = vadd.f32 %v4442, %v4530
      %4532 = vmatmul.bf16.gmra.mxu0 %v1065
      %v4533 = vpop.f32.mrf.mxu0
      %v4534 = vadd.f32 %v4445, %v4533
      %v4535 = vpop.f32.mrf.mxu0
      %v4536 = vadd.f32 %v4447, %v4535
      %4537 = vmatmul.bf16.gmra.mxu0 %v1072
      %v4538 = vpop.f32.mrf.mxu0
      %v4539 = vadd.f32 %v4450, %v4538
      %v4540 = vpop.f32.mrf.mxu0
      %v4541 = vadd.f32 %v4452, %v4540
      %4542 = vmatmul.bf16.gmra.mxu0 %v1079
      %v4543 = vpop.f32.mrf.mxu0
      %v4544 = vadd.f32 %v4455, %v4543
      %v4545 = vpop.f32.mrf.mxu0
      %v4546 = vadd.f32 %v4457, %v4545
      %4547 = vmatmul.bf16.gmra.mxu0 %v1086
      %v4548 = vpop.f32.mrf.mxu0
      %v4549 = vadd.f32 %v4460, %v4548
      %v4550 = vpop.f32.mrf.mxu0
      %v4551 = vadd.f32 %v4462, %v4550
      %4552 = vmatmul.bf16.gmra.mxu0 %v1093
      %v4553 = vpop.f32.mrf.mxu0
      %v4554 = vadd.f32 %v4465, %v4553
      %v4555 = vpop.f32.mrf.mxu0
      %v4556 = vadd.f32 %v4467, %v4555
      %4557 = vmatmul.bf16.gmra.mxu0 %v1100
      %v4558 = vpop.f32.mrf.mxu0
      %v4559 = vadd.f32 %v4470, %v4558
      %v4560 = vpop.f32.mrf.mxu0
      %v4561 = vadd.f32 %v4472, %v4560
      %4562 = vmatmul.bf16.gmra.mxu0 %v1107
      %v4563 = vpop.f32.mrf.mxu0
      %v4564 = vadd.f32 %v4475, %v4563
      %v4565 = vpop.f32.mrf.mxu0
      %v4566 = vadd.f32 %v4477, %v4565
      %4567 = vdwg.mxu0
      %4568 = vmatpush.bf16.msra.mxu0 %v2054
      %4569 = vmatpush.bf16.msra.mxu0 %v2050
      %4570 = vmatpush.bf16.msra.mxu0 %v2046
      %4571 = vmatpush.bf16.msra.mxu0 %v2042
      %4572 = vmatpush.bf16.msra.mxu0 %v2038
      %4573 = vmatpush.bf16.msra.mxu0 %v2034
      %4574 = vmatpush.bf16.msra.mxu0 %v2030
      %4575 = vmatpush.bf16.msra.mxu0 %v2026
      %4576 = vmatmul.bf16.gmra.mxu0 %v1003
      %v4577 = vpop.f32.mrf.mxu0
      %v4578 = vadd.f32 %v4489, %v4577
      %v4579 = vpop.f32.mrf.mxu0
      %v4580 = vadd.f32 %v4491, %v4579
      %4581 = vmatmul.bf16.gmra.mxu0 %v1010
      %v4582 = vpop.f32.mrf.mxu0
      %v4583 = vadd.f32 %v4494, %v4582
      %v4584 = vpop.f32.mrf.mxu0
      %v4585 = vadd.f32 %v4496, %v4584
      %4586 = vmatmul.bf16.gmra.mxu0 %v1017
      %v4587 = vpop.f32.mrf.mxu0
      %v4588 = vadd.f32 %v4499, %v4587
      %v4589 = vpop.f32.mrf.mxu0
      %v4590 = vadd.f32 %v4501, %v4589
      %4591 = vmatmul.bf16.gmra.mxu0 %v1024
      %v4592 = vpop.f32.mrf.mxu0
      %v4593 = vadd.f32 %v4504, %v4592
      %v4594 = vpop.f32.mrf.mxu0
      %v4595 = vadd.f32 %v4506, %v4594
      %4596 = vmatmul.bf16.gmra.mxu0 %v1031
      %v4597 = vpop.f32.mrf.mxu0
      %v4598 = vadd.f32 %v4509, %v4597
      %v4599 = vpop.f32.mrf.mxu0
      %v4600 = vadd.f32 %v4511, %v4599
      %4601 = vmatmul.bf16.gmra.mxu0 %v1038
      %v4602 = vpop.f32.mrf.mxu0
      %v4603 = vadd.f32 %v4514, %v4602
      %v4604 = vpop.f32.mrf.mxu0
      %v4605 = vadd.f32 %v4516, %v4604
      %4606 = vmatmul.bf16.gmra.mxu0 %v1045
      %v4607 = vpop.f32.mrf.mxu0
      %v4608 = vadd.f32 %v4519, %v4607
      %v4609 = vpop.f32.mrf.mxu0
      %v4610 = vadd.f32 %v4521, %v4609
      %4611 = vmatmul.bf16.gmra.mxu0 %v1052
      %v4612 = vpop.f32.mrf.mxu0
      %v4613 = vadd.f32 %v4524, %v4612
      %v4614 = vpop.f32.mrf.mxu0
      %v4615 = vadd.f32 %v4526, %v4614
      %4616 = vmatmul.bf16.gmra.mxu0 %v1059
      %v4617 = vpop.f32.mrf.mxu0
      %v4618 = vadd.f32 %v4529, %v4617
      %v4619 = vpop.f32.mrf.mxu0
      %v4620 = vadd.f32 %v4531, %v4619
      %4621 = vmatmul.bf16.gmra.mxu0 %v1066
      %v4622 = vpop.f32.mrf.mxu0
      %v4623 = vadd.f32 %v4534, %v4622
      %v4624 = vpop.f32.mrf.mxu0
      %v4625 = vadd.f32 %v4536, %v4624
      %4626 = vmatmul.bf16.gmra.mxu0 %v1073
      %v4627 = vpop.f32.mrf.mxu0
      %v4628 = vadd.f32 %v4539, %v4627
      %v4629 = vpop.f32.mrf.mxu0
      %v4630 = vadd.f32 %v4541, %v4629
      %4631 = vmatmul.bf16.gmra.mxu0 %v1080
      %v4632 = vpop.f32.mrf.mxu0
      %v4633 = vadd.f32 %v4544, %v4632
      %v4634 = vpop.f32.mrf.mxu0
      %v4635 = vadd.f32 %v4546, %v4634
      %4636 = vmatmul.bf16.gmra.mxu0 %v1087
      %v4637 = vpop.f32.mrf.mxu0
      %v4638 = vadd.f32 %v4549, %v4637
      %v4639 = vpop.f32.mrf.mxu0
      %v4640 = vadd.f32 %v4551, %v4639
      %4641 = vmatmul.bf16.gmra.mxu0 %v1094
      %v4642 = vpop.f32.mrf.mxu0
      %v4643 = vadd.f32 %v4554, %v4642
      %v4644 = vpop.f32.mrf.mxu0
      %v4645 = vadd.f32 %v4556, %v4644
      %4646 = vmatmul.bf16.gmra.mxu0 %v1101
      %v4647 = vpop.f32.mrf.mxu0
      %v4648 = vadd.f32 %v4559, %v4647
      %v4649 = vpop.f32.mrf.mxu0
      %v4650 = vadd.f32 %v4561, %v4649
      %4651 = vmatmul.bf16.gmra.mxu0 %v1108
      %v4652 = vpop.f32.mrf.mxu0
      %v4653 = vadd.f32 %v4564, %v4652
      %v4654 = vpop.f32.mrf.mxu0
      %v4655 = vadd.f32 %v4566, %v4654
      %4656 = vdwg.mxu0
      %4657 = vmatpush.bf16.msra.mxu0 %v2086
      %4658 = vmatpush.bf16.msra.mxu0 %v2082
      %4659 = vmatpush.bf16.msra.mxu0 %v2078
      %4660 = vmatpush.bf16.msra.mxu0 %v2074
      %4661 = vmatpush.bf16.msra.mxu0 %v2070
      %4662 = vmatpush.bf16.msra.mxu0 %v2066
      %4663 = vmatpush.bf16.msra.mxu0 %v2062
      %4664 = vmatpush.bf16.msra.mxu0 %v2058
      %4665 = vmatmul.bf16.gmra.mxu0 %v1004
      %v4666 = vpop.f32.mrf.mxu0
      %v4667 = vadd.f32 %v4578, %v4666
      %v4668 = vpop.f32.mrf.mxu0
      %v4669 = vadd.f32 %v4580, %v4668
      %4670 = vmatmul.bf16.gmra.mxu0 %v1011
      %v4671 = vpop.f32.mrf.mxu0
      %v4672 = vadd.f32 %v4583, %v4671
      %v4673 = vpop.f32.mrf.mxu0
      %v4674 = vadd.f32 %v4585, %v4673
      %4675 = vmatmul.bf16.gmra.mxu0 %v1018
      %v4676 = vpop.f32.mrf.mxu0
      %v4677 = vadd.f32 %v4588, %v4676
      %v4678 = vpop.f32.mrf.mxu0
      %v4679 = vadd.f32 %v4590, %v4678
      %4680 = vmatmul.bf16.gmra.mxu0 %v1025
      %v4681 = vpop.f32.mrf.mxu0
      %v4682 = vadd.f32 %v4593, %v4681
      %v4683 = vpop.f32.mrf.mxu0
      %v4684 = vadd.f32 %v4595, %v4683
      %4685 = vmatmul.bf16.gmra.mxu0 %v1032
      %v4686 = vpop.f32.mrf.mxu0
      %v4687 = vadd.f32 %v4598, %v4686
      %v4688 = vpop.f32.mrf.mxu0
      %v4689 = vadd.f32 %v4600, %v4688
      %4690 = vmatmul.bf16.gmra.mxu0 %v1039
      %v4691 = vpop.f32.mrf.mxu0
      %v4692 = vadd.f32 %v4603, %v4691
      %v4693 = vpop.f32.mrf.mxu0
      %v4694 = vadd.f32 %v4605, %v4693
      %4695 = vmatmul.bf16.gmra.mxu0 %v1046
      %v4696 = vpop.f32.mrf.mxu0
      %v4697 = vadd.f32 %v4608, %v4696
      %v4698 = vpop.f32.mrf.mxu0
      %v4699 = vadd.f32 %v4610, %v4698
      %4700 = vmatmul.bf16.gmra.mxu0 %v1053
      %v4701 = vpop.f32.mrf.mxu0
      %v4702 = vadd.f32 %v4613, %v4701
      %v4703 = vpop.f32.mrf.mxu0
      %v4704 = vadd.f32 %v4615, %v4703
      %4705 = vmatmul.bf16.gmra.mxu0 %v1060
      %v4706 = vpop.f32.mrf.mxu0
      %v4707 = vadd.f32 %v4618, %v4706
      %v4708 = vpop.f32.mrf.mxu0
      %v4709 = vadd.f32 %v4620, %v4708
      %4710 = vmatmul.bf16.gmra.mxu0 %v1067
      %v4711 = vpop.f32.mrf.mxu0
      %v4712 = vadd.f32 %v4623, %v4711
      %v4713 = vpop.f32.mrf.mxu0
      %v4714 = vadd.f32 %v4625, %v4713
      %4715 = vmatmul.bf16.gmra.mxu0 %v1074
      %v4716 = vpop.f32.mrf.mxu0
      %v4717 = vadd.f32 %v4628, %v4716
      %v4718 = vpop.f32.mrf.mxu0
      %v4719 = vadd.f32 %v4630, %v4718
      %4720 = vmatmul.bf16.gmra.mxu0 %v1081
      %v4721 = vpop.f32.mrf.mxu0
      %v4722 = vadd.f32 %v4633, %v4721
      %v4723 = vpop.f32.mrf.mxu0
      %v4724 = vadd.f32 %v4635, %v4723
      %4725 = vmatmul.bf16.gmra.mxu0 %v1088
      %v4726 = vpop.f32.mrf.mxu0
      %v4727 = vadd.f32 %v4638, %v4726
      %v4728 = vpop.f32.mrf.mxu0
      %v4729 = vadd.f32 %v4640, %v4728
      %4730 = vmatmul.bf16.gmra.mxu0 %v1095
      %v4731 = vpop.f32.mrf.mxu0
      %v4732 = vadd.f32 %v4643, %v4731
      %v4733 = vpop.f32.mrf.mxu0
      %v4734 = vadd.f32 %v4645, %v4733
      %4735 = vmatmul.bf16.gmra.mxu0 %v1102
      %v4736 = vpop.f32.mrf.mxu0
      %v4737 = vadd.f32 %v4648, %v4736
      %v4738 = vpop.f32.mrf.mxu0
      %v4739 = vadd.f32 %v4650, %v4738
      %4740 = vmatmul.bf16.gmra.mxu0 %v1109
      %v4741 = vpop.f32.mrf.mxu0
      %v4742 = vadd.f32 %v4653, %v4741
      %v4743 = vpop.f32.mrf.mxu0
      %v4744 = vadd.f32 %v4655, %v4743
      %4745 = vdwg.mxu0
      %4746 = vmatpush.bf16.msra.mxu0 %v2118
      %4747 = vmatpush.bf16.msra.mxu0 %v2114
      %4748 = vmatpush.bf16.msra.mxu0 %v2110
      %4749 = vmatpush.bf16.msra.mxu0 %v2106
      %4750 = vmatpush.bf16.msra.mxu0 %v2102
      %4751 = vmatpush.bf16.msra.mxu0 %v2098
      %4752 = vmatpush.bf16.msra.mxu0 %v2094
      %4753 = vmatpush.bf16.msra.mxu0 %v2090
      %4754 = vmatmul.bf16.gmra.mxu0 %v1005
      %v4755 = vpop.f32.mrf.mxu0
      %v4756 = vadd.f32 %v4667, %v4755
      %v4757 = vpop.f32.mrf.mxu0
      %v4758 = vadd.f32 %v4669, %v4757
      %4759 = vmatmul.bf16.gmra.mxu0 %v1012
      %v4760 = vpop.f32.mrf.mxu0
      %v4761 = vadd.f32 %v4672, %v4760
      %v4762 = vpop.f32.mrf.mxu0
      %v4763 = vadd.f32 %v4674, %v4762
      %4764 = vmatmul.bf16.gmra.mxu0 %v1019
      %v4765 = vpop.f32.mrf.mxu0
      %v4766 = vadd.f32 %v4677, %v4765
      %v4767 = vpop.f32.mrf.mxu0
      %v4768 = vadd.f32 %v4679, %v4767
      %4769 = vmatmul.bf16.gmra.mxu0 %v1026
      %v4770 = vpop.f32.mrf.mxu0
      %v4771 = vadd.f32 %v4682, %v4770
      %v4772 = vpop.f32.mrf.mxu0
      %v4773 = vadd.f32 %v4684, %v4772
      %4774 = vmatmul.bf16.gmra.mxu0 %v1033
      %v4775 = vpop.f32.mrf.mxu0
      %v4776 = vadd.f32 %v4687, %v4775
      %v4777 = vpop.f32.mrf.mxu0
      %v4778 = vadd.f32 %v4689, %v4777
      %4779 = vmatmul.bf16.gmra.mxu0 %v1040
      %v4780 = vpop.f32.mrf.mxu0
      %v4781 = vadd.f32 %v4692, %v4780
      %v4782 = vpop.f32.mrf.mxu0
      %v4783 = vadd.f32 %v4694, %v4782
      %4784 = vmatmul.bf16.gmra.mxu0 %v1047
      %v4785 = vpop.f32.mrf.mxu0
      %v4786 = vadd.f32 %v4697, %v4785
      %v4787 = vpop.f32.mrf.mxu0
      %v4788 = vadd.f32 %v4699, %v4787
      %4789 = vmatmul.bf16.gmra.mxu0 %v1054
      %v4790 = vpop.f32.mrf.mxu0
      %v4791 = vadd.f32 %v4702, %v4790
      %v4792 = vpop.f32.mrf.mxu0
      %v4793 = vadd.f32 %v4704, %v4792
      %4794 = vmatmul.bf16.gmra.mxu0 %v1061
      %v4795 = vpop.f32.mrf.mxu0
      %v4796 = vadd.f32 %v4707, %v4795
      %v4797 = vpop.f32.mrf.mxu0
      %v4798 = vadd.f32 %v4709, %v4797
      %4799 = vmatmul.bf16.gmra.mxu0 %v1068
      %v4800 = vpop.f32.mrf.mxu0
      %v4801 = vadd.f32 %v4712, %v4800
      %v4802 = vpop.f32.mrf.mxu0
      %v4803 = vadd.f32 %v4714, %v4802
      %4804 = vmatmul.bf16.gmra.mxu0 %v1075
      %v4805 = vpop.f32.mrf.mxu0
      %v4806 = vadd.f32 %v4717, %v4805
      %v4807 = vpop.f32.mrf.mxu0
      %v4808 = vadd.f32 %v4719, %v4807
      %4809 = vmatmul.bf16.gmra.mxu0 %v1082
      %v4810 = vpop.f32.mrf.mxu0
      %v4811 = vadd.f32 %v4722, %v4810
      %v4812 = vpop.f32.mrf.mxu0
      %v4813 = vadd.f32 %v4724, %v4812
      %4814 = vmatmul.bf16.gmra.mxu0 %v1089
      %v4815 = vpop.f32.mrf.mxu0
      %v4816 = vadd.f32 %v4727, %v4815
      %v4817 = vpop.f32.mrf.mxu0
      %v4818 = vadd.f32 %v4729, %v4817
      %4819 = vmatmul.bf16.gmra.mxu0 %v1096
      %v4820 = vpop.f32.mrf.mxu0
      %v4821 = vadd.f32 %v4732, %v4820
      %v4822 = vpop.f32.mrf.mxu0
      %v4823 = vadd.f32 %v4734, %v4822
      %4824 = vmatmul.bf16.gmra.mxu0 %v1103
      %v4825 = vpop.f32.mrf.mxu0
      %v4826 = vadd.f32 %v4737, %v4825
      %v4827 = vpop.f32.mrf.mxu0
      %v4828 = vadd.f32 %v4739, %v4827
      %4829 = vmatmul.bf16.gmra.mxu0 %v1110
      %v4830 = vpop.f32.mrf.mxu0
      %v4831 = vadd.f32 %v4742, %v4830
      %v4832 = vpop.f32.mrf.mxu0
      %v4833 = vadd.f32 %v4744, %v4832
      %4834 = vdwg.mxu0
      %v4835 = vmax.f32 %v2887, 0.0
      %v4836 = vmax.f32 %v3510, 0.0
      %v4837 = vmax.f32 %v4133, 0.0
      %v4838 = vmax.f32 %v4756, 0.0
      %v4839 = vmax.f32 %v2889, 0.0
      %v4840 = vmax.f32 %v3512, 0.0
      %v4841 = vmax.f32 %v4135, 0.0
      %v4842 = vmax.f32 %v4758, 0.0
      %v4843 = vmax.f32 %v2892, 0.0
      %v4844 = vmax.f32 %v3515, 0.0
      %v4845 = vmax.f32 %v4138, 0.0
      %v4846 = vmax.f32 %v4761, 0.0
      %v4847 = vmax.f32 %v2894, 0.0
      %v4848 = vmax.f32 %v3517, 0.0
      %v4849 = vmax.f32 %v4140, 0.0
      %v4850 = vmax.f32 %v4763, 0.0
      %v4851 = vmax.f32 %v2897, 0.0
      %v4852 = vmax.f32 %v3520, 0.0
      %v4853 = vmax.f32 %v4143, 0.0
      %v4854 = vmax.f32 %v4766, 0.0
      %v4855 = vmax.f32 %v2899, 0.0
      %v4856 = vmax.f32 %v3522, 0.0
      %v4857 = vmax.f32 %v4145, 0.0
      %v4858 = vmax.f32 %v4768, 0.0
      %v4859 = vmax.f32 %v2902, 0.0
      %v4860 = vmax.f32 %v3525, 0.0
      %v4861 = vmax.f32 %v4148, 0.0
      %v4862 = vmax.f32 %v4771, 0.0
      %v4863 = vmax.f32 %v2904, 0.0
      %v4864 = vmax.f32 %v3527, 0.0
      %v4865 = vmax.f32 %v4150, 0.0
      %v4866 = vmax.f32 %v4773, 0.0
      %v4867 = vmax.f32 %v2907, 0.0
      %v4868 = vmax.f32 %v3530, 0.0
      %v4869 = vmax.f32 %v4153, 0.0
      %v4870 = vmax.f32 %v4776, 0.0
      %v4871 = vmax.f32 %v2909, 0.0
      %v4872 = vmax.f32 %v3532, 0.0
      %v4873 = vmax.f32 %v4155, 0.0
      %v4874 = vmax.f32 %v4778, 0.0
      %v4875 = vmax.f32 %v2912, 0.0
      %v4876 = vmax.f32 %v3535, 0.0
      %v4877 = vmax.f32 %v4158, 0.0
      %v4878 = vmax.f32 %v4781, 0.0
      %v4879 = vmax.f32 %v2914, 0.0
      %v4880 = vmax.f32 %v3537, 0.0
      %v4881 = vmax.f32 %v4160, 0.0
      %v4882 = vmax.f32 %v4783, 0.0
      %v4883 = vmax.f32 %v2917, 0.0
      %v4884 = vmax.f32 %v3540, 0.0
      %v4885 = vmax.f32 %v4163, 0.0
      %v4886 = vmax.f32 %v4786, 0.0
      %v4887 = vmax.f32 %v2919, 0.0
      %v4888 = vmax.f32 %v3542, 0.0
      %v4889 = vmax.f32 %v4165, 0.0
      %v4890 = vmax.f32 %v4788, 0.0
      %v4891 = vmax.f32 %v2922, 0.0
      %v4892 = vmax.f32 %v3545, 0.0
      %v4893 = vmax.f32 %v4168, 0.0
      %v4894 = vmax.f32 %v4791, 0.0
      %v4895 = vmax.f32 %v2924, 0.0
      %v4896 = vmax.f32 %v3547, 0.0
      %v4897 = vmax.f32 %v4170, 0.0
      %v4898 = vmax.f32 %v4793, 0.0
      %v4899 = vmax.f32 %v2927, 0.0
      %v4900 = vmax.f32 %v3550, 0.0
      %v4901 = vmax.f32 %v4173, 0.0
      %v4902 = vmax.f32 %v4796, 0.0
      %v4903 = vmax.f32 %v2929, 0.0
      %v4904 = vmax.f32 %v3552, 0.0
      %v4905 = vmax.f32 %v4175, 0.0
      %v4906 = vmax.f32 %v4798, 0.0
      %v4907 = vmax.f32 %v2932, 0.0
      %v4908 = vmax.f32 %v3555, 0.0
      %v4909 = vmax.f32 %v4178, 0.0
      %v4910 = vmax.f32 %v4801, 0.0
      %v4911 = vmax.f32 %v2934, 0.0
      %v4912 = vmax.f32 %v3557, 0.0
      %v4913 = vmax.f32 %v4180, 0.0
      %v4914 = vmax.f32 %v4803, 0.0
      %v4915 = vmax.f32 %v2937, 0.0
      %v4916 = vmax.f32 %v3560, 0.0
      %v4917 = vmax.f32 %v4183, 0.0
      %v4918 = vmax.f32 %v4806, 0.0
      %v4919 = vmax.f32 %v2939, 0.0
      %v4920 = vmax.f32 %v3562, 0.0
      %v4921 = vmax.f32 %v4185, 0.0
      %v4922 = vmax.f32 %v4808, 0.0
      %v4923 = vmax.f32 %v2942, 0.0
      %v4924 = vmax.f32 %v3565, 0.0
      %v4925 = vmax.f32 %v4188, 0.0
      %v4926 = vmax.f32 %v4811, 0.0
      %v4927 = vmax.f32 %v2944, 0.0
      %v4928 = vmax.f32 %v3567, 0.0
      %v4929 = vmax.f32 %v4190, 0.0
      %v4930 = vmax.f32 %v4813, 0.0
      %v4931 = vmax.f32 %v2947, 0.0
      %v4932 = vmax.f32 %v3570, 0.0
      %v4933 = vmax.f32 %v4193, 0.0
      %v4934 = vmax.f32 %v4816, 0.0
      %v4935 = vmax.f32 %v2949, 0.0
      %v4936 = vmax.f32 %v3572, 0.0
      %v4937 = vmax.f32 %v4195, 0.0
      %v4938 = vmax.f32 %v4818, 0.0
      %v4939 = vmax.f32 %v2952, 0.0
      %v4940 = vmax.f32 %v3575, 0.0
      %v4941 = vmax.f32 %v4198, 0.0
      %v4942 = vmax.f32 %v4821, 0.0
      %v4943 = vmax.f32 %v2954, 0.0
      %v4944 = vmax.f32 %v3577, 0.0
      %v4945 = vmax.f32 %v4200, 0.0
      %v4946 = vmax.f32 %v4823, 0.0
      %v4947 = vmax.f32 %v2957, 0.0
      %v4948 = vmax.f32 %v3580, 0.0
      %v4949 = vmax.f32 %v4203, 0.0
      %v4950 = vmax.f32 %v4826, 0.0
      %v4951 = vmax.f32 %v2959, 0.0
      %v4952 = vmax.f32 %v3582, 0.0
      %v4953 = vmax.f32 %v4205, 0.0
      %v4954 = vmax.f32 %v4828, 0.0
      %v4955 = vmax.f32 %v2962, 0.0
      %v4956 = vmax.f32 %v3585, 0.0
      %v4957 = vmax.f32 %v4208, 0.0
      %v4958 = vmax.f32 %v4831, 0.0
      %v4959 = vmax.f32 %v2964, 0.0
      %v4960 = vmax.f32 %v3587, 0.0
      %v4961 = vmax.f32 %v4210, 0.0
      %v4962 = vmax.f32 %v4833, 0.0
      %v4963 = vpack.c.bf16 %v4839, %v4835
      %v4964 = vpack.c.bf16 %v4840, %v4836
      %v4965 = vpack.c.bf16 %v4841, %v4837
      %v4966 = vpack.c.bf16 %v4842, %v4838
      %v4967 = vpack.c.bf16 %v4847, %v4843
      %v4968 = vpack.c.bf16 %v4848, %v4844
      %v4969 = vpack.c.bf16 %v4849, %v4845
      %v4970 = vpack.c.bf16 %v4850, %v4846
      %v4971 = vpack.c.bf16 %v4855, %v4851
      %v4972 = vpack.c.bf16 %v4856, %v4852
      %v4973 = vpack.c.bf16 %v4857, %v4853
      %v4974 = vpack.c.bf16 %v4858, %v4854
      %v4975 = vpack.c.bf16 %v4863, %v4859
      %v4976 = vpack.c.bf16 %v4864, %v4860
      %v4977 = vpack.c.bf16 %v4865, %v4861
      %v4978 = vpack.c.bf16 %v4866, %v4862
      %v4979 = vpack.c.bf16 %v4871, %v4867
      %v4980 = vpack.c.bf16 %v4872, %v4868
      %v4981 = vpack.c.bf16 %v4873, %v4869
      %v4982 = vpack.c.bf16 %v4874, %v4870
      %v4983 = vpack.c.bf16 %v4879, %v4875
      %v4984 = vpack.c.bf16 %v4880, %v4876
      %v4985 = vpack.c.bf16 %v4881, %v4877
      %v4986 = vpack.c.bf16 %v4882, %v4878
      %v4987 = vpack.c.bf16 %v4887, %v4883
      %v4988 = vpack.c.bf16 %v4888, %v4884
      %v4989 = vpack.c.bf16 %v4889, %v4885
      %v4990 = vpack.c.bf16 %v4890, %v4886
      %v4991 = vpack.c.bf16 %v4895, %v4891
      %v4992 = vpack.c.bf16 %v4896, %v4892
      %v4993 = vpack.c.bf16 %v4897, %v4893
      %v4994 = vpack.c.bf16 %v4898, %v4894
      %v4995 = vpack.c.bf16 %v4903, %v4899
      %v4996 = vpack.c.bf16 %v4904, %v4900
      %v4997 = vpack.c.bf16 %v4905, %v4901
      %v4998 = vpack.c.bf16 %v4906, %v4902
      %v4999 = vpack.c.bf16 %v4911, %v4907
      %v5000 = vpack.c.bf16 %v4912, %v4908
      %v5001 = vpack.c.bf16 %v4913, %v4909
      %v5002 = vpack.c.bf16 %v4914, %v4910
      %v5003 = vpack.c.bf16 %v4919, %v4915
      %v5004 = vpack.c.bf16 %v4920, %v4916
      %v5005 = vpack.c.bf16 %v4921, %v4917
      %v5006 = vpack.c.bf16 %v4922, %v4918
      %v5007 = vpack.c.bf16 %v4927, %v4923
      %v5008 = vpack.c.bf16 %v4928, %v4924
      %v5009 = vpack.c.bf16 %v4929, %v4925
      %v5010 = vpack.c.bf16 %v4930, %v4926
      %v5011 = vpack.c.bf16 %v4935, %v4931
      %v5012 = vpack.c.bf16 %v4936, %v4932
      %v5013 = vpack.c.bf16 %v4937, %v4933
      %v5014 = vpack.c.bf16 %v4938, %v4934
      %v5015 = vpack.c.bf16 %v4943, %v4939
      %v5016 = vpack.c.bf16 %v4944, %v4940
      %v5017 = vpack.c.bf16 %v4945, %v4941
      %v5018 = vpack.c.bf16 %v4946, %v4942
      %v5019 = vpack.c.bf16 %v4951, %v4947
      %v5020 = vpack.c.bf16 %v4952, %v4948
      %v5021 = vpack.c.bf16 %v4953, %v4949
      %v5022 = vpack.c.bf16 %v4954, %v4950
      %v5023 = vpack.c.bf16 %v4959, %v4955
      %v5024 = vpack.c.bf16 %v4960, %v4956
      %v5025 = vpack.c.bf16 %v4961, %v4957
      %v5026 = vpack.c.bf16 %v4962, %v4958
      %v5027 = vld [vmem:[%s3] sm:$0xff]
      %v5028 = vld [vmem:[%s3 + $0x8] sm:$0xff]
      %v5029 = vld [vmem:[%s3 + $0x10] sm:$0xff]
      %v5030 = vld [vmem:[%s3 + $0x18] sm:$0xff]
      %v5031 = vld [vmem:[%s3 + $0x20] sm:$0xff]
      %v5032 = vld [vmem:[%s3 + $0x28] sm:$0xff]
      %v5033 = vld [vmem:[%s3 + $0x30] sm:$0xff]
      %v5034 = vld [vmem:[%s3 + $0x38] sm:$0xff]
      %v5035 = vld [vmem:[%s3 + $0x40] sm:$0xff]
      %v5036 = vld [vmem:[%s3 + $0x48] sm:$0xff]
      %v5037 = vld [vmem:[%s3 + $0x50] sm:$0xff]
      %v5038 = vld [vmem:[%s3 + $0x58] sm:$0xff]
      %v5039 = vld [vmem:[%s3 + $0x60] sm:$0xff]
      %v5040 = vld [vmem:[%s3 + $0x68] sm:$0xff]
      %v5041 = vld [vmem:[%s3 + $0x70] sm:$0xff]
      %v5042 = vld [vmem:[%s3 + $0x78] sm:$0xff]
      %v5043 = vld [vmem:[%s3 + $0x80] sm:$0xff]
      %v5044 = vld [vmem:[%s3 + $0x88] sm:$0xff]
      %v5045 = vld [vmem:[%s3 + $0x90] sm:$0xff]
      %v5046 = vld [vmem:[%s3 + $0x98] sm:$0xff]
      %v5047 = vld [vmem:[%s3 + $0xa0] sm:$0xff]
      %v5048 = vld [vmem:[%s3 + $0xa8] sm:$0xff]
      %v5049 = vld [vmem:[%s3 + $0xb0] sm:$0xff]
      %v5050 = vld [vmem:[%s3 + $0xb8] sm:$0xff]
      %v5051 = vld [vmem:[%s3 + $0xc0] sm:$0xff]
      %v5052 = vld [vmem:[%s3 + $0xc8] sm:$0xff]
      %v5053 = vld [vmem:[%s3 + $0xd0] sm:$0xff]
      %v5054 = vld [vmem:[%s3 + $0xd8] sm:$0xff]
      %v5055 = vld [vmem:[%s3 + $0xe0] sm:$0xff]
      %v5056 = vld [vmem:[%s3 + $0xe8] sm:$0xff]
      %v5057 = vld [vmem:[%s3 + $0xf0] sm:$0xff]
      %v5058 = vld [vmem:[%s3 + $0xf8] sm:$0xff]
      %v5059 = vld [vmem:[%s3 + $0x100] sm:$0xff]
      %v5060 = vld [vmem:[%s3 + $0x108] sm:$0xff]
      %v5061 = vld [vmem:[%s3 + $0x110] sm:$0xff]
      %v5062 = vld [vmem:[%s3 + $0x118] sm:$0xff]
      %v5063 = vld [vmem:[%s3 + $0x120] sm:$0xff]
      %v5064 = vld [vmem:[%s3 + $0x128] sm:$0xff]
      %v5065 = vld [vmem:[%s3 + $0x130] sm:$0xff]
      %v5066 = vld [vmem:[%s3 + $0x138] sm:$0xff]
      %v5067 = vld [vmem:[%s3 + $0x140] sm:$0xff]
      %v5068 = vld [vmem:[%s3 + $0x148] sm:$0xff]
      %v5069 = vld [vmem:[%s3 + $0x150] sm:$0xff]
      %v5070 = vld [vmem:[%s3 + $0x158] sm:$0xff]
      %v5071 = vld [vmem:[%s3 + $0x160] sm:$0xff]
      %v5072 = vld [vmem:[%s3 + $0x168] sm:$0xff]
      %v5073 = vld [vmem:[%s3 + $0x170] sm:$0xff]
      %v5074 = vld [vmem:[%s3 + $0x178] sm:$0xff]
      %v5075 = vld [vmem:[%s3 + $0x180] sm:$0xff]
      %v5076 = vld [vmem:[%s3 + $0x188] sm:$0xff]
      %v5077 = vld [vmem:[%s3 + $0x190] sm:$0xff]
      %v5078 = vld [vmem:[%s3 + $0x198] sm:$0xff]
      %v5079 = vld [vmem:[%s3 + $0x1a0] sm:$0xff]
      %v5080 = vld [vmem:[%s3 + $0x1a8] sm:$0xff]
      %v5081 = vld [vmem:[%s3 + $0x1b0] sm:$0xff]
      %v5082 = vld [vmem:[%s3 + $0x1b8] sm:$0xff]
      %v5083 = vld [vmem:[%s3 + $0x1c0] sm:$0xff]
      %v5084 = vld [vmem:[%s3 + $0x1c8] sm:$0xff]
      %v5085 = vld [vmem:[%s3 + $0x1d0] sm:$0xff]
      %v5086 = vld [vmem:[%s3 + $0x1d8] sm:$0xff]
      %v5087 = vld [vmem:[%s3 + $0x1e0] sm:$0xff]
      %v5088 = vld [vmem:[%s3 + $0x1e8] sm:$0xff]
      %v5089 = vld [vmem:[%s3 + $0x1f0] sm:$0xff]
      %v5090 = vld [vmem:[%s3 + $0x1f8] sm:$0xff]
      %v5091 = vld [vmem:[%s4] sm:$0x3]
      %v5093 = vperm.slane %v5091, 0
      %v5094 = vperm.slane %v5091, 1
      %v5161 = vunpack.c.l.b16 %v5027
      %v5162 = vunpack.c.h.b16 %v5027
      %v5163 = vunpack.c.l.b16 %v5028
      %v5164 = vunpack.c.h.b16 %v5028
      %v5165 = vunpack.c.l.b16 %v5029
      %v5166 = vunpack.c.h.b16 %v5029
      %v5167 = vunpack.c.l.b16 %v5030
      %v5168 = vunpack.c.h.b16 %v5030
      %v5169 = vunpack.c.l.b16 %v5031
      %v5170 = vunpack.c.h.b16 %v5031
      %v5171 = vunpack.c.l.b16 %v5032
      %v5172 = vunpack.c.h.b16 %v5032
      %v5173 = vunpack.c.l.b16 %v5033
      %v5174 = vunpack.c.h.b16 %v5033
      %v5175 = vunpack.c.l.b16 %v5034
      %v5176 = vunpack.c.h.b16 %v5034
      %v5177 = vunpack.c.l.b16 %v5035
      %v5178 = vunpack.c.h.b16 %v5035
      %v5179 = vunpack.c.l.b16 %v5036
      %v5180 = vunpack.c.h.b16 %v5036
      %v5181 = vunpack.c.l.b16 %v5037
      %v5182 = vunpack.c.h.b16 %v5037
      %v5183 = vunpack.c.l.b16 %v5038
      %v5184 = vunpack.c.h.b16 %v5038
      %v5185 = vunpack.c.l.b16 %v5039
      %v5186 = vunpack.c.h.b16 %v5039
      %v5187 = vunpack.c.l.b16 %v5040
      %v5188 = vunpack.c.h.b16 %v5040
      %v5189 = vunpack.c.l.b16 %v5041
      %v5190 = vunpack.c.h.b16 %v5041
      %v5191 = vunpack.c.l.b16 %v5042
      %v5192 = vunpack.c.h.b16 %v5042
      %v5193 = vunpack.c.l.b16 %v5043
      %v5194 = vunpack.c.h.b16 %v5043
      %v5195 = vunpack.c.l.b16 %v5044
      %v5196 = vunpack.c.h.b16 %v5044
      %v5197 = vunpack.c.l.b16 %v5045
      %v5198 = vunpack.c.h.b16 %v5045
      %v5199 = vunpack.c.l.b16 %v5046
      %v5200 = vunpack.c.h.b16 %v5046
      %v5201 = vunpack.c.l.b16 %v5047
      %v5202 = vunpack.c.h.b16 %v5047
      %v5203 = vunpack.c.l.b16 %v5048
      %v5204 = vunpack.c.h.b16 %v5048
      %v5205 = vunpack.c.l.b16 %v5049
      %v5206 = vunpack.c.h.b16 %v5049
      %v5207 = vunpack.c.l.b16 %v5050
      %v5208 = vunpack.c.h.b16 %v5050
      %v5209 = vunpack.c.l.b16 %v5051
      %v5210 = vunpack.c.h.b16 %v5051
      %v5211 = vunpack.c.l.b16 %v5052
      %v5212 = vunpack.c.h.b16 %v5052
      %v5213 = vunpack.c.l.b16 %v5053
      %v5214 = vunpack.c.h.b16 %v5053
      %v5215 = vunpack.c.l.b16 %v5054
      %v5216 = vunpack.c.h.b16 %v5054
      %v5217 = vunpack.c.l.b16 %v5055
      %v5218 = vunpack.c.h.b16 %v5055
      %v5219 = vunpack.c.l.b16 %v5056
      %v5220 = vunpack.c.h.b16 %v5056
      %v5221 = vunpack.c.l.b16 %v5057
      %v5222 = vunpack.c.h.b16 %v5057
      %v5223 = vunpack.c.l.b16 %v5058
      %v5224 = vunpack.c.h.b16 %v5058
      %v5225 = vunpack.c.l.b16 %v5059
      %v5226 = vunpack.c.h.b16 %v5059
      %v5227 = vunpack.c.l.b16 %v5060
      %v5228 = vunpack.c.h.b16 %v5060
      %v5229 = vunpack.c.l.b16 %v5061
      %v5230 = vunpack.c.h.b16 %v5061
      %v5231 = vunpack.c.l.b16 %v5062
      %v5232 = vunpack.c.h.b16 %v5062
      %v5233 = vunpack.c.l.b16 %v5063
      %v5234 = vunpack.c.h.b16 %v5063
      %v5235 = vunpack.c.l.b16 %v5064
      %v5236 = vunpack.c.h.b16 %v5064
      %v5237 = vunpack.c.l.b16 %v5065
      %v5238 = vunpack.c.h.b16 %v5065
      %v5239 = vunpack.c.l.b16 %v5066
      %v5240 = vunpack.c.h.b16 %v5066
      %v5241 = vunpack.c.l.b16 %v5067
      %v5242 = vunpack.c.h.b16 %v5067
      %v5243 = vunpack.c.l.b16 %v5068
      %v5244 = vunpack.c.h.b16 %v5068
      %v5245 = vunpack.c.l.b16 %v5069
      %v5246 = vunpack.c.h.b16 %v5069
      %v5247 = vunpack.c.l.b16 %v5070
      %v5248 = vunpack.c.h.b16 %v5070
      %v5249 = vunpack.c.l.b16 %v5071
      %v5250 = vunpack.c.h.b16 %v5071
      %v5251 = vunpack.c.l.b16 %v5072
      %v5252 = vunpack.c.h.b16 %v5072
      %v5253 = vunpack.c.l.b16 %v5073
      %v5254 = vunpack.c.h.b16 %v5073
      %v5255 = vunpack.c.l.b16 %v5074
      %v5256 = vunpack.c.h.b16 %v5074
      %v5257 = vunpack.c.l.b16 %v5075
      %v5258 = vunpack.c.h.b16 %v5075
      %v5259 = vunpack.c.l.b16 %v5076
      %v5260 = vunpack.c.h.b16 %v5076
      %v5261 = vunpack.c.l.b16 %v5077
      %v5262 = vunpack.c.h.b16 %v5077
      %v5263 = vunpack.c.l.b16 %v5078
      %v5264 = vunpack.c.h.b16 %v5078
      %v5265 = vunpack.c.l.b16 %v5079
      %v5266 = vunpack.c.h.b16 %v5079
      %v5267 = vunpack.c.l.b16 %v5080
      %v5268 = vunpack.c.h.b16 %v5080
      %v5269 = vunpack.c.l.b16 %v5081
      %v5270 = vunpack.c.h.b16 %v5081
      %v5271 = vunpack.c.l.b16 %v5082
      %v5272 = vunpack.c.h.b16 %v5082
      %v5273 = vunpack.c.l.b16 %v5083
      %v5274 = vunpack.c.h.b16 %v5083
      %v5275 = vunpack.c.l.b16 %v5084
      %v5276 = vunpack.c.h.b16 %v5084
      %v5277 = vunpack.c.l.b16 %v5085
      %v5278 = vunpack.c.h.b16 %v5085
      %v5279 = vunpack.c.l.b16 %v5086
      %v5280 = vunpack.c.h.b16 %v5086
      %v5281 = vunpack.c.l.b16 %v5087
      %v5282 = vunpack.c.h.b16 %v5087
      %v5283 = vunpack.c.l.b16 %v5088
      %v5284 = vunpack.c.h.b16 %v5088
      %v5285 = vunpack.c.l.b16 %v5089
      %v5286 = vunpack.c.h.b16 %v5089
      %v5287 = vunpack.c.l.b16 %v5090
      %v5288 = vunpack.c.h.b16 %v5090
      %v5289 = vpack.c.b16 %v5163, %v5161
      %v5290 = vpack.c.b16 %v5164, %v5162
      %v5291 = vpack.c.b16 %v5167, %v5165
      %v5292 = vpack.c.b16 %v5168, %v5166
      %v5293 = vpack.c.b16 %v5171, %v5169
      %v5294 = vpack.c.b16 %v5172, %v5170
      %v5295 = vpack.c.b16 %v5175, %v5173
      %v5296 = vpack.c.b16 %v5176, %v5174
      %v5297 = vpack.c.b16 %v5179, %v5177
      %v5298 = vpack.c.b16 %v5180, %v5178
      %v5299 = vpack.c.b16 %v5183, %v5181
      %v5300 = vpack.c.b16 %v5184, %v5182
      %v5301 = vpack.c.b16 %v5187, %v5185
      %v5302 = vpack.c.b16 %v5188, %v5186
      %v5303 = vpack.c.b16 %v5191, %v5189
      %v5304 = vpack.c.b16 %v5192, %v5190
      %v5305 = vpack.c.b16 %v5195, %v5193
      %v5306 = vpack.c.b16 %v5196, %v5194
      %v5307 = vpack.c.b16 %v5199, %v5197
      %v5308 = vpack.c.b16 %v5200, %v5198
      %v5309 = vpack.c.b16 %v5203, %v5201
      %v5310 = vpack.c.b16 %v5204, %v5202
      %v5311 = vpack.c.b16 %v5207, %v5205
      %v5312 = vpack.c.b16 %v5208, %v5206
      %v5313 = vpack.c.b16 %v5211, %v5209
      %v5314 = vpack.c.b16 %v5212, %v5210
      %v5315 = vpack.c.b16 %v5215, %v5213
      %v5316 = vpack.c.b16 %v5216, %v5214
      %v5317 = vpack.c.b16 %v5219, %v5217
      %v5318 = vpack.c.b16 %v5220, %v5218
      %v5319 = vpack.c.b16 %v5223, %v5221
      %v5320 = vpack.c.b16 %v5224, %v5222
      %v5321 = vpack.c.b16 %v5227, %v5225
      %v5322 = vpack.c.b16 %v5228, %v5226
      %v5323 = vpack.c.b16 %v5231, %v5229
      %v5324 = vpack.c.b16 %v5232, %v5230
      %v5325 = vpack.c.b16 %v5235, %v5233
      %v5326 = vpack.c.b16 %v5236, %v5234
      %v5327 = vpack.c.b16 %v5239, %v5237
      %v5328 = vpack.c.b16 %v5240, %v5238
      %v5329 = vpack.c.b16 %v5243, %v5241
      %v5330 = vpack.c.b16 %v5244, %v5242
      %v5331 = vpack.c.b16 %v5247, %v5245
      %v5332 = vpack.c.b16 %v5248, %v5246
      %v5333 = vpack.c.b16 %v5251, %v5249
      %v5334 = vpack.c.b16 %v5252, %v5250
      %v5335 = vpack.c.b16 %v5255, %v5253
      %v5336 = vpack.c.b16 %v5256, %v5254
      %v5337 = vpack.c.b16 %v5259, %v5257
      %v5338 = vpack.c.b16 %v5260, %v5258
      %v5339 = vpack.c.b16 %v5263, %v5261
      %v5340 = vpack.c.b16 %v5264, %v5262
      %v5341 = vpack.c.b16 %v5267, %v5265
      %v5342 = vpack.c.b16 %v5268, %v5266
      %v5343 = vpack.c.b16 %v5271, %v5269
      %v5344 = vpack.c.b16 %v5272, %v5270
      %v5345 = vpack.c.b16 %v5275, %v5273
      %v5346 = vpack.c.b16 %v5276, %v5274
      %v5347 = vpack.c.b16 %v5279, %v5277
      %v5348 = vpack.c.b16 %v5280, %v5278
      %v5349 = vpack.c.b16 %v5283, %v5281
      %v5350 = vpack.c.b16 %v5284, %v5282
      %v5351 = vpack.c.b16 %v5287, %v5285
      %v5352 = vpack.c.b16 %v5288, %v5286
      %5417 = vmatpush.bf16.msra.mxu0 %v5303
      %5418 = vmatpush.bf16.msra.mxu0 %v5301
      %5419 = vmatpush.bf16.msra.mxu0 %v5299
      %5420 = vmatpush.bf16.msra.mxu0 %v5297
      %5421 = vmatpush.bf16.msra.mxu0 %v5295
      %5422 = vmatpush.bf16.msra.mxu0 %v5293
      %5423 = vmatpush.bf16.msra.mxu0 %v5291
      %5424 = vmatpush.bf16.msra.mxu0 %v5289
      %5425 = vmatmul.bf16.gmra.mxu0 %v4963
      %v5426 = vpop.f32.mrf.mxu0
      %v5427 = vadd.f32 %v5093, %v5426
      %v5428 = vpop.f32.mrf.mxu0
      %v5429 = vadd.f32 %v5093, %v5428
      %5430 = vmatmul.bf16.gmra.mxu0 %v4967
      %v5431 = vpop.f32.mrf.mxu0
      %v5432 = vadd.f32 %v5093, %v5431
      %v5433 = vpop.f32.mrf.mxu0
      %v5434 = vadd.f32 %v5093, %v5433
      %5435 = vmatmul.bf16.gmra.mxu0 %v4971
      %v5436 = vpop.f32.mrf.mxu0
      %v5437 = vadd.f32 %v5093, %v5436
      %v5438 = vpop.f32.mrf.mxu0
      %v5439 = vadd.f32 %v5093, %v5438
      %5440 = vmatmul.bf16.gmra.mxu0 %v4975
      %v5441 = vpop.f32.mrf.mxu0
      %v5442 = vadd.f32 %v5093, %v5441
      %v5443 = vpop.f32.mrf.mxu0
      %v5444 = vadd.f32 %v5093, %v5443
      %5445 = vmatmul.bf16.gmra.mxu0 %v4979
      %v5446 = vpop.f32.mrf.mxu0
      %v5447 = vadd.f32 %v5093, %v5446
      %v5448 = vpop.f32.mrf.mxu0
      %v5449 = vadd.f32 %v5093, %v5448
      %5450 = vmatmul.bf16.gmra.mxu0 %v4983
      %v5451 = vpop.f32.mrf.mxu0
      %v5452 = vadd.f32 %v5093, %v5451
      %v5453 = vpop.f32.mrf.mxu0
      %v5454 = vadd.f32 %v5093, %v5453
      %5455 = vmatmul.bf16.gmra.mxu0 %v4987
      %v5456 = vpop.f32.mrf.mxu0
      %v5457 = vadd.f32 %v5093, %v5456
      %v5458 = vpop.f32.mrf.mxu0
      %v5459 = vadd.f32 %v5093, %v5458
      %5460 = vmatmul.bf16.gmra.mxu0 %v4991
      %v5461 = vpop.f32.mrf.mxu0
      %v5462 = vadd.f32 %v5093, %v5461
      %v5463 = vpop.f32.mrf.mxu0
      %v5464 = vadd.f32 %v5093, %v5463
      %5465 = vmatmul.bf16.gmra.mxu0 %v4995
      %v5466 = vpop.f32.mrf.mxu0
      %v5467 = vadd.f32 %v5093, %v5466
      %v5468 = vpop.f32.mrf.mxu0
      %v5469 = vadd.f32 %v5093, %v5468
      %5470 = vmatmul.bf16.gmra.mxu0 %v4999
      %v5471 = vpop.f32.mrf.mxu0
      %v5472 = vadd.f32 %v5093, %v5471
      %v5473 = vpop.f32.mrf.mxu0
      %v5474 = vadd.f32 %v5093, %v5473
      %5475 = vmatmul.bf16.gmra.mxu0 %v5003
      %v5476 = vpop.f32.mrf.mxu0
      %v5477 = vadd.f32 %v5093, %v5476
      %v5478 = vpop.f32.mrf.mxu0
      %v5479 = vadd.f32 %v5093, %v5478
      %5480 = vmatmul.bf16.gmra.mxu0 %v5007
      %v5481 = vpop.f32.mrf.mxu0
      %v5482 = vadd.f32 %v5093, %v5481
      %v5483 = vpop.f32.mrf.mxu0
      %v5484 = vadd.f32 %v5093, %v5483
      %5485 = vmatmul.bf16.gmra.mxu0 %v5011
      %v5486 = vpop.f32.mrf.mxu0
      %v5487 = vadd.f32 %v5093, %v5486
      %v5488 = vpop.f32.mrf.mxu0
      %v5489 = vadd.f32 %v5093, %v5488
      %5490 = vmatmul.bf16.gmra.mxu0 %v5015
      %v5491 = vpop.f32.mrf.mxu0
      %v5492 = vadd.f32 %v5093, %v5491
      %v5493 = vpop.f32.mrf.mxu0
      %v5494 = vadd.f32 %v5093, %v5493
      %5495 = vmatmul.bf16.gmra.mxu0 %v5019
      %v5496 = vpop.f32.mrf.mxu0
      %v5497 = vadd.f32 %v5093, %v5496
      %v5498 = vpop.f32.mrf.mxu0
      %v5499 = vadd.f32 %v5093, %v5498
      %5500 = vmatmul.bf16.gmra.mxu0 %v5023
      %v5501 = vpop.f32.mrf.mxu0
      %v5502 = vadd.f32 %v5093, %v5501
      %v5503 = vpop.f32.mrf.mxu0
      %v5504 = vadd.f32 %v5093, %v5503
      %5505 = vdwg.mxu0
      %5506 = vmatpush.bf16.msra.mxu0 %v5319
      %5507 = vmatpush.bf16.msra.mxu0 %v5317
      %5508 = vmatpush.bf16.msra.mxu0 %v5315
      %5509 = vmatpush.bf16.msra.mxu0 %v5313
      %5510 = vmatpush.bf16.msra.mxu0 %v5311
      %5511 = vmatpush.bf16.msra.mxu0 %v5309
      %5512 = vmatpush.bf16.msra.mxu0 %v5307
      %5513 = vmatpush.bf16.msra.mxu0 %v5305
      %5514 = vmatmul.bf16.gmra.mxu0 %v4964
      %v5515 = vpop.f32.mrf.mxu0
      %v5516 = vadd.f32 %v5427, %v5515
      %v5517 = vpop.f32.mrf.mxu0
      %v5518 = vadd.f32 %v5429, %v5517
      %5519 = vmatmul.bf16.gmra.mxu0 %v4968
      %v5520 = vpop.f32.mrf.mxu0
      %v5521 = vadd.f32 %v5432, %v5520
      %v5522 = vpop.f32.mrf.mxu0
      %v5523 = vadd.f32 %v5434, %v5522
      %5524 = vmatmul.bf16.gmra.mxu0 %v4972
      %v5525 = vpop.f32.mrf.mxu0
      %v5526 = vadd.f32 %v5437, %v5525
      %v5527 = vpop.f32.mrf.mxu0
      %v5528 = vadd.f32 %v5439, %v5527
      %5529 = vmatmul.bf16.gmra.mxu0 %v4976
      %v5530 = vpop.f32.mrf.mxu0
      %v5531 = vadd.f32 %v5442, %v5530
      %v5532 = vpop.f32.mrf.mxu0
      %v5533 = vadd.f32 %v5444, %v5532
      %5534 = vmatmul.bf16.gmra.mxu0 %v4980
      %v5535 = vpop.f32.mrf.mxu0
      %v5536 = vadd.f32 %v5447, %v5535
      %v5537 = vpop.f32.mrf.mxu0
      %v5538 = vadd.f32 %v5449, %v5537
      %5539 = vmatmul.bf16.gmra.mxu0 %v4984
      %v5540 = vpop.f32.mrf.mxu0
      %v5541 = vadd.f32 %v5452, %v5540
      %v5542 = vpop.f32.mrf.mxu0
      %v5543 = vadd.f32 %v5454, %v5542
      %5544 = vmatmul.bf16.gmra.mxu0 %v4988
      %v5545 = vpop.f32.mrf.mxu0
      %v5546 = vadd.f32 %v5457, %v5545
      %v5547 = vpop.f32.mrf.mxu0
      %v5548 = vadd.f32 %v5459, %v5547
      %5549 = vmatmul.bf16.gmra.mxu0 %v4992
      %v5550 = vpop.f32.mrf.mxu0
      %v5551 = vadd.f32 %v5462, %v5550
      %v5552 = vpop.f32.mrf.mxu0
      %v5553 = vadd.f32 %v5464, %v5552
      %5554 = vmatmul.bf16.gmra.mxu0 %v4996
      %v5555 = vpop.f32.mrf.mxu0
      %v5556 = vadd.f32 %v5467, %v5555
      %v5557 = vpop.f32.mrf.mxu0
      %v5558 = vadd.f32 %v5469, %v5557
      %5559 = vmatmul.bf16.gmra.mxu0 %v5000
      %v5560 = vpop.f32.mrf.mxu0
      %v5561 = vadd.f32 %v5472, %v5560
      %v5562 = vpop.f32.mrf.mxu0
      %v5563 = vadd.f32 %v5474, %v5562
      %5564 = vmatmul.bf16.gmra.mxu0 %v5004
      %v5565 = vpop.f32.mrf.mxu0
      %v5566 = vadd.f32 %v5477, %v5565
      %v5567 = vpop.f32.mrf.mxu0
      %v5568 = vadd.f32 %v5479, %v5567
      %5569 = vmatmul.bf16.gmra.mxu0 %v5008
      %v5570 = vpop.f32.mrf.mxu0
      %v5571 = vadd.f32 %v5482, %v5570
      %v5572 = vpop.f32.mrf.mxu0
      %v5573 = vadd.f32 %v5484, %v5572
      %5574 = vmatmul.bf16.gmra.mxu0 %v5012
      %v5575 = vpop.f32.mrf.mxu0
      %v5576 = vadd.f32 %v5487, %v5575
      %v5577 = vpop.f32.mrf.mxu0
      %v5578 = vadd.f32 %v5489, %v5577
      %5579 = vmatmul.bf16.gmra.mxu0 %v5016
      %v5580 = vpop.f32.mrf.mxu0
      %v5581 = vadd.f32 %v5492, %v5580
      %v5582 = vpop.f32.mrf.mxu0
      %v5583 = vadd.f32 %v5494, %v5582
      %5584 = vmatmul.bf16.gmra.mxu0 %v5020
      %v5585 = vpop.f32.mrf.mxu0
      %v5586 = vadd.f32 %v5497, %v5585
      %v5587 = vpop.f32.mrf.mxu0
      %v5588 = vadd.f32 %v5499, %v5587
      %5589 = vmatmul.bf16.gmra.mxu0 %v5024
      %v5590 = vpop.f32.mrf.mxu0
      %v5591 = vadd.f32 %v5502, %v5590
      %v5592 = vpop.f32.mrf.mxu0
      %v5593 = vadd.f32 %v5504, %v5592
      %5594 = vdwg.mxu0
      %5595 = vmatpush.bf16.msra.mxu0 %v5335
      %5596 = vmatpush.bf16.msra.mxu0 %v5333
      %5597 = vmatpush.bf16.msra.mxu0 %v5331
      %5598 = vmatpush.bf16.msra.mxu0 %v5329
      %5599 = vmatpush.bf16.msra.mxu0 %v5327
      %5600 = vmatpush.bf16.msra.mxu0 %v5325
      %5601 = vmatpush.bf16.msra.mxu0 %v5323
      %5602 = vmatpush.bf16.msra.mxu0 %v5321
      %5603 = vmatmul.bf16.gmra.mxu0 %v4965
      %v5604 = vpop.f32.mrf.mxu0
      %v5605 = vadd.f32 %v5516, %v5604
      %v5606 = vpop.f32.mrf.mxu0
      %v5607 = vadd.f32 %v5518, %v5606
      %5608 = vmatmul.bf16.gmra.mxu0 %v4969
      %v5609 = vpop.f32.mrf.mxu0
      %v5610 = vadd.f32 %v5521, %v5609
      %v5611 = vpop.f32.mrf.mxu0
      %v5612 = vadd.f32 %v5523, %v5611
      %5613 = vmatmul.bf16.gmra.mxu0 %v4973
      %v5614 = vpop.f32.mrf.mxu0
      %v5615 = vadd.f32 %v5526, %v5614
      %v5616 = vpop.f32.mrf.mxu0
      %v5617 = vadd.f32 %v5528, %v5616
      %5618 = vmatmul.bf16.gmra.mxu0 %v4977
      %v5619 = vpop.f32.mrf.mxu0
      %v5620 = vadd.f32 %v5531, %v5619
      %v5621 = vpop.f32.mrf.mxu0
      %v5622 = vadd.f32 %v5533, %v5621
      %5623 = vmatmul.bf16.gmra.mxu0 %v4981
      %v5624 = vpop.f32.mrf.mxu0
      %v5625 = vadd.f32 %v5536, %v5624
      %v5626 = vpop.f32.mrf.mxu0
      %v5627 = vadd.f32 %v5538, %v5626
      %5628 = vmatmul.bf16.gmra.mxu0 %v4985
      %v5629 = vpop.f32.mrf.mxu0
      %v5630 = vadd.f32 %v5541, %v5629
      %v5631 = vpop.f32.mrf.mxu0
      %v5632 = vadd.f32 %v5543, %v5631
      %5633 = vmatmul.bf16.gmra.mxu0 %v4989
      %v5634 = vpop.f32.mrf.mxu0
      %v5635 = vadd.f32 %v5546, %v5634
      %v5636 = vpop.f32.mrf.mxu0
      %v5637 = vadd.f32 %v5548, %v5636
      %5638 = vmatmul.bf16.gmra.mxu0 %v4993
      %v5639 = vpop.f32.mrf.mxu0
      %v5640 = vadd.f32 %v5551, %v5639
      %v5641 = vpop.f32.mrf.mxu0
      %v5642 = vadd.f32 %v5553, %v5641
      %5643 = vmatmul.bf16.gmra.mxu0 %v4997
      %v5644 = vpop.f32.mrf.mxu0
      %v5645 = vadd.f32 %v5556, %v5644
      %v5646 = vpop.f32.mrf.mxu0
      %v5647 = vadd.f32 %v5558, %v5646
      %5648 = vmatmul.bf16.gmra.mxu0 %v5001
      %v5649 = vpop.f32.mrf.mxu0
      %v5650 = vadd.f32 %v5561, %v5649
      %v5651 = vpop.f32.mrf.mxu0
      %v5652 = vadd.f32 %v5563, %v5651
      %5653 = vmatmul.bf16.gmra.mxu0 %v5005
      %v5654 = vpop.f32.mrf.mxu0
      %v5655 = vadd.f32 %v5566, %v5654
      %v5656 = vpop.f32.mrf.mxu0
      %v5657 = vadd.f32 %v5568, %v5656
      %5658 = vmatmul.bf16.gmra.mxu0 %v5009
      %v5659 = vpop.f32.mrf.mxu0
      %v5660 = vadd.f32 %v5571, %v5659
      %v5661 = vpop.f32.mrf.mxu0
      %v5662 = vadd.f32 %v5573, %v5661
      %5663 = vmatmul.bf16.gmra.mxu0 %v5013
      %v5664 = vpop.f32.mrf.mxu0
      %v5665 = vadd.f32 %v5576, %v5664
      %v5666 = vpop.f32.mrf.mxu0
      %v5667 = vadd.f32 %v5578, %v5666
      %5668 = vmatmul.bf16.gmra.mxu0 %v5017
      %v5669 = vpop.f32.mrf.mxu0
      %v5670 = vadd.f32 %v5581, %v5669
      %v5671 = vpop.f32.mrf.mxu0
      %v5672 = vadd.f32 %v5583, %v5671
      %5673 = vmatmul.bf16.gmra.mxu0 %v5021
      %v5674 = vpop.f32.mrf.mxu0
      %v5675 = vadd.f32 %v5586, %v5674
      %v5676 = vpop.f32.mrf.mxu0
      %v5677 = vadd.f32 %v5588, %v5676
      %5678 = vmatmul.bf16.gmra.mxu0 %v5025
      %v5679 = vpop.f32.mrf.mxu0
      %v5680 = vadd.f32 %v5591, %v5679
      %v5681 = vpop.f32.mrf.mxu0
      %v5682 = vadd.f32 %v5593, %v5681
      %5683 = vdwg.mxu0
      %5684 = vmatpush.bf16.msra.mxu0 %v5351
      %5685 = vmatpush.bf16.msra.mxu0 %v5349
      %5686 = vmatpush.bf16.msra.mxu0 %v5347
      %5687 = vmatpush.bf16.msra.mxu0 %v5345
      %5688 = vmatpush.bf16.msra.mxu0 %v5343
      %5689 = vmatpush.bf16.msra.mxu0 %v5341
      %5690 = vmatpush.bf16.msra.mxu0 %v5339
      %5691 = vmatpush.bf16.msra.mxu0 %v5337
      %5692 = vmatmul.bf16.gmra.mxu0 %v4966
      %v5693 = vpop.f32.mrf.mxu0
      %v5694 = vadd.f32 %v5605, %v5693
      %v5695 = vpop.f32.mrf.mxu0
      %v5696 = vadd.f32 %v5607, %v5695
      %5697 = vmatmul.bf16.gmra.mxu0 %v4970
      %v5698 = vpop.f32.mrf.mxu0
      %v5699 = vadd.f32 %v5610, %v5698
      %v5700 = vpop.f32.mrf.mxu0
      %v5701 = vadd.f32 %v5612, %v5700
      %5702 = vmatmul.bf16.gmra.mxu0 %v4974
      %v5703 = vpop.f32.mrf.mxu0
      %v5704 = vadd.f32 %v5615, %v5703
      %v5705 = vpop.f32.mrf.mxu0
      %v5706 = vadd.f32 %v5617, %v5705
      %5707 = vmatmul.bf16.gmra.mxu0 %v4978
      %v5708 = vpop.f32.mrf.mxu0
      %v5709 = vadd.f32 %v5620, %v5708
      %v5710 = vpop.f32.mrf.mxu0
      %v5711 = vadd.f32 %v5622, %v5710
      %5712 = vmatmul.bf16.gmra.mxu0 %v4982
      %v5713 = vpop.f32.mrf.mxu0
      %v5714 = vadd.f32 %v5625, %v5713
      %v5715 = vpop.f32.mrf.mxu0
      %v5716 = vadd.f32 %v5627, %v5715
      %5717 = vmatmul.bf16.gmra.mxu0 %v4986
      %v5718 = vpop.f32.mrf.mxu0
      %v5719 = vadd.f32 %v5630, %v5718
      %v5720 = vpop.f32.mrf.mxu0
      %v5721 = vadd.f32 %v5632, %v5720
      %5722 = vmatmul.bf16.gmra.mxu0 %v4990
      %v5723 = vpop.f32.mrf.mxu0
      %v5724 = vadd.f32 %v5635, %v5723
      %v5725 = vpop.f32.mrf.mxu0
      %v5726 = vadd.f32 %v5637, %v5725
      %5727 = vmatmul.bf16.gmra.mxu0 %v4994
      %v5728 = vpop.f32.mrf.mxu0
      %v5729 = vadd.f32 %v5640, %v5728
      %v5730 = vpop.f32.mrf.mxu0
      %v5731 = vadd.f32 %v5642, %v5730
      %5732 = vmatmul.bf16.gmra.mxu0 %v4998
      %v5733 = vpop.f32.mrf.mxu0
      %v5734 = vadd.f32 %v5645, %v5733
      %v5735 = vpop.f32.mrf.mxu0
      %v5736 = vadd.f32 %v5647, %v5735
      %5737 = vmatmul.bf16.gmra.mxu0 %v5002
      %v5738 = vpop.f32.mrf.mxu0
      %v5739 = vadd.f32 %v5650, %v5738
      %v5740 = vpop.f32.mrf.mxu0
      %v5741 = vadd.f32 %v5652, %v5740
      %5742 = vmatmul.bf16.gmra.mxu0 %v5006
      %v5743 = vpop.f32.mrf.mxu0
      %v5744 = vadd.f32 %v5655, %v5743
      %v5745 = vpop.f32.mrf.mxu0
      %v5746 = vadd.f32 %v5657, %v5745
      %5747 = vmatmul.bf16.gmra.mxu0 %v5010
      %v5748 = vpop.f32.mrf.mxu0
      %v5749 = vadd.f32 %v5660, %v5748
      %v5750 = vpop.f32.mrf.mxu0
      %v5751 = vadd.f32 %v5662, %v5750
      %5752 = vmatmul.bf16.gmra.mxu0 %v5014
      %v5753 = vpop.f32.mrf.mxu0
      %v5754 = vadd.f32 %v5665, %v5753
      %v5755 = vpop.f32.mrf.mxu0
      %v5756 = vadd.f32 %v5667, %v5755
      %5757 = vmatmul.bf16.gmra.mxu0 %v5018
      %v5758 = vpop.f32.mrf.mxu0
      %v5759 = vadd.f32 %v5670, %v5758
      %v5760 = vpop.f32.mrf.mxu0
      %v5761 = vadd.f32 %v5672, %v5760
      %5762 = vmatmul.bf16.gmra.mxu0 %v5022
      %v5763 = vpop.f32.mrf.mxu0
      %v5764 = vadd.f32 %v5675, %v5763
      %v5765 = vpop.f32.mrf.mxu0
      %v5766 = vadd.f32 %v5677, %v5765
      %5767 = vmatmul.bf16.gmra.mxu0 %v5026
      %v5768 = vpop.f32.mrf.mxu0
      %v5769 = vadd.f32 %v5680, %v5768
      %v5770 = vpop.f32.mrf.mxu0
      %v5771 = vadd.f32 %v5682, %v5770
      %5772 = vdwg.mxu0
      %5773 = vmatpush.bf16.msra.mxu0 %v5304
      %5774 = vmatpush.bf16.msra.mxu0 %v5302
      %5775 = vmatpush.bf16.msra.mxu0 %v5300
      %5776 = vmatpush.bf16.msra.mxu0 %v5298
      %5777 = vmatpush.bf16.msra.mxu0 %v5296
      %5778 = vmatpush.bf16.msra.mxu0 %v5294
      %5779 = vmatpush.bf16.msra.mxu0 %v5292
      %5780 = vmatpush.bf16.msra.mxu0 %v5290
      %5781 = vmatmul.bf16.gmra.mxu0 %v4963
      %v5782 = vpop.f32.mrf.mxu0
      %v5783 = vadd.f32 %v5094, %v5782
      %v5784 = vpop.f32.mrf.mxu0
      %v5785 = vadd.f32 %v5094, %v5784
      %5786 = vmatmul.bf16.gmra.mxu0 %v4967
      %v5787 = vpop.f32.mrf.mxu0
      %v5788 = vadd.f32 %v5094, %v5787
      %v5789 = vpop.f32.mrf.mxu0
      %v5790 = vadd.f32 %v5094, %v5789
      %5791 = vmatmul.bf16.gmra.mxu0 %v4971
      %v5792 = vpop.f32.mrf.mxu0
      %v5793 = vadd.f32 %v5094, %v5792
      %v5794 = vpop.f32.mrf.mxu0
      %v5795 = vadd.f32 %v5094, %v5794
      %5796 = vmatmul.bf16.gmra.mxu0 %v4975
      %v5797 = vpop.f32.mrf.mxu0
      %v5798 = vadd.f32 %v5094, %v5797
      %v5799 = vpop.f32.mrf.mxu0
      %v5800 = vadd.f32 %v5094, %v5799
      %5801 = vmatmul.bf16.gmra.mxu0 %v4979
      %v5802 = vpop.f32.mrf.mxu0
      %v5803 = vadd.f32 %v5094, %v5802
      %v5804 = vpop.f32.mrf.mxu0
      %v5805 = vadd.f32 %v5094, %v5804
      %5806 = vmatmul.bf16.gmra.mxu0 %v4983
      %v5807 = vpop.f32.mrf.mxu0
      %v5808 = vadd.f32 %v5094, %v5807
      %v5809 = vpop.f32.mrf.mxu0
      %v5810 = vadd.f32 %v5094, %v5809
      %5811 = vmatmul.bf16.gmra.mxu0 %v4987
      %v5812 = vpop.f32.mrf.mxu0
      %v5813 = vadd.f32 %v5094, %v5812
      %v5814 = vpop.f32.mrf.mxu0
      %v5815 = vadd.f32 %v5094, %v5814
      %5816 = vmatmul.bf16.gmra.mxu0 %v4991
      %v5817 = vpop.f32.mrf.mxu0
      %v5818 = vadd.f32 %v5094, %v5817
      %v5819 = vpop.f32.mrf.mxu0
      %v5820 = vadd.f32 %v5094, %v5819
      %5821 = vmatmul.bf16.gmra.mxu0 %v4995
      %v5822 = vpop.f32.mrf.mxu0
      %v5823 = vadd.f32 %v5094, %v5822
      %v5824 = vpop.f32.mrf.mxu0
      %v5825 = vadd.f32 %v5094, %v5824
      %5826 = vmatmul.bf16.gmra.mxu0 %v4999
      %v5827 = vpop.f32.mrf.mxu0
      %v5828 = vadd.f32 %v5094, %v5827
      %v5829 = vpop.f32.mrf.mxu0
      %v5830 = vadd.f32 %v5094, %v5829
      %5831 = vmatmul.bf16.gmra.mxu0 %v5003
      %v5832 = vpop.f32.mrf.mxu0
      %v5833 = vadd.f32 %v5094, %v5832
      %v5834 = vpop.f32.mrf.mxu0
      %v5835 = vadd.f32 %v5094, %v5834
      %5836 = vmatmul.bf16.gmra.mxu0 %v5007
      %v5837 = vpop.f32.mrf.mxu0
      %v5838 = vadd.f32 %v5094, %v5837
      %v5839 = vpop.f32.mrf.mxu0
      %v5840 = vadd.f32 %v5094, %v5839
      %5841 = vmatmul.bf16.gmra.mxu0 %v5011
      %v5842 = vpop.f32.mrf.mxu0
      %v5843 = vadd.f32 %v5094, %v5842
      %v5844 = vpop.f32.mrf.mxu0
      %v5845 = vadd.f32 %v5094, %v5844
      %5846 = vmatmul.bf16.gmra.mxu0 %v5015
      %v5847 = vpop.f32.mrf.mxu0
      %v5848 = vadd.f32 %v5094, %v5847
      %v5849 = vpop.f32.mrf.mxu0
      %v5850 = vadd.f32 %v5094, %v5849
      %5851 = vmatmul.bf16.gmra.mxu0 %v5019
      %v5852 = vpop.f32.mrf.mxu0
      %v5853 = vadd.f32 %v5094, %v5852
      %v5854 = vpop.f32.mrf.mxu0
      %v5855 = vadd.f32 %v5094, %v5854
      %5856 = vmatmul.bf16.gmra.mxu0 %v5023
      %v5857 = vpop.f32.mrf.mxu0
      %v5858 = vadd.f32 %v5094, %v5857
      %v5859 = vpop.f32.mrf.mxu0
      %v5860 = vadd.f32 %v5094, %v5859
      %5861 = vdwg.mxu0
      %5862 = vmatpush.bf16.msra.mxu0 %v5320
      %5863 = vmatpush.bf16.msra.mxu0 %v5318
      %5864 = vmatpush.bf16.msra.mxu0 %v5316
      %5865 = vmatpush.bf16.msra.mxu0 %v5314
      %5866 = vmatpush.bf16.msra.mxu0 %v5312
      %5867 = vmatpush.bf16.msra.mxu0 %v5310
      %5868 = vmatpush.bf16.msra.mxu0 %v5308
      %5869 = vmatpush.bf16.msra.mxu0 %v5306
      %5870 = vmatmul.bf16.gmra.mxu0 %v4964
      %v5871 = vpop.f32.mrf.mxu0
      %v5872 = vadd.f32 %v5783, %v5871
      %v5873 = vpop.f32.mrf.mxu0
      %v5874 = vadd.f32 %v5785, %v5873
      %5875 = vmatmul.bf16.gmra.mxu0 %v4968
      %v5876 = vpop.f32.mrf.mxu0
      %v5877 = vadd.f32 %v5788, %v5876
      %v5878 = vpop.f32.mrf.mxu0
      %v5879 = vadd.f32 %v5790, %v5878
      %5880 = vmatmul.bf16.gmra.mxu0 %v4972
      %v5881 = vpop.f32.mrf.mxu0
      %v5882 = vadd.f32 %v5793, %v5881
      %v5883 = vpop.f32.mrf.mxu0
      %v5884 = vadd.f32 %v5795, %v5883
      %5885 = vmatmul.bf16.gmra.mxu0 %v4976
      %v5886 = vpop.f32.mrf.mxu0
      %v5887 = vadd.f32 %v5798, %v5886
      %v5888 = vpop.f32.mrf.mxu0
      %v5889 = vadd.f32 %v5800, %v5888
      %5890 = vmatmul.bf16.gmra.mxu0 %v4980
      %v5891 = vpop.f32.mrf.mxu0
      %v5892 = vadd.f32 %v5803, %v5891
      %v5893 = vpop.f32.mrf.mxu0
      %v5894 = vadd.f32 %v5805, %v5893
      %5895 = vmatmul.bf16.gmra.mxu0 %v4984
      %v5896 = vpop.f32.mrf.mxu0
      %v5897 = vadd.f32 %v5808, %v5896
      %v5898 = vpop.f32.mrf.mxu0
      %v5899 = vadd.f32 %v5810, %v5898
      %5900 = vmatmul.bf16.gmra.mxu0 %v4988
      %v5901 = vpop.f32.mrf.mxu0
      %v5902 = vadd.f32 %v5813, %v5901
      %v5903 = vpop.f32.mrf.mxu0
      %v5904 = vadd.f32 %v5815, %v5903
      %5905 = vmatmul.bf16.gmra.mxu0 %v4992
      %v5906 = vpop.f32.mrf.mxu0
      %v5907 = vadd.f32 %v5818, %v5906
      %v5908 = vpop.f32.mrf.mxu0
      %v5909 = vadd.f32 %v5820, %v5908
      %5910 = vmatmul.bf16.gmra.mxu0 %v4996
      %v5911 = vpop.f32.mrf.mxu0
      %v5912 = vadd.f32 %v5823, %v5911
      %v5913 = vpop.f32.mrf.mxu0
      %v5914 = vadd.f32 %v5825, %v5913
      %5915 = vmatmul.bf16.gmra.mxu0 %v5000
      %v5916 = vpop.f32.mrf.mxu0
      %v5917 = vadd.f32 %v5828, %v5916
      %v5918 = vpop.f32.mrf.mxu0
      %v5919 = vadd.f32 %v5830, %v5918
      %5920 = vmatmul.bf16.gmra.mxu0 %v5004
      %v5921 = vpop.f32.mrf.mxu0
      %v5922 = vadd.f32 %v5833, %v5921
      %v5923 = vpop.f32.mrf.mxu0
      %v5924 = vadd.f32 %v5835, %v5923
      %5925 = vmatmul.bf16.gmra.mxu0 %v5008
      %v5926 = vpop.f32.mrf.mxu0
      %v5927 = vadd.f32 %v5838, %v5926
      %v5928 = vpop.f32.mrf.mxu0
      %v5929 = vadd.f32 %v5840, %v5928
      %5930 = vmatmul.bf16.gmra.mxu0 %v5012
      %v5931 = vpop.f32.mrf.mxu0
      %v5932 = vadd.f32 %v5843, %v5931
      %v5933 = vpop.f32.mrf.mxu0
      %v5934 = vadd.f32 %v5845, %v5933
      %5935 = vmatmul.bf16.gmra.mxu0 %v5016
      %v5936 = vpop.f32.mrf.mxu0
      %v5937 = vadd.f32 %v5848, %v5936
      %v5938 = vpop.f32.mrf.mxu0
      %v5939 = vadd.f32 %v5850, %v5938
      %5940 = vmatmul.bf16.gmra.mxu0 %v5020
      %v5941 = vpop.f32.mrf.mxu0
      %v5942 = vadd.f32 %v5853, %v5941
      %v5943 = vpop.f32.mrf.mxu0
      %v5944 = vadd.f32 %v5855, %v5943
      %5945 = vmatmul.bf16.gmra.mxu0 %v5024
      %v5946 = vpop.f32.mrf.mxu0
      %v5947 = vadd.f32 %v5858, %v5946
      %v5948 = vpop.f32.mrf.mxu0
      %v5949 = vadd.f32 %v5860, %v5948
      %5950 = vdwg.mxu0
      %5951 = vmatpush.bf16.msra.mxu0 %v5336
      %5952 = vmatpush.bf16.msra.mxu0 %v5334
      %5953 = vmatpush.bf16.msra.mxu0 %v5332
      %5954 = vmatpush.bf16.msra.mxu0 %v5330
      %5955 = vmatpush.bf16.msra.mxu0 %v5328
      %5956 = vmatpush.bf16.msra.mxu0 %v5326
      %5957 = vmatpush.bf16.msra.mxu0 %v5324
      %5958 = vmatpush.bf16.msra.mxu0 %v5322
      %5959 = vmatmul.bf16.gmra.mxu0 %v4965
      %v5960 = vpop.f32.mrf.mxu0
      %v5961 = vadd.f32 %v5872, %v5960
      %v5962 = vpop.f32.mrf.mxu0
      %v5963 = vadd.f32 %v5874, %v5962
      %5964 = vmatmul.bf16.gmra.mxu0 %v4969
      %v5965 = vpop.f32.mrf.mxu0
      %v5966 = vadd.f32 %v5877, %v5965
      %v5967 = vpop.f32.mrf.mxu0
      %v5968 = vadd.f32 %v5879, %v5967
      %5969 = vmatmul.bf16.gmra.mxu0 %v4973
      %v5970 = vpop.f32.mrf.mxu0
      %v5971 = vadd.f32 %v5882, %v5970
      %v5972 = vpop.f32.mrf.mxu0
      %v5973 = vadd.f32 %v5884, %v5972
      %5974 = vmatmul.bf16.gmra.mxu0 %v4977
      %v5975 = vpop.f32.mrf.mxu0
      %v5976 = vadd.f32 %v5887, %v5975
      %v5977 = vpop.f32.mrf.mxu0
      %v5978 = vadd.f32 %v5889, %v5977
      %5979 = vmatmul.bf16.gmra.mxu0 %v4981
      %v5980 = vpop.f32.mrf.mxu0
      %v5981 = vadd.f32 %v5892, %v5980
      %v5982 = vpop.f32.mrf.mxu0
      %v5983 = vadd.f32 %v5894, %v5982
      %5984 = vmatmul.bf16.gmra.mxu0 %v4985
      %v5985 = vpop.f32.mrf.mxu0
      %v5986 = vadd.f32 %v5897, %v5985
      %v5987 = vpop.f32.mrf.mxu0
      %v5988 = vadd.f32 %v5899, %v5987
      %5989 = vmatmul.bf16.gmra.mxu0 %v4989
      %v5990 = vpop.f32.mrf.mxu0
      %v5991 = vadd.f32 %v5902, %v5990
      %v5992 = vpop.f32.mrf.mxu0
      %v5993 = vadd.f32 %v5904, %v5992
      %5994 = vmatmul.bf16.gmra.mxu0 %v4993
      %v5995 = vpop.f32.mrf.mxu0
      %v5996 = vadd.f32 %v5907, %v5995
      %v5997 = vpop.f32.mrf.mxu0
      %v5998 = vadd.f32 %v5909, %v5997
      %5999 = vmatmul.bf16.gmra.mxu0 %v4997
      %v6000 = vpop.f32.mrf.mxu0
      %v6001 = vadd.f32 %v5912, %v6000
      %v6002 = vpop.f32.mrf.mxu0
      %v6003 = vadd.f32 %v5914, %v6002
      %6004 = vmatmul.bf16.gmra.mxu0 %v5001
      %v6005 = vpop.f32.mrf.mxu0
      %v6006 = vadd.f32 %v5917, %v6005
      %v6007 = vpop.f32.mrf.mxu0
      %v6008 = vadd.f32 %v5919, %v6007
      %6009 = vmatmul.bf16.gmra.mxu0 %v5005
      %v6010 = vpop.f32.mrf.mxu0
      %v6011 = vadd.f32 %v5922, %v6010
      %v6012 = vpop.f32.mrf.mxu0
      %v6013 = vadd.f32 %v5924, %v6012
      %6014 = vmatmul.bf16.gmra.mxu0 %v5009
      %v6015 = vpop.f32.mrf.mxu0
      %v6016 = vadd.f32 %v5927, %v6015
      %v6017 = vpop.f32.mrf.mxu0
      %v6018 = vadd.f32 %v5929, %v6017
      %6019 = vmatmul.bf16.gmra.mxu0 %v5013
      %v6020 = vpop.f32.mrf.mxu0
      %v6021 = vadd.f32 %v5932, %v6020
      %v6022 = vpop.f32.mrf.mxu0
      %v6023 = vadd.f32 %v5934, %v6022
      %6024 = vmatmul.bf16.gmra.mxu0 %v5017
      %v6025 = vpop.f32.mrf.mxu0
      %v6026 = vadd.f32 %v5937, %v6025
      %v6027 = vpop.f32.mrf.mxu0
      %v6028 = vadd.f32 %v5939, %v6027
      %6029 = vmatmul.bf16.gmra.mxu0 %v5021
      %v6030 = vpop.f32.mrf.mxu0
      %v6031 = vadd.f32 %v5942, %v6030
      %v6032 = vpop.f32.mrf.mxu0
      %v6033 = vadd.f32 %v5944, %v6032
      %6034 = vmatmul.bf16.gmra.mxu0 %v5025
      %v6035 = vpop.f32.mrf.mxu0
      %v6036 = vadd.f32 %v5947, %v6035
      %v6037 = vpop.f32.mrf.mxu0
      %v6038 = vadd.f32 %v5949, %v6037
      %6039 = vdwg.mxu0
      %6040 = vmatpush.bf16.msra.mxu0 %v5352
      %6041 = vmatpush.bf16.msra.mxu0 %v5350
      %6042 = vmatpush.bf16.msra.mxu0 %v5348
      %6043 = vmatpush.bf16.msra.mxu0 %v5346
      %6044 = vmatpush.bf16.msra.mxu0 %v5344
      %6045 = vmatpush.bf16.msra.mxu0 %v5342
      %6046 = vmatpush.bf16.msra.mxu0 %v5340
      %6047 = vmatpush.bf16.msra.mxu0 %v5338
      %6048 = vmatmul.bf16.gmra.mxu0 %v4966
      %v6049 = vpop.f32.mrf.mxu0
      %v6050 = vadd.f32 %v5961, %v6049
      %v6051 = vpop.f32.mrf.mxu0
      %v6052 = vadd.f32 %v5963, %v6051
      %6053 = vmatmul.bf16.gmra.mxu0 %v4970
      %v6054 = vpop.f32.mrf.mxu0
      %v6055 = vadd.f32 %v5966, %v6054
      %v6056 = vpop.f32.mrf.mxu0
      %v6057 = vadd.f32 %v5968, %v6056
      %6058 = vmatmul.bf16.gmra.mxu0 %v4974
      %v6059 = vpop.f32.mrf.mxu0
      %v6060 = vadd.f32 %v5971, %v6059
      %v6061 = vpop.f32.mrf.mxu0
      %v6062 = vadd.f32 %v5973, %v6061
      %6063 = vmatmul.bf16.gmra.mxu0 %v4978
      %v6064 = vpop.f32.mrf.mxu0
      %v6065 = vadd.f32 %v5976, %v6064
      %v6066 = vpop.f32.mrf.mxu0
      %v6067 = vadd.f32 %v5978, %v6066
      %6068 = vmatmul.bf16.gmra.mxu0 %v4982
      %v6069 = vpop.f32.mrf.mxu0
      %v6070 = vadd.f32 %v5981, %v6069
      %v6071 = vpop.f32.mrf.mxu0
      %v6072 = vadd.f32 %v5983, %v6071
      %6073 = vmatmul.bf16.gmra.mxu0 %v4986
      %v6074 = vpop.f32.mrf.mxu0
      %v6075 = vadd.f32 %v5986, %v6074
      %v6076 = vpop.f32.mrf.mxu0
      %v6077 = vadd.f32 %v5988, %v6076
      %6078 = vmatmul.bf16.gmra.mxu0 %v4990
      %v6079 = vpop.f32.mrf.mxu0
      %v6080 = vadd.f32 %v5991, %v6079
      %v6081 = vpop.f32.mrf.mxu0
      %v6082 = vadd.f32 %v5993, %v6081
      %6083 = vmatmul.bf16.gmra.mxu0 %v4994
      %v6084 = vpop.f32.mrf.mxu0
      %v6085 = vadd.f32 %v5996, %v6084
      %v6086 = vpop.f32.mrf.mxu0
      %v6087 = vadd.f32 %v5998, %v6086
      %6088 = vmatmul.bf16.gmra.mxu0 %v4998
      %v6089 = vpop.f32.mrf.mxu0
      %v6090 = vadd.f32 %v6001, %v6089
      %v6091 = vpop.f32.mrf.mxu0
      %v6092 = vadd.f32 %v6003, %v6091
      %6093 = vmatmul.bf16.gmra.mxu0 %v5002
      %v6094 = vpop.f32.mrf.mxu0
      %v6095 = vadd.f32 %v6006, %v6094
      %v6096 = vpop.f32.mrf.mxu0
      %v6097 = vadd.f32 %v6008, %v6096
      %6098 = vmatmul.bf16.gmra.mxu0 %v5006
      %v6099 = vpop.f32.mrf.mxu0
      %v6100 = vadd.f32 %v6011, %v6099
      %v6101 = vpop.f32.mrf.mxu0
      %v6102 = vadd.f32 %v6013, %v6101
      %6103 = vmatmul.bf16.gmra.mxu0 %v5010
      %v6104 = vpop.f32.mrf.mxu0
      %v6105 = vadd.f32 %v6016, %v6104
      %v6106 = vpop.f32.mrf.mxu0
      %v6107 = vadd.f32 %v6018, %v6106
      %6108 = vmatmul.bf16.gmra.mxu0 %v5014
      %v6109 = vpop.f32.mrf.mxu0
      %v6110 = vadd.f32 %v6021, %v6109
      %v6111 = vpop.f32.mrf.mxu0
      %v6112 = vadd.f32 %v6023, %v6111
      %6113 = vmatmul.bf16.gmra.mxu0 %v5018
      %v6114 = vpop.f32.mrf.mxu0
      %v6115 = vadd.f32 %v6026, %v6114
      %v6116 = vpop.f32.mrf.mxu0
      %v6117 = vadd.f32 %v6028, %v6116
      %6118 = vmatmul.bf16.gmra.mxu0 %v5022
      %v6119 = vpop.f32.mrf.mxu0
      %v6120 = vadd.f32 %v6031, %v6119
      %v6121 = vpop.f32.mrf.mxu0
      %v6122 = vadd.f32 %v6033, %v6121
      %6123 = vmatmul.bf16.gmra.mxu0 %v5026
      %v6124 = vpop.f32.mrf.mxu0
      %v6125 = vadd.f32 %v6036, %v6124
      %v6126 = vpop.f32.mrf.mxu0
      %v6127 = vadd.f32 %v6038, %v6126
      %6128 = vdwg.mxu0
      %v6129 = vmax.f32 %v5694, 0.0
      %v6130 = vmax.f32 %v6050, 0.0
      %v6131 = vmax.f32 %v5696, 0.0
      %v6132 = vmax.f32 %v6052, 0.0
      %v6133 = vmax.f32 %v5699, 0.0
      %v6134 = vmax.f32 %v6055, 0.0
      %v6135 = vmax.f32 %v5701, 0.0
      %v6136 = vmax.f32 %v6057, 0.0
      %v6137 = vmax.f32 %v5704, 0.0
      %v6138 = vmax.f32 %v6060, 0.0
      %v6139 = vmax.f32 %v5706, 0.0
      %v6140 = vmax.f32 %v6062, 0.0
      %v6141 = vmax.f32 %v5709, 0.0
      %v6142 = vmax.f32 %v6065, 0.0
      %v6143 = vmax.f32 %v5711, 0.0
      %v6144 = vmax.f32 %v6067, 0.0
      %v6145 = vmax.f32 %v5714, 0.0
      %v6146 = vmax.f32 %v6070, 0.0
      %v6147 = vmax.f32 %v5716, 0.0
      %v6148 = vmax.f32 %v6072, 0.0
      %v6149 = vmax.f32 %v5719, 0.0
      %v6150 = vmax.f32 %v6075, 0.0
      %v6151 = vmax.f32 %v5721, 0.0
      %v6152 = vmax.f32 %v6077, 0.0
      %v6153 = vmax.f32 %v5724, 0.0
      %v6154 = vmax.f32 %v6080, 0.0
      %v6155 = vmax.f32 %v5726, 0.0
      %v6156 = vmax.f32 %v6082, 0.0
      %v6157 = vmax.f32 %v5729, 0.0
      %v6158 = vmax.f32 %v6085, 0.0
      %v6159 = vmax.f32 %v5731, 0.0
      %v6160 = vmax.f32 %v6087, 0.0
      %v6161 = vmax.f32 %v5734, 0.0
      %v6162 = vmax.f32 %v6090, 0.0
      %v6163 = vmax.f32 %v5736, 0.0
      %v6164 = vmax.f32 %v6092, 0.0
      %v6165 = vmax.f32 %v5739, 0.0
      %v6166 = vmax.f32 %v6095, 0.0
      %v6167 = vmax.f32 %v5741, 0.0
      %v6168 = vmax.f32 %v6097, 0.0
      %v6169 = vmax.f32 %v5744, 0.0
      %v6170 = vmax.f32 %v6100, 0.0
      %v6171 = vmax.f32 %v5746, 0.0
      %v6172 = vmax.f32 %v6102, 0.0
      %v6173 = vmax.f32 %v5749, 0.0
      %v6174 = vmax.f32 %v6105, 0.0
      %v6175 = vmax.f32 %v5751, 0.0
      %v6176 = vmax.f32 %v6107, 0.0
      %v6177 = vmax.f32 %v5754, 0.0
      %v6178 = vmax.f32 %v6110, 0.0
      %v6179 = vmax.f32 %v5756, 0.0
      %v6180 = vmax.f32 %v6112, 0.0
      %v6181 = vmax.f32 %v5759, 0.0
      %v6182 = vmax.f32 %v6115, 0.0
      %v6183 = vmax.f32 %v5761, 0.0
      %v6184 = vmax.f32 %v6117, 0.0
      %v6185 = vmax.f32 %v5764, 0.0
      %v6186 = vmax.f32 %v6120, 0.0
      %v6187 = vmax.f32 %v5766, 0.0
      %v6188 = vmax.f32 %v6122, 0.0
      %v6189 = vmax.f32 %v5769, 0.0
      %v6190 = vmax.f32 %v6125, 0.0
      %v6191 = vmax.f32 %v5771, 0.0
      %v6192 = vmax.f32 %v6127, 0.0
      %v6193 = vpack.c.bf16 %v6131, %v6129
      %v6194 = vpack.c.bf16 %v6132, %v6130
      %v6195 = vpack.c.bf16 %v6135, %v6133
      %v6196 = vpack.c.bf16 %v6136, %v6134
      %v6197 = vpack.c.bf16 %v6139, %v6137
      %v6198 = vpack.c.bf16 %v6140, %v6138
      %v6199 = vpack.c.bf16 %v6143, %v6141
      %v6200 = vpack.c.bf16 %v6144, %v6142
      %v6201 = vpack.c.bf16 %v6147, %v6145
      %v6202 = vpack.c.bf16 %v6148, %v6146
      %v6203 = vpack.c.bf16 %v6151, %v6149
      %v6204 = vpack.c.bf16 %v6152, %v6150
      %v6205 = vpack.c.bf16 %v6155, %v6153
      %v6206 = vpack.c.bf16 %v6156, %v6154
      %v6207 = vpack.c.bf16 %v6159, %v6157
      %v6208 = vpack.c.bf16 %v6160, %v6158
      %v6209 = vpack.c.bf16 %v6163, %v6161
      %v6210 = vpack.c.bf16 %v6164, %v6162
      %v6211 = vpack.c.bf16 %v6167, %v6165
      %v6212 = vpack.c.bf16 %v6168, %v6166
      %v6213 = vpack.c.bf16 %v6171, %v6169
      %v6214 = vpack.c.bf16 %v6172, %v6170
      %v6215 = vpack.c.bf16 %v6175, %v6173
      %v6216 = vpack.c.bf16 %v6176, %v6174
      %v6217 = vpack.c.bf16 %v6179, %v6177
      %v6218 = vpack.c.bf16 %v6180, %v6178
      %v6219 = vpack.c.bf16 %v6183, %v6181
      %v6220 = vpack.c.bf16 %v6184, %v6182
      %v6221 = vpack.c.bf16 %v6187, %v6185
      %v6222 = vpack.c.bf16 %v6188, %v6186
      %v6223 = vpack.c.bf16 %v6191, %v6189
      %v6224 = vpack.c.bf16 %v6192, %v6190
      %v6225 = vld [vmem:[%s5] sm:$0xf]
      %v6226 = vld [vmem:[%s5 + $0x4] sm:$0xf]
      %v6227 = vld [vmem:[%s5 + $0x8] sm:$0xf]
      %v6228 = vld [vmem:[%s5 + $0xc] sm:$0xf]
      %v6229 = vld [vmem:[%s5 + $0x10] sm:$0xf]
      %v6230 = vld [vmem:[%s5 + $0x14] sm:$0xf]
      %v6231 = vld [vmem:[%s5 + $0x18] sm:$0xf]
      %v6232 = vld [vmem:[%s5 + $0x1c] sm:$0xf]
      %v6233 = vld [vmem:[%s5 + $0x20] sm:$0xf]
      %v6234 = vld [vmem:[%s5 + $0x24] sm:$0xf]
      %v6235 = vld [vmem:[%s5 + $0x28] sm:$0xf]
      %v6236 = vld [vmem:[%s5 + $0x2c] sm:$0xf]
      %v6237 = vld [vmem:[%s5 + $0x30] sm:$0xf]
      %v6238 = vld [vmem:[%s5 + $0x34] sm:$0xf]
      %v6239 = vld [vmem:[%s5 + $0x38] sm:$0xf]
      %v6240 = vld [vmem:[%s5 + $0x3c] sm:$0xf]
      %v6241 = vld [vmem:[%s5 + $0x40] sm:$0xf]
      %v6242 = vld [vmem:[%s5 + $0x44] sm:$0xf]
      %v6243 = vld [vmem:[%s5 + $0x48] sm:$0xf]
      %v6244 = vld [vmem:[%s5 + $0x4c] sm:$0xf]
      %v6245 = vld [vmem:[%s5 + $0x50] sm:$0xf]
      %v6246 = vld [vmem:[%s5 + $0x54] sm:$0xf]
      %v6247 = vld [vmem:[%s5 + $0x58] sm:$0xf]
      %v6248 = vld [vmem:[%s5 + $0x5c] sm:$0xf]
      %v6249 = vld [vmem:[%s5 + $0x60] sm:$0xf]
      %v6250 = vld [vmem:[%s5 + $0x64] sm:$0xf]
      %v6251 = vld [vmem:[%s5 + $0x68] sm:$0xf]
      %v6252 = vld [vmem:[%s5 + $0x6c] sm:$0xf]
      %v6253 = vld [vmem:[%s5 + $0x70] sm:$0xf]
      %v6254 = vld [vmem:[%s5 + $0x74] sm:$0xf]
      %v6255 = vld [vmem:[%s5 + $0x78] sm:$0xf]
      %v6256 = vld [vmem:[%s5 + $0x7c] sm:$0xf]
      %v6257 = vld [vmem:[%s6] sm:$0x1]
      %v6259 = vperm.slane %v6257, 0
      %v6293 = vunpack.c.l.b16 %v6225
      %v6294 = vunpack.c.l.b16 %v6226
      %v6295 = vunpack.c.l.b16 %v6227
      %v6296 = vunpack.c.l.b16 %v6228
      %v6297 = vunpack.c.l.b16 %v6229
      %v6298 = vunpack.c.l.b16 %v6230
      %v6299 = vunpack.c.l.b16 %v6231
      %v6300 = vunpack.c.l.b16 %v6232
      %v6301 = vunpack.c.l.b16 %v6233
      %v6302 = vunpack.c.l.b16 %v6234
      %v6303 = vunpack.c.l.b16 %v6235
      %v6304 = vunpack.c.l.b16 %v6236
      %v6305 = vunpack.c.l.b16 %v6237
      %v6306 = vunpack.c.l.b16 %v6238
      %v6307 = vunpack.c.l.b16 %v6239
      %v6308 = vunpack.c.l.b16 %v6240
      %v6309 = vunpack.c.l.b16 %v6241
      %v6310 = vunpack.c.l.b16 %v6242
      %v6311 = vunpack.c.l.b16 %v6243
      %v6312 = vunpack.c.l.b16 %v6244
      %v6313 = vunpack.c.l.b16 %v6245
      %v6314 = vunpack.c.l.b16 %v6246
      %v6315 = vunpack.c.l.b16 %v6247
      %v6316 = vunpack.c.l.b16 %v6248
      %v6317 = vunpack.c.l.b16 %v6249
      %v6318 = vunpack.c.l.b16 %v6250
      %v6319 = vunpack.c.l.b16 %v6251
      %v6320 = vunpack.c.l.b16 %v6252
      %v6321 = vunpack.c.l.b16 %v6253
      %v6322 = vunpack.c.l.b16 %v6254
      %v6323 = vunpack.c.l.b16 %v6255
      %v6324 = vunpack.c.l.b16 %v6256
      %v6325 = vpack.c.b16 %v6294, %v6293
      %v6326 = vpack.c.b16 %v6296, %v6295
      %v6327 = vpack.c.b16 %v6298, %v6297
      %v6328 = vpack.c.b16 %v6300, %v6299
      %v6329 = vpack.c.b16 %v6302, %v6301
      %v6330 = vpack.c.b16 %v6304, %v6303
      %v6331 = vpack.c.b16 %v6306, %v6305
      %v6332 = vpack.c.b16 %v6308, %v6307
      %v6333 = vpack.c.b16 %v6310, %v6309
      %v6334 = vpack.c.b16 %v6312, %v6311
      %v6335 = vpack.c.b16 %v6314, %v6313
      %v6336 = vpack.c.b16 %v6316, %v6315
      %v6337 = vpack.c.b16 %v6318, %v6317
      %v6338 = vpack.c.b16 %v6320, %v6319
      %v6339 = vpack.c.b16 %v6322, %v6321
      %v6340 = vpack.c.b16 %v6324, %v6323
      %6357 = vmatpush.bf16.msra.mxu0 %v6332
      %6358 = vmatpush.bf16.msra.mxu0 %v6331
      %6359 = vmatpush.bf16.msra.mxu0 %v6330
      %6360 = vmatpush.bf16.msra.mxu0 %v6329
      %6361 = vmatpush.bf16.msra.mxu0 %v6328
      %6362 = vmatpush.bf16.msra.mxu0 %v6327
      %6363 = vmatpush.bf16.msra.mxu0 %v6326
      %6364 = vmatpush.bf16.msra.mxu0 %v6325
      %6365 = vmatmul.bf16.gmra.mxu0 %v6193
      %v6366 = vpop.f32.mrf.mxu0
      %v6367 = vadd.f32 %v6259, %v6366
      %v6368 = vpop.f32.mrf.mxu0
      %v6369 = vadd.f32 %v6259, %v6368
      %6370 = vmatmul.bf16.gmra.mxu0 %v6195
      %v6371 = vpop.f32.mrf.mxu0
      %v6372 = vadd.f32 %v6259, %v6371
      %v6373 = vpop.f32.mrf.mxu0
      %v6374 = vadd.f32 %v6259, %v6373
      %6375 = vmatmul.bf16.gmra.mxu0 %v6197
      %v6376 = vpop.f32.mrf.mxu0
      %v6377 = vadd.f32 %v6259, %v6376
      %v6378 = vpop.f32.mrf.mxu0
      %v6379 = vadd.f32 %v6259, %v6378
      %6380 = vmatmul.bf16.gmra.mxu0 %v6199
      %v6381 = vpop.f32.mrf.mxu0
      %v6382 = vadd.f32 %v6259, %v6381
      %v6383 = vpop.f32.mrf.mxu0
      %v6384 = vadd.f32 %v6259, %v6383
      %6385 = vmatmul.bf16.gmra.mxu0 %v6201
      %v6386 = vpop.f32.mrf.mxu0
      %v6387 = vadd.f32 %v6259, %v6386
      %v6388 = vpop.f32.mrf.mxu0
      %v6389 = vadd.f32 %v6259, %v6388
      %6390 = vmatmul.bf16.gmra.mxu0 %v6203
      %v6391 = vpop.f32.mrf.mxu0
      %v6392 = vadd.f32 %v6259, %v6391
      %v6393 = vpop.f32.mrf.mxu0
      %v6394 = vadd.f32 %v6259, %v6393
      %6395 = vmatmul.bf16.gmra.mxu0 %v6205
      %v6396 = vpop.f32.mrf.mxu0
      %v6397 = vadd.f32 %v6259, %v6396
      %v6398 = vpop.f32.mrf.mxu0
      %v6399 = vadd.f32 %v6259, %v6398
      %6400 = vmatmul.bf16.gmra.mxu0 %v6207
      %v6401 = vpop.f32.mrf.mxu0
      %v6402 = vadd.f32 %v6259, %v6401
      %v6403 = vpop.f32.mrf.mxu0
      %v6404 = vadd.f32 %v6259, %v6403
      %6405 = vmatmul.bf16.gmra.mxu0 %v6209
      %v6406 = vpop.f32.mrf.mxu0
      %v6407 = vadd.f32 %v6259, %v6406
      %v6408 = vpop.f32.mrf.mxu0
      %v6409 = vadd.f32 %v6259, %v6408
      %6410 = vmatmul.bf16.gmra.mxu0 %v6211
      %v6411 = vpop.f32.mrf.mxu0
      %v6412 = vadd.f32 %v6259, %v6411
      %v6413 = vpop.f32.mrf.mxu0
      %v6414 = vadd.f32 %v6259, %v6413
      %6415 = vmatmul.bf16.gmra.mxu0 %v6213
      %v6416 = vpop.f32.mrf.mxu0
      %v6417 = vadd.f32 %v6259, %v6416
      %v6418 = vpop.f32.mrf.mxu0
      %v6419 = vadd.f32 %v6259, %v6418
      %6420 = vmatmul.bf16.gmra.mxu0 %v6215
      %v6421 = vpop.f32.mrf.mxu0
      %v6422 = vadd.f32 %v6259, %v6421
      %v6423 = vpop.f32.mrf.mxu0
      %v6424 = vadd.f32 %v6259, %v6423
      %6425 = vmatmul.bf16.gmra.mxu0 %v6217
      %v6426 = vpop.f32.mrf.mxu0
      %v6427 = vadd.f32 %v6259, %v6426
      %v6428 = vpop.f32.mrf.mxu0
      %v6429 = vadd.f32 %v6259, %v6428
      %6430 = vmatmul.bf16.gmra.mxu0 %v6219
      %v6431 = vpop.f32.mrf.mxu0
      %v6432 = vadd.f32 %v6259, %v6431
      %v6433 = vpop.f32.mrf.mxu0
      %v6434 = vadd.f32 %v6259, %v6433
      %6435 = vmatmul.bf16.gmra.mxu0 %v6221
      %v6436 = vpop.f32.mrf.mxu0
      %v6437 = vadd.f32 %v6259, %v6436
      %v6438 = vpop.f32.mrf.mxu0
      %v6439 = vadd.f32 %v6259, %v6438
      %6440 = vmatmul.bf16.gmra.mxu0 %v6223
      %v6441 = vpop.f32.mrf.mxu0
      %v6442 = vadd.f32 %v6259, %v6441
      %v6443 = vpop.f32.mrf.mxu0
      %v6444 = vadd.f32 %v6259, %v6443
      %6445 = vdwg.mxu0
      %6446 = vmatpush.bf16.msra.mxu0 %v6340
      %6447 = vmatpush.bf16.msra.mxu0 %v6339
      %6448 = vmatpush.bf16.msra.mxu0 %v6338
      %6449 = vmatpush.bf16.msra.mxu0 %v6337
      %6450 = vmatpush.bf16.msra.mxu0 %v6336
      %6451 = vmatpush.bf16.msra.mxu0 %v6335
      %6452 = vmatpush.bf16.msra.mxu0 %v6334
      %6453 = vmatpush.bf16.msra.mxu0 %v6333
      %6454 = vmatmul.bf16.gmra.mxu0 %v6194
      %v6455 = vpop.f32.mrf.mxu0
      %v6456 = vadd.f32 %v6367, %v6455
      %v6457 = vpop.f32.mrf.mxu0
      %v6458 = vadd.f32 %v6369, %v6457
      %6459 = vmatmul.bf16.gmra.mxu0 %v6196
      %v6460 = vpop.f32.mrf.mxu0
      %v6461 = vadd.f32 %v6372, %v6460
      %v6462 = vpop.f32.mrf.mxu0
      %v6463 = vadd.f32 %v6374, %v6462
      %6464 = vmatmul.bf16.gmra.mxu0 %v6198
      %v6465 = vpop.f32.mrf.mxu0
      %v6466 = vadd.f32 %v6377, %v6465
      %v6467 = vpop.f32.mrf.mxu0
      %v6468 = vadd.f32 %v6379, %v6467
      %6469 = vmatmul.bf16.gmra.mxu0 %v6200
      %v6470 = vpop.f32.mrf.mxu0
      %v6471 = vadd.f32 %v6382, %v6470
      %v6472 = vpop.f32.mrf.mxu0
      %v6473 = vadd.f32 %v6384, %v6472
      %6474 = vmatmul.bf16.gmra.mxu0 %v6202
      %v6475 = vpop.f32.mrf.mxu0
      %v6476 = vadd.f32 %v6387, %v6475
      %v6477 = vpop.f32.mrf.mxu0
      %v6478 = vadd.f32 %v6389, %v6477
      %6479 = vmatmul.bf16.gmra.mxu0 %v6204
      %v6480 = vpop.f32.mrf.mxu0
      %v6481 = vadd.f32 %v6392, %v6480
      %v6482 = vpop.f32.mrf.mxu0
      %v6483 = vadd.f32 %v6394, %v6482
      %6484 = vmatmul.bf16.gmra.mxu0 %v6206
      %v6485 = vpop.f32.mrf.mxu0
      %v6486 = vadd.f32 %v6397, %v6485
      %v6487 = vpop.f32.mrf.mxu0
      %v6488 = vadd.f32 %v6399, %v6487
      %6489 = vmatmul.bf16.gmra.mxu0 %v6208
      %v6490 = vpop.f32.mrf.mxu0
      %v6491 = vadd.f32 %v6402, %v6490
      %v6492 = vpop.f32.mrf.mxu0
      %v6493 = vadd.f32 %v6404, %v6492
      %6494 = vmatmul.bf16.gmra.mxu0 %v6210
      %v6495 = vpop.f32.mrf.mxu0
      %v6496 = vadd.f32 %v6407, %v6495
      %v6497 = vpop.f32.mrf.mxu0
      %v6498 = vadd.f32 %v6409, %v6497
      %6499 = vmatmul.bf16.gmra.mxu0 %v6212
      %v6500 = vpop.f32.mrf.mxu0
      %v6501 = vadd.f32 %v6412, %v6500
      %v6502 = vpop.f32.mrf.mxu0
      %v6503 = vadd.f32 %v6414, %v6502
      %6504 = vmatmul.bf16.gmra.mxu0 %v6214
      %v6505 = vpop.f32.mrf.mxu0
      %v6506 = vadd.f32 %v6417, %v6505
      %v6507 = vpop.f32.mrf.mxu0
      %v6508 = vadd.f32 %v6419, %v6507
      %6509 = vmatmul.bf16.gmra.mxu0 %v6216
      %v6510 = vpop.f32.mrf.mxu0
      %v6511 = vadd.f32 %v6422, %v6510
      %v6512 = vpop.f32.mrf.mxu0
      %v6513 = vadd.f32 %v6424, %v6512
      %6514 = vmatmul.bf16.gmra.mxu0 %v6218
      %v6515 = vpop.f32.mrf.mxu0
      %v6516 = vadd.f32 %v6427, %v6515
      %v6517 = vpop.f32.mrf.mxu0
      %v6518 = vadd.f32 %v6429, %v6517
      %6519 = vmatmul.bf16.gmra.mxu0 %v6220
      %v6520 = vpop.f32.mrf.mxu0
      %v6521 = vadd.f32 %v6432, %v6520
      %v6522 = vpop.f32.mrf.mxu0
      %v6523 = vadd.f32 %v6434, %v6522
      %6524 = vmatmul.bf16.gmra.mxu0 %v6222
      %v6525 = vpop.f32.mrf.mxu0
      %v6526 = vadd.f32 %v6437, %v6525
      %v6527 = vpop.f32.mrf.mxu0
      %v6528 = vadd.f32 %v6439, %v6527
      %6529 = vmatmul.bf16.gmra.mxu0 %v6224
      %v6530 = vpop.f32.mrf.mxu0
      %v6531 = vadd.f32 %v6442, %v6530
      %v6532 = vpop.f32.mrf.mxu0
      %v6533 = vadd.f32 %v6444, %v6532
      %6534 = vdwg.mxu0
      %6535 = vmax.xlane.f32.xlu0 %v6456
      %v6536 = vpop.xlane.xlu0 %6535
      %6537 = vmax.xlane.f32.xlu0 %v6458
      %v6538 = vpop.xlane.xlu0 %6537
      %6539 = vmax.xlane.f32.xlu0 %v6461
      %v6540 = vpop.xlane.xlu0 %6539
      %6541 = vmax.xlane.f32.xlu0 %v6463
      %v6542 = vpop.xlane.xlu0 %6541
      %6543 = vmax.xlane.f32.xlu0 %v6466
      %v6544 = vpop.xlane.xlu0 %6543
      %6545 = vmax.xlane.f32.xlu0 %v6468
      %v6546 = vpop.xlane.xlu0 %6545
      %6547 = vmax.xlane.f32.xlu0 %v6471
      %v6548 = vpop.xlane.xlu0 %6547
      %6549 = vmax.xlane.f32.xlu0 %v6473
      %v6550 = vpop.xlane.xlu0 %6549
      %6551 = vmax.xlane.f32.xlu0 %v6476
      %v6552 = vpop.xlane.xlu0 %6551
      %6553 = vmax.xlane.f32.xlu0 %v6478
      %v6554 = vpop.xlane.xlu0 %6553
      %6555 = vmax.xlane.f32.xlu0 %v6481
      %v6556 = vpop.xlane.xlu0 %6555
      %6557 = vmax.xlane.f32.xlu0 %v6483
      %v6558 = vpop.xlane.xlu0 %6557
      %6559 = vmax.xlane.f32.xlu0 %v6486
      %v6560 = vpop.xlane.xlu0 %6559
      %6561 = vmax.xlane.f32.xlu0 %v6488
      %v6562 = vpop.xlane.xlu0 %6561
      %6563 = vmax.xlane.f32.xlu0 %v6491
      %v6564 = vpop.xlane.xlu0 %6563
      %6565 = vmax.xlane.f32.xlu0 %v6493
      %v6566 = vpop.xlane.xlu0 %6565
      %6567 = vmax.xlane.f32.xlu0 %v6496
      %v6568 = vpop.xlane.xlu0 %6567
      %6569 = vmax.xlane.f32.xlu0 %v6498
      %v6570 = vpop.xlane.xlu0 %6569
      %6571 = vmax.xlane.f32.xlu0 %v6501
      %v6572 = vpop.xlane.xlu0 %6571
      %6573 = vmax.xlane.f32.xlu0 %v6503
      %v6574 = vpop.xlane.xlu0 %6573
      %6575 = vmax.xlane.f32.xlu0 %v6506
      %v6576 = vpop.xlane.xlu0 %6575
      %6577 = vmax.xlane.f32.xlu0 %v6508
      %v6578 = vpop.xlane.xlu0 %6577
      %6579 = vmax.xlane.f32.xlu0 %v6511
      %v6580 = vpop.xlane.xlu0 %6579
      %6581 = vmax.xlane.f32.xlu0 %v6513
      %v6582 = vpop.xlane.xlu0 %6581
      %6583 = vmax.xlane.f32.xlu0 %v6516
      %v6584 = vpop.xlane.xlu0 %6583
      %6585 = vmax.xlane.f32.xlu0 %v6518
      %v6586 = vpop.xlane.xlu0 %6585
      %6587 = vmax.xlane.f32.xlu0 %v6521
      %v6588 = vpop.xlane.xlu0 %6587
      %6589 = vmax.xlane.f32.xlu0 %v6523
      %v6590 = vpop.xlane.xlu0 %6589
      %6591 = vmax.xlane.f32.xlu0 %v6526
      %v6592 = vpop.xlane.xlu0 %6591
      %6593 = vmax.xlane.f32.xlu0 %v6528
      %v6594 = vpop.xlane.xlu0 %6593
      %6595 = vmax.xlane.f32.xlu0 %v6531
      %v6596 = vpop.xlane.xlu0 %6595
      %6597 = vmax.xlane.f32.xlu0 %v6533
      %v6598 = vpop.xlane.xlu0 %6597
      %v6599 = vsub.f32 %v6456, %v6536
      %v6600 = vsub.f32 %v6458, %v6538
      %v6601 = vsub.f32 %v6461, %v6540
      %v6602 = vsub.f32 %v6463, %v6542
      %v6603 = vsub.f32 %v6466, %v6544
      %v6604 = vsub.f32 %v6468, %v6546
      %v6605 = vsub.f32 %v6471, %v6548
      %v6606 = vsub.f32 %v6473, %v6550
      %v6607 = vsub.f32 %v6476, %v6552
      %v6608 = vsub.f32 %v6478, %v6554
      %v6609 = vsub.f32 %v6481, %v6556
      %v6610 = vsub.f32 %v6483, %v6558
      %v6611 = vsub.f32 %v6486, %v6560
      %v6612 = vsub.f32 %v6488, %v6562
      %v6613 = vsub.f32 %v6491, %v6564
      %v6614 = vsub.f32 %v6493, %v6566
      %v6615 = vsub.f32 %v6496, %v6568
      %v6616 = vsub.f32 %v6498, %v6570
      %v6617 = vsub.f32 %v6501, %v6572
      %v6618 = vsub.f32 %v6503, %v6574
      %v6619 = vsub.f32 %v6506, %v6576
      %v6620 = vsub.f32 %v6508, %v6578
      %v6621 = vsub.f32 %v6511, %v6580
      %v6622 = vsub.f32 %v6513, %v6582
      %v6623 = vsub.f32 %v6516, %v6584
      %v6624 = vsub.f32 %v6518, %v6586
      %v6625 = vsub.f32 %v6521, %v6588
      %v6626 = vsub.f32 %v6523, %v6590
      %v6627 = vsub.f32 %v6526, %v6592
      %v6628 = vsub.f32 %v6528, %v6594
      %v6629 = vsub.f32 %v6531, %v6596
      %v6630 = vsub.f32 %v6533, %v6598
      %v6631 = vmul.f32 %v6599, 1.442695
      %v6632 = vpow.pop %v6631
      %v6633 = vmul.f32 %v6600, 1.442695
      %v6634 = vpow.pop %v6633
      %v6635 = vmul.f32 %v6601, 1.442695
      %v6636 = vpow.pop %v6635
      %v6637 = vmul.f32 %v6602, 1.442695
      %v6638 = vpow.pop %v6637
      %v6639 = vmul.f32 %v6603, 1.442695
      %v6640 = vpow.pop %v6639
      %v6641 = vmul.f32 %v6604, 1.442695
      %v6642 = vpow.pop %v6641
      %v6643 = vmul.f32 %v6605, 1.442695
      %v6644 = vpow.pop %v6643
      %v6645 = vmul.f32 %v6606, 1.442695
      %v6646 = vpow.pop %v6645
      %v6647 = vmul.f32 %v6607, 1.442695
      %v6648 = vpow.pop %v6647
      %v6649 = vmul.f32 %v6608, 1.442695
      %v6650 = vpow.pop %v6649
      %v6651 = vmul.f32 %v6609, 1.442695
      %v6652 = vpow.pop %v6651
      %v6653 = vmul.f32 %v6610, 1.442695
      %v6654 = vpow.pop %v6653
      %v6655 = vmul.f32 %v6611, 1.442695
      %v6656 = vpow.pop %v6655
      %v6657 = vmul.f32 %v6612, 1.442695
      %v6658 = vpow.pop %v6657
      %v6659 = vmul.f32 %v6613, 1.442695
      %v6660 = vpow.pop %v6659
      %v6661 = vmul.f32 %v6614, 1.442695
      %v6662 = vpow.pop %v6661
      %v6663 = vmul.f32 %v6615, 1.442695
      %v6664 = vpow.pop %v6663
      %v6665 = vmul.f32 %v6616, 1.442695
      %v6666 = vpow.pop %v6665
      %v6667 = vmul.f32 %v6617, 1.442695
      %v6668 = vpow.pop %v6667
      %v6669 = vmul.f32 %v6618, 1.442695
      %v6670 = vpow.pop %v6669
      %v6671 = vmul.f32 %v6619, 1.442695
      %v6672 = vpow.pop %v6671
      %v6673 = vmul.f32 %v6620, 1.442695
      %v6674 = vpow.pop %v6673
      %v6675 = vmul.f32 %v6621, 1.442695
      %v6676 = vpow.pop %v6675
      %v6677 = vmul.f32 %v6622, 1.442695
      %v6678 = vpow.pop %v6677
      %v6679 = vmul.f32 %v6623, 1.442695
      %v6680 = vpow.pop %v6679
      %v6681 = vmul.f32 %v6624, 1.442695
      %v6682 = vpow.pop %v6681
      %v6683 = vmul.f32 %v6625, 1.442695
      %v6684 = vpow.pop %v6683
      %v6685 = vmul.f32 %v6626, 1.442695
      %v6686 = vpow.pop %v6685
      %v6687 = vmul.f32 %v6627, 1.442695
      %v6688 = vpow.pop %v6687
      %v6689 = vmul.f32 %v6628, 1.442695
      %v6690 = vpow.pop %v6689
      %v6691 = vmul.f32 %v6629, 1.442695
      %v6692 = vpow.pop %v6691
      %v6693 = vmul.f32 %v6630, 1.442695
      %v6694 = vpow.pop %v6693
      %6695 = vadd.xlane.f32.xlu0 %v6632
      %v6696 = vpop.xlane.xlu0 %6695
      %6697 = vadd.xlane.f32.xlu0 %v6634
      %v6698 = vpop.xlane.xlu0 %6697
      %6699 = vadd.xlane.f32.xlu0 %v6636
      %v6700 = vpop.xlane.xlu0 %6699
      %6701 = vadd.xlane.f32.xlu0 %v6638
      %v6702 = vpop.xlane.xlu0 %6701
      %6703 = vadd.xlane.f32.xlu0 %v6640
      %v6704 = vpop.xlane.xlu0 %6703
      %6705 = vadd.xlane.f32.xlu0 %v6642
      %v6706 = vpop.xlane.xlu0 %6705
      %6707 = vadd.xlane.f32.xlu0 %v6644
      %v6708 = vpop.xlane.xlu0 %6707
      %6709 = vadd.xlane.f32.xlu0 %v6646
      %v6710 = vpop.xlane.xlu0 %6709
      %6711 = vadd.xlane.f32.xlu0 %v6648
      %v6712 = vpop.xlane.xlu0 %6711
      %6713 = vadd.xlane.f32.xlu0 %v6650
      %v6714 = vpop.xlane.xlu0 %6713
      %6715 = vadd.xlane.f32.xlu0 %v6652
      %v6716 = vpop.xlane.xlu0 %6715
      %6717 = vadd.xlane.f32.xlu0 %v6654
      %v6718 = vpop.xlane.xlu0 %6717
      %6719 = vadd.xlane.f32.xlu0 %v6656
      %v6720 = vpop.xlane.xlu0 %6719
      %6721 = vadd.xlane.f32.xlu0 %v6658
      %v6722 = vpop.xlane.xlu0 %6721
      %6723 = vadd.xlane.f32.xlu0 %v6660
      %v6724 = vpop.xlane.xlu0 %6723
      %6725 = vadd.xlane.f32.xlu0 %v6662
      %v6726 = vpop.xlane.xlu0 %6725
      %6727 = vadd.xlane.f32.xlu0 %v6664
      %v6728 = vpop.xlane.xlu0 %6727
      %6729 = vadd.xlane.f32.xlu0 %v6666
      %v6730 = vpop.xlane.xlu0 %6729
      %6731 = vadd.xlane.f32.xlu0 %v6668
      %v6732 = vpop.xlane.xlu0 %6731
      %6733 = vadd.xlane.f32.xlu0 %v6670
      %v6734 = vpop.xlane.xlu0 %6733
      %6735 = vadd.xlane.f32.xlu0 %v6672
      %v6736 = vpop.xlane.xlu0 %6735
      %6737 = vadd.xlane.f32.xlu0 %v6674
      %v6738 = vpop.xlane.xlu0 %6737
      %6739 = vadd.xlane.f32.xlu0 %v6676
      %v6740 = vpop.xlane.xlu0 %6739
      %6741 = vadd.xlane.f32.xlu0 %v6678
      %v6742 = vpop.xlane.xlu0 %6741
      %6743 = vadd.xlane.f32.xlu0 %v6680
      %v6744 = vpop.xlane.xlu0 %6743
      %6745 = vadd.xlane.f32.xlu0 %v6682
      %v6746 = vpop.xlane.xlu0 %6745
      %6747 = vadd.xlane.f32.xlu0 %v6684
      %v6748 = vpop.xlane.xlu0 %6747
      %6749 = vadd.xlane.f32.xlu0 %v6686
      %v6750 = vpop.xlane.xlu0 %6749
      %6751 = vadd.xlane.f32.xlu0 %v6688
      %v6752 = vpop.xlane.xlu0 %6751
      %6753 = vadd.xlane.f32.xlu0 %v6690
      %v6754 = vpop.xlane.xlu0 %6753
      %6755 = vadd.xlane.f32.xlu0 %v6692
      %v6756 = vpop.xlane.xlu0 %6755
      %6757 = vadd.xlane.f32.xlu0 %v6694
      %v6758 = vpop.xlane.xlu0 %6757
      %v6759 = vrcp.pop %v6696
      %v6760 = vrcp.pop %v6698
      %v6761 = vrcp.pop %v6700
      %v6762 = vrcp.pop %v6702
      %v6763 = vrcp.pop %v6704
      %v6764 = vrcp.pop %v6706
      %v6765 = vrcp.pop %v6708
      %v6766 = vrcp.pop %v6710
      %v6767 = vrcp.pop %v6712
      %v6768 = vrcp.pop %v6714
      %v6769 = vrcp.pop %v6716
      %v6770 = vrcp.pop %v6718
      %v6771 = vrcp.pop %v6720
      %v6772 = vrcp.pop %v6722
      %v6773 = vrcp.pop %v6724
      %v6774 = vrcp.pop %v6726
      %v6775 = vrcp.pop %v6728
      %v6776 = vrcp.pop %v6730
      %v6777 = vrcp.pop %v6732
      %v6778 = vrcp.pop %v6734
      %v6779 = vrcp.pop %v6736
      %v6780 = vrcp.pop %v6738
      %v6781 = vrcp.pop %v6740
      %v6782 = vrcp.pop %v6742
      %v6783 = vrcp.pop %v6744
      %v6784 = vrcp.pop %v6746
      %v6785 = vrcp.pop %v6748
      %v6786 = vrcp.pop %v6750
      %v6787 = vrcp.pop %v6752
      %v6788 = vrcp.pop %v6754
      %v6789 = vrcp.pop %v6756
      %v6790 = vrcp.pop %v6758
      %v6791 = vmul.f32 %v6632, %v6759
      %v6792 = vmul.f32 %v6634, %v6760
      %v6793 = vmul.f32 %v6636, %v6761
      %v6794 = vmul.f32 %v6638, %v6762
      %v6795 = vmul.f32 %v6640, %v6763
      %v6796 = vmul.f32 %v6642, %v6764
      %v6797 = vmul.f32 %v6644, %v6765
      %v6798 = vmul.f32 %v6646, %v6766
      %v6799 = vmul.f32 %v6648, %v6767
      %v6800 = vmul.f32 %v6650, %v6768
      %v6801 = vmul.f32 %v6652, %v6769
      %v6802 = vmul.f32 %v6654, %v6770
      %v6803 = vmul.f32 %v6656, %v6771
      %v6804 = vmul.f32 %v6658, %v6772
      %v6805 = vmul.f32 %v6660, %v6773
      %v6806 = vmul.f32 %v6662, %v6774
      %v6807 = vmul.f32 %v6664, %v6775
      %v6808 = vmul.f32 %v6666, %v6776
      %v6809 = vmul.f32 %v6668, %v6777
      %v6810 = vmul.f32 %v6670, %v6778
      %v6811 = vmul.f32 %v6672, %v6779
      %v6812 = vmul.f32 %v6674, %v6780
      %v6813 = vmul.f32 %v6676, %v6781
      %v6814 = vmul.f32 %v6678, %v6782
      %v6815 = vmul.f32 %v6680, %v6783
      %v6816 = vmul.f32 %v6682, %v6784
      %v6817 = vmul.f32 %v6684, %v6785
      %v6818 = vmul.f32 %v6686, %v6786
      %v6819 = vmul.f32 %v6688, %v6787
      %v6820 = vmul.f32 %v6690, %v6788
      %v6821 = vmul.f32 %v6692, %v6789
      %v6822 = vmul.f32 %v6694, %v6790
      %6823 = vst [vmem:[%s283] sm:$0xff] %v6791
      %6824 = vst [vmem:[%s283 + $0x8] sm:$0xff] %v6792
      %6825 = vst [vmem:[%s283 + $0x10] sm:$0xff] %v6793
      %6826 = vst [vmem:[%s283 + $0x18] sm:$0xff] %v6794
      %6827 = vst [vmem:[%s283 + $0x20] sm:$0xff] %v6795
      %6828 = vst [vmem:[%s283 + $0x28] sm:$0xff] %v6796
      %6829 = vst [vmem:[%s283 + $0x30] sm:$0xff] %v6797
      %6830 = vst [vmem:[%s283 + $0x38] sm:$0xff] %v6798
      %6831 = vst [vmem:[%s283 + $0x40] sm:$0xff] %v6799
      %6832 = vst [vmem:[%s283 + $0x48] sm:$0xff] %v6800
      %6833 = vst [vmem:[%s283 + $0x50] sm:$0xff] %v6801
      %6834 = vst [vmem:[%s283 + $0x58] sm:$0xff] %v6802
      %6835 = vst [vmem:[%s283 + $0x60] sm:$0xff] %v6803
      %6836 = vst [vmem:[%s283 + $0x68] sm:$0xff] %v6804
      %6837 = vst [vmem:[%s283 + $0x70] sm:$0xff] %v6805
      %6838 = vst [vmem:[%s283 + $0x78] sm:$0xff] %v6806
      %6839 = vst [vmem:[%s283 + $0x80] sm:$0xff] %v6807
      %6840 = vst [vmem:[%s283 + $0x88] sm:$0xff] %v6808
      %6841 = vst [vmem:[%s283 + $0x90] sm:$0xff] %v6809
      %6842 = vst [vmem:[%s283 + $0x98] sm:$0xff] %v6810
      %6843 = vst [vmem:[%s283 + $0xa0] sm:$0xff] %v6811
      %6844 = vst [vmem:[%s283 + $0xa8] sm:$0xff] %v6812
      %6845 = vst [vmem:[%s283 + $0xb0] sm:$0xff] %v6813
      %6846 = vst [vmem:[%s283 + $0xb8] sm:$0xff] %v6814
      %6847 = vst [vmem:[%s283 + $0xc0] sm:$0xff] %v6815
      %6848 = vst [vmem:[%s283 + $0xc8] sm:$0xff] %v6816
      %6849 = vst [vmem:[%s283 + $0xd0] sm:$0xff] %v6817
      %6850 = vst [vmem:[%s283 + $0xd8] sm:$0xff] %v6818
      %6851 = vst [vmem:[%s283 + $0xe0] sm:$0xff] %v6819
      %6852 = vst [vmem:[%s283 + $0xe8] sm:$0xff] %v6820
      %6853 = vst [vmem:[%s283 + $0xf0] sm:$0xff] %v6821
      %6854 = vst [vmem:[%s283 + $0xf8] sm:$0xff] %v6822
      %s6855 = smul.u32 32, %s18
      %p6856 = scmp.lt.s32.totalorder %s6855, 63
      %s6857 = scalar_select %p6856, %s6855, 63
      %s6858 = smul.addr %s6857, 8
      %s6859 = scalar_lea.vmem %s7, %s6858
      // Predicated region
      $region49: #{mnistnet_forward.1} parent=47 // pred_check
        %p6860 = pneg %p188
      $region50: #{mnistnet_forward.1} parent=47 // pred_check_branch
        %6862 = sbr.rel (%p6860) target = $region52
      $region51: #{mnistnet_forward.1} parent=47 // pred_region
        %s6863 = smul.u32 32, %s18
      $region52: #{mnistnet_forward.1} parent=47 // pred_fallthru
        _
    $region48: #{mnistnet_forward.1} parent=5 // pred_fallthru
      _
    %p6864 = scmp.le.s32.totalorder 2, %s13
    // Predicated region
    $region53: #{mnistnet_forward.1} parent=5 // pred_check
      %p6865 = pneg %p6864
    $region54: #{mnistnet_forward.1} parent=5 // pred_check_branch
      %6867 = sbr.rel (%p6865) target = $region56
    $region55: #{mnistnet_forward.1} parent=5 // pred_region
      %s6868 = ssub.s32 %s13, 2
      // Predicated region
      $region57: #{mnistnet_forward.1} parent=55 // pred_check
        %p6869 = pneg %p194
      $region58: #{mnistnet_forward.1} parent=55 // pred_check_branch
        %6871 = sbr.rel (%p6869) target = $region60
      $region59: #{mnistnet_forward.1} parent=55 // pred_region
        %s6872 = smul.u32 32, %s19
        %p6873 = scmp.lt.s32.totalorder %s6872, 63
        %s6874 = scalar_select %p6873, %s6872, 63
        %s6875 = smul.addr %s6874, 8
        %s6876 = scalar_lea.vmem %s7, %s6875
      $region60: #{mnistnet_forward.1} parent=55 // pred_fallthru
        _
    $region56: #{mnistnet_forward.1} parent=5 // pred_fallthru
      _
  $region6: #{mnistnet_forward.1} parent=0 // loop_footer
    %s17 = sadd.s32 1, %s13
  $region7: #{mnistnet_forward.1} parent=0 // loop_footer_branch
    %12 = sbr.rel target = $region3
  $region8: #{mnistnet_forward.1} parent=0 // loop_exit
    _

</llo_original>
